<compile_context>
chip_gen: v7x
topology: tpu7x:2x2x1
jax: 0.10.0
libtpu: 0.0.40
codegen_flags: <defaults>
</compile_context>

<pallas_src>
import functools

import jax
import jax.numpy as jnp
from jax.experimental import pallas as pl
from jax.experimental.pallas import tpu as pltpu


# ----------------------------- kernel --------------------------------------


def _seq2seq_kernel(num_layers, hidden_dim, batch, src_len, dec_len,
                    src_idx_ref, trg_idx_ref, *refs):
    """refs = enc stack, dec stack, dense_w_t, dense_b, out_ref.

    Per stack (encoder / decoder) the flat ref layout is:
        [gate_table_l0 (Vpad, 4H), w_hh_l0 (H, 4H),
         w_ih_l1 (H, 4H), w_hh_l1 (H, 4H), b_l1 (1, 4H),
         ... repeated for layers 2..L-1 ...]
    gate_table_l0[v] = emb[v] @ w_ih_l0.T + b_ih_l0 + b_hh_l0  (pre-folded).
    """
    L, H, B = num_layers, hidden_dim, batch
    G = 4 * H
    f32 = jnp.float32

    n_stack = 2 + 3 * (L - 1)
    enc_refs = refs[0:n_stack]
    dec_refs = refs[n_stack:2 * n_stack]
    dense_w_ref = refs[2 * n_stack]
    dense_b_ref = refs[2 * n_stack + 1]
    out_ref = refs[2 * n_stack + 2]

    def layer0_ih(idx_ref, tab_ref, n_rows):
        # One-hot select the precomputed (vocab, 4H) gate rows: one batched MXU
        # matmul covering every timestep of the stack (layer-0 bias included).
        vpad = tab_ref.shape[0]
        idx = idx_ref[...]                                        # (n_rows, 1) i32
        iota = jax.lax.broadcasted_iota(jnp.int32, (n_rows, vpad), 1)
        onehot = (idx == iota).astype(f32)                        # (n_rows, vpad)
        return jnp.dot(onehot, tab_ref[...], preferred_element_type=f32)

    # --- prologue: all layer-0 input->gate contributions, batched over time ---
    enc_ih0 = layer0_ih(src_idx_ref, enc_refs[0], src_len * B)    # (S*B, 4H)
    dec_ih0 = layer0_ih(trg_idx_ref, dec_refs[0], dec_len * B)    # (Td*B, 4H)

    def activate(gates, c_prev):
        # Full-width activations: at B=2 the (B,4H) gates are a single vreg.
        sig = jax.nn.sigmoid(gates)
        th = jnp.tanh(gates)
        i = sig[:, 0 * H:1 * H]
        f = sig[:, 1 * H:2 * H]
        g = th[:, 2 * H:3 * H]
        o = sig[:, 3 * H:4 * H]
        c_new = f * c_prev + i * g
        h_new = o * jnp.tanh(c_new)
        return h_new, c_new

    # LSTM state lives purely in registers, never touches VMEM/HBM.
    h = [jnp.zeros((B, H), f32) for _ in range(L)]
    c = [jnp.zeros((B, H), f32) for _ in range(L)]

    def run_stack(n_steps, ih0_all, stack_refs, collect):
        # Hoist weight loads and bias broadcasts out of the unrolled time loop.
        wh0 = stack_refs[1][...]                                  # (H, 4H)
        upper = []
        for l in range(1, L):
            base = 2 + 3 * (l - 1)
            upper.append((stack_refs[base][...],                  # w_ih  (H, 4H)
                          stack_refs[base + 1][...],              # w_hh  (H, 4H)
                          jnp.broadcast_to(stack_refs[base + 2][...], (B, G))))
        outs = []
        for t in range(n_steps):                                  # full unroll
            gates0 = (ih0_all[t * B:(t + 1) * B, :]
                      + jnp.dot(h[0], wh0, preferred_element_type=f32))
            h[0], c[0] = activate(gates0, c[0])
            x = h[0]
            for li, (wx, wh, bb) in enumerate(upper, start=1):
                gates = (jnp.dot(x, wx, preferred_element_type=f32)
                         + jnp.dot(h[li], wh, preferred_element_type=f32)
                         + bb)
                h[li], c[li] = activate(gates, c[li])
                x = h[li]
            if collect:
                outs.append(x)
        return outs

    run_stack(src_len, enc_ih0, enc_refs, collect=False)          # encoder
    dec_hs = run_stack(dec_len, dec_ih0, dec_refs, collect=True)  # decoder

    # --- dense + ReLU hoisted out of the recurrence: one batched matmul ---
    hs = jnp.concatenate(dec_hs, axis=0)                          # (Td*B, H)
    fc = jnp.maximum(
        jnp.dot(hs, dense_w_ref[...], preferred_element_type=f32)
        + dense_b_ref[...], 0.0)                                  # (Td*B, Opad)

    o_pad = out_ref.shape[1]
    # outputs[0] = 0, rows t >= 1 = fc; single aligned lane-dense store.
    out_ref[...] = jnp.concatenate([jnp.zeros((B, o_pad), f32), fc], axis=0)


# ----------------------------- wrapper --------------------------------------


def seq2seq_forward(kparams, src, trg):
    """src: (S, B) int32, trg: (T, B) int32 -> outputs (T, B, output_dim)."""
    L = kparams['num_layers']
    H = kparams['hidden_dim']
    O = kparams['output_dim']
    O_pad = kparams['dense_w_t'].shape[1]
    S, B = src.shape
    T = trg.shape[0]
    Td = T - 1
    assert Td >= 1, "trg needs >= 2 timesteps (outputs[0] is defined to be 0)"

    # Only integer indices cross the kernel boundary; the embedding lookup is
    # done inside the kernel via a one-hot matmul against pre-folded tables.
    src_idx = src.astype(jnp.int32).reshape(S * B, 1)
    trg_idx = trg[:-1].astype(jnp.int32).reshape(Td * B, 1)

    args = [src_idx, trg_idx]
    args += list(kparams['enc_stack'])
    args += list(kparams['dec_stack'])
    args += [kparams['dense_w_t'], kparams['dense_b']]

    kernel = functools.partial(_seq2seq_kernel, L, H, B, S, Td)
    out2d = pl.pallas_call(
        kernel,
        out_shape=jax.ShapeDtypeStruct((T * B, O_pad), jnp.float32),
        compiler_params=pltpu.CompilerParams(vmem_limit_bytes=32 * 1024 * 1024),
    )(*args)
    # Free metadata reshape (row t*B+b <-> outputs[t, b]); drop lane padding.
    return out2d.reshape(T, B, O_pad)[:, :, :O]


# ----------------------------- params ---------------------------------------


def init_params(key, embedding_dim, enc_input_dim, dec_input_dim,
                hidden_dim, output_dim, num_layers):
    """Raw PyTorch-style parameters (used by the pure-JAX reference)."""
    H = hidden_dim
    s = 1.0 / (H ** 0.5)
    keys = iter(jax.random.split(key, 8 * num_layers + 4))

    def u(shape, scale):
        return jax.random.uniform(next(keys), shape, jnp.float32, -scale, scale)

    def lstm_stack(input_dim):
        layers = []
        for l in range(num_layers):
            in_dim = input_dim if l == 0 else H
            layers.append(dict(w_ih=u((4 * H, in_dim), s),
                               w_hh=u((4 * H, H), s),
                               b_ih=u((4 * H,), s),
                               b_hh=u((4 * H,), s)))
        return layers

    return dict(
        embedding_dim=embedding_dim, hidden_dim=H,
        output_dim=output_dim, num_layers=num_layers,
        enc_emb=u((enc_input_dim, embedding_dim), 1.0),
        dec_emb=u((dec_input_dim, embedding_dim), 1.0),
        enc_lstm=lstm_stack(embedding_dim),
        dec_lstm=lstm_stack(embedding_dim),
        dense_w=u((output_dim, H), s),
        dense_b=u((output_dim,), s))


def prepare_kernel_params(raw):
    """Kernel-friendly repack:
      * layer-0 embedding, w_ih and fused biases folded into a (vocab_pad, 4H)
        gate table (selected in-kernel by a one-hot MXU matmul),
      * layers >= 1: weights transposed to (H, 4H), biases fused (b_ih + b_hh),
      * dense weights transposed and lane-padded to a multiple of 128."""
    H, L = raw['hidden_dim'], raw['num_layers']
    O = raw['output_dim']
    O_pad = ((O + 127) // 128) * 128

    def pack(emb, stack):
        l0 = stack[0]
        tab = emb @ l0['w_ih'].T + (l0['b_ih'] + l0['b_hh'])[None, :]  # (V, 4H)
        vpad = ((tab.shape[0] + 127) // 128) * 128
        tab = jnp.pad(tab, ((0, vpad - tab.shape[0]), (0, 0)))
        flat = [tab, l0['w_hh'].T]
        for l in range(1, L):
            layer = stack[l]
            flat += [layer['w_ih'].T, layer['w_hh'].T,
                     (layer['b_ih'] + layer['b_hh']).reshape(1, 4 * H)]
        return flat

    return dict(
        num_layers=L, hidden_dim=H, output_dim=O,
        enc_stack=pack(raw['enc_emb'], raw['enc_lstm']),
        dec_stack=pack(raw['dec_emb'], raw['dec_lstm']),
        dense_w_t=jnp.pad(raw['dense_w'].T, ((0, 0), (0, O_pad - O))),
        dense_b=jnp.pad(raw['dense_b'], (0, O_pad - O)).reshape(1, O_pad))


# ----------------------------- reference ------------------------------------


def _lstm_ref(x_seq, h0, c0, layers, H):
    def step(carry, x):
        h, c = carry
        inp = x
        hs, cs = [], []
        for l, layer in enumerate(layers):
            gates = (inp @ layer['w_ih'].T + h[l] @ layer['w_hh'].T
                     + layer['b_ih'] + layer['b_hh'])
            i = jax.nn.sigmoid(gates[:, 0 * H:1 * H])
            f = jax.nn.sigmoid(gates[:, 1 * H:2 * H])
            g = jnp.tanh(gates[:, 2 * H:3 * H])
            o = jax.nn.sigmoid(gates[:, 3 * H:4 * H])
            cn = f * c[l] + i * g
            hn = o * jnp.tanh(cn)
            hs.append(hn)
            cs.append(cn)
            inp = hn
        return (jnp.stack(hs), jnp.stack(cs)), inp
    (hT, cT), outs = jax.lax.scan(step, (h0, c0), x_seq)
    return outs, hT, cT


def seq2seq_ref(raw, src, trg):
    H, L, O = raw['hidden_dim'], raw['num_layers'], raw['output_dim']
    B = trg.shape[1]
    src_emb = raw['enc_emb'][src]
    z = jnp.zeros((L, B, H), jnp.float32)
    _, h, c = _lstm_ref(src_emb, z, z, raw['enc_lstm'], H)
    trg_emb = raw['dec_emb'][trg[:-1]]
    outs, _, _ = _lstm_ref(trg_emb, h, c, raw['dec_lstm'], H)
    fc = jnp.maximum(outs @ raw['dense_w'].T + raw['dense_b'], 0.0)
    return jnp.concatenate([jnp.zeros((1, B, O), jnp.float32), fc], axis=0)


# ----------------------------- main ------------------------------------------

if __name__ == "__main__":
    key = jax.random.PRNGKey(0)
    k_p, k_src, k_trg = jax.random.split(key, 3)

    embedding_dim = 16
    enc_input_dim = 20   # encoder vocab
    dec_input_dim = 24   # decoder vocab
    hidden_dim = 32
    output_dim = 32
    num_layers = 2
    src_len, trg_len, batch = 8, 8, 2

    raw = init_params(k_p, embedding_dim, enc_input_dim, dec_input_dim,
                      hidden_dim, output_dim, num_layers)
    kparams = prepare_kernel_params(raw)

    src = jax.random.randint(k_src, (src_len, batch), 0, enc_input_dim, jnp.int32)
    trg = jax.random.randint(k_trg, (trg_len, batch), 0, dec_input_dim, jnp.int32)

    out = jax.block_until_ready(seq2seq_forward(kparams, src, trg))
    ref = jax.block_until_ready(seq2seq_ref(raw, src, trg))

    assert out.shape == (trg_len, batch, output_dim), out.shape
    max_err = float(jnp.max(jnp.abs(out - ref)))
    assert jnp.allclose(out, ref, rtol=1e-5, atol=1e-5), max_err

    print("KERNEL_OK")
</pallas_src>

<mosaic_0001>
module attributes {stable_mosaic.version = 11 : i64} {
  func.func @_seq2seq_kernel(%arg0: memref<16x1xi32, #tpu.memory_space<vmem>>, %arg1: memref<14x1xi32, #tpu.memory_space<vmem>>, %arg2: memref<128x128xf32, #tpu.memory_space<vmem>>, %arg3: memref<32x128xf32, #tpu.memory_space<vmem>>, %arg4: memref<32x128xf32, #tpu.memory_space<vmem>>, %arg5: memref<32x128xf32, #tpu.memory_space<vmem>>, %arg6: memref<1x128xf32, #tpu.memory_space<vmem>>, %arg7: memref<128x128xf32, #tpu.memory_space<vmem>>, %arg8: memref<32x128xf32, #tpu.memory_space<vmem>>, %arg9: memref<32x128xf32, #tpu.memory_space<vmem>>, %arg10: memref<32x128xf32, #tpu.memory_space<vmem>>, %arg11: memref<1x128xf32, #tpu.memory_space<vmem>>, %arg12: memref<32x128xf32, #tpu.memory_space<vmem>>, %arg13: memref<1x128xf32, #tpu.memory_space<vmem>>, %arg14: memref<16x128xf32, #tpu.memory_space<vmem>>) attributes {dimension_semantics = [], scalar_prefetch = 0 : i64, scratch_operands = 0 : i64, tpu.core_type = #tpu.core_type<tc>} {
    %c0 = arith.constant 0 : index
    %c0_0 = arith.constant 0 : index
    %0 = vector.load %arg0[%c0, %c0_0] : memref<16x1xi32, #tpu.memory_space<vmem>>, vector<16x1xi32>
    %1 = tpu.iota {dimensions = array<i32: 1>} : vector<16x128xi32>
    %2 = vector.broadcast %0 : vector<16x1xi32> to vector<16x128xi32>
    %3 = arith.cmpi eq, %2, %1 : vector<16x128xi32>
    %4 = arith.extui %3 : vector<16x128xi1> to vector<16x128xi32>
    %5 = arith.sitofp %4 : vector<16x128xi32> to vector<16x128xf32>
    %c0_1 = arith.constant 0 : index
    %c0_2 = arith.constant 0 : index
    %6 = vector.load %arg2[%c0_1, %c0_2] : memref<128x128xf32, #tpu.memory_space<vmem>>, vector<128x128xf32>
    %cst = arith.constant dense<0.000000e+00> : vector<16x128xf32>
    %7 = tpu.matmul %5, %6, %cst {dimension_numbers = #tpu.dot_dimension_numbers<[1], [0], [0], [1], [0, 0, 1, 1], [], []>} : vector<16x128xf32>, vector<128x128xf32>, vector<16x128xf32> -> vector<16x128xf32>
    %c0_3 = arith.constant 0 : index
    %c0_4 = arith.constant 0 : index
    %8 = vector.load %arg1[%c0_3, %c0_4] : memref<14x1xi32, #tpu.memory_space<vmem>>, vector<14x1xi32>
    %9 = tpu.iota {dimensions = array<i32: 1>} : vector<14x128xi32>
    %10 = vector.broadcast %8 : vector<14x1xi32> to vector<14x128xi32>
    %11 = arith.cmpi eq, %10, %9 : vector<14x128xi32>
    %12 = arith.extui %11 : vector<14x128xi1> to vector<14x128xi32>
    %13 = arith.sitofp %12 : vector<14x128xi32> to vector<14x128xf32>
    %c0_5 = arith.constant 0 : index
    %c0_6 = arith.constant 0 : index
    %14 = vector.load %arg7[%c0_5, %c0_6] : memref<128x128xf32, #tpu.memory_space<vmem>>, vector<128x128xf32>
    %cst_7 = arith.constant dense<0.000000e+00> : vector<14x128xf32>
    %15 = tpu.matmul %13, %14, %cst_7 {dimension_numbers = #tpu.dot_dimension_numbers<[1], [0], [0], [1], [0, 0, 1, 1], [], []>} : vector<14x128xf32>, vector<128x128xf32>, vector<14x128xf32> -> vector<14x128xf32>
    %cst_8 = arith.constant 0.000000e+00 : f32
    %16 = vector.broadcast %cst_8 : f32 to vector<2x32xf32>
    %cst_9 = arith.constant 0.000000e+00 : f32
    %17 = vector.broadcast %cst_9 : f32 to vector<2x32xf32>
    %cst_10 = arith.constant 0.000000e+00 : f32
    %18 = vector.broadcast %cst_10 : f32 to vector<2x32xf32>
    %cst_11 = arith.constant 0.000000e+00 : f32
    %19 = vector.broadcast %cst_11 : f32 to vector<2x32xf32>
    %c0_12 = arith.constant 0 : index
    %c0_13 = arith.constant 0 : index
    %20 = vector.load %arg3[%c0_12, %c0_13] : memref<32x128xf32, #tpu.memory_space<vmem>>, vector<32x128xf32>
    %c0_14 = arith.constant 0 : index
    %c0_15 = arith.constant 0 : index
    %21 = vector.load %arg4[%c0_14, %c0_15] : memref<32x128xf32, #tpu.memory_space<vmem>>, vector<32x128xf32>
    %c0_16 = arith.constant 0 : index
    %c0_17 = arith.constant 0 : index
    %22 = vector.load %arg5[%c0_16, %c0_17] : memref<32x128xf32, #tpu.memory_space<vmem>>, vector<32x128xf32>
    %c0_18 = arith.constant 0 : index
    %c0_19 = arith.constant 0 : index
    %23 = vector.load %arg6[%c0_18, %c0_19] : memref<1x128xf32, #tpu.memory_space<vmem>>, vector<1x128xf32>
    %24 = vector.shape_cast %23 : vector<1x128xf32> to vector<1x128xf32>
    %25 = vector.broadcast %24 : vector<1x128xf32> to vector<2x128xf32>
    %26 = vector.extract_strided_slice %7 {offsets = [0, 0], sizes = [2, 128], strides = [1, 1]} : vector<16x128xf32> to vector<2x128xf32>
    %cst_20 = arith.constant dense<0.000000e+00> : vector<2x128xf32>
    %27 = tpu.matmul %16, %20, %cst_20 {dimension_numbers = #tpu.dot_dimension_numbers<[1], [0], [0], [1], [0, 0, 1, 1], [], []>} : vector<2x32xf32>, vector<32x128xf32>, vector<2x128xf32> -> vector<2x128xf32>
    %28 = arith.addf %26, %27 : vector<2x128xf32>
    %29 = arith.negf %28 : vector<2x128xf32>
    %30 = math.exp %29 : vector<2x128xf32>
    %cst_21 = arith.constant 1.000000e+00 : f32
    %31 = vector.broadcast %cst_21 : f32 to vector<2x128xf32>
    %32 = arith.addf %31, %30 : vector<2x128xf32>
    %33 = arith.divf %31, %32 : vector<2x128xf32>
    %34 = math.tanh %28 : vector<2x128xf32>
    %35 = vector.extract_strided_slice %33 {offsets = [0, 0], sizes = [2, 32], strides = [1, 1]} : vector<2x128xf32> to vector<2x32xf32>
    %36 = vector.extract_strided_slice %33 {offsets = [0, 32], sizes = [2, 32], strides = [1, 1]} : vector<2x128xf32> to vector<2x32xf32>
    %37 = vector.extract_strided_slice %34 {offsets = [0, 64], sizes = [2, 32], strides = [1, 1]} : vector<2x128xf32> to vector<2x32xf32>
    %38 = vector.extract_strided_slice %33 {offsets = [0, 96], sizes = [2, 32], strides = [1, 1]} : vector<2x128xf32> to vector<2x32xf32>
    %39 = arith.mulf %36, %18 : vector<2x32xf32>
    %40 = arith.mulf %35, %37 : vector<2x32xf32>
    %41 = arith.addf %39, %40 : vector<2x32xf32>
    %42 = math.tanh %41 : vector<2x32xf32>
    %43 = arith.mulf %38, %42 : vector<2x32xf32>
    %cst_22 = arith.constant dense<0.000000e+00> : vector<2x128xf32>
    %44 = tpu.matmul %43, %21, %cst_22 {dimension_numbers = #tpu.dot_dimension_numbers<[1], [0], [0], [1], [0, 0, 1, 1], [], []>} : vector<2x32xf32>, vector<32x128xf32>, vector<2x128xf32> -> vector<2x128xf32>
    %cst_23 = arith.constant dense<0.000000e+00> : vector<2x128xf32>
    %45 = tpu.matmul %17, %22, %cst_23 {dimension_numbers = #tpu.dot_dimension_numbers<[1], [0], [0], [1], [0, 0, 1, 1], [], []>} : vector<2x32xf32>, vector<32x128xf32>, vector<2x128xf32> -> vector<2x128xf32>
    %46 = arith.addf %44, %45 : vector<2x128xf32>
    %47 = arith.addf %46, %25 : vector<2x128xf32>
    %48 = arith.negf %47 : vector<2x128xf32>
    %49 = math.exp %48 : vector<2x128xf32>
    %cst_24 = arith.constant 1.000000e+00 : f32
    %50 = vector.broadcast %cst_24 : f32 to vector<2x128xf32>
    %51 = arith.addf %50, %49 : vector<2x128xf32>
    %52 = arith.divf %50, %51 : vector<2x128xf32>
    %53 = math.tanh %47 : vector<2x128xf32>
    %54 = vector.extract_strided_slice %52 {offsets = [0, 0], sizes = [2, 32], strides = [1, 1]} : vector<2x128xf32> to vector<2x32xf32>
    %55 = vector.extract_strided_slice %52 {offsets = [0, 32], sizes = [2, 32], strides = [1, 1]} : vector<2x128xf32> to vector<2x32xf32>
    %56 = vector.extract_strided_slice %53 {offsets = [0, 64], sizes = [2, 32], strides = [1, 1]} : vector<2x128xf32> to vector<2x32xf32>
    %57 = vector.extract_strided_slice %52 {offsets = [0, 96], sizes = [2, 32], strides = [1, 1]} : vector<2x128xf32> to vector<2x32xf32>
    %58 = arith.mulf %55, %19 : vector<2x32xf32>
    %59 = arith.mulf %54, %56 : vector<2x32xf32>
    %60 = arith.addf %58, %59 : vector<2x32xf32>
    %61 = math.tanh %60 : vector<2x32xf32>
    %62 = arith.mulf %57, %61 : vector<2x32xf32>
    %63 = vector.extract_strided_slice %7 {offsets = [2, 0], sizes = [2, 128], strides = [1, 1]} : vector<16x128xf32> to vector<2x128xf32>
    %cst_25 = arith.constant dense<0.000000e+00> : vector<2x128xf32>
    %64 = tpu.matmul %43, %20, %cst_25 {dimension_numbers = #tpu.dot_dimension_numbers<[1], [0], [0], [1], [0, 0, 1, 1], [], []>} : vector<2x32xf32>, vector<32x128xf32>, vector<2x128xf32> -> vector<2x128xf32>
    %65 = arith.addf %63, %64 : vector<2x128xf32>
    %66 = arith.negf %65 : vector<2x128xf32>
    %67 = math.exp %66 : vector<2x128xf32>
    %cst_26 = arith.constant 1.000000e+00 : f32
    %68 = vector.broadcast %cst_26 : f32 to vector<2x128xf32>
    %69 = arith.addf %68, %67 : vector<2x128xf32>
    %70 = arith.divf %68, %69 : vector<2x128xf32>
    %71 = math.tanh %65 : vector<2x128xf32>
    %72 = vector.extract_strided_slice %70 {offsets = [0, 0], sizes = [2, 32], strides = [1, 1]} : vector<2x128xf32> to vector<2x32xf32>
    %73 = vector.extract_strided_slice %70 {offsets = [0, 32], sizes = [2, 32], strides = [1, 1]} : vector<2x128xf32> to vector<2x32xf32>
    %74 = vector.extract_strided_slice %71 {offsets = [0, 64], sizes = [2, 32], strides = [1, 1]} : vector<2x128xf32> to vector<2x32xf32>
    %75 = vector.extract_strided_slice %70 {offsets = [0, 96], sizes = [2, 32], strides = [1, 1]} : vector<2x128xf32> to vector<2x32xf32>
    %76 = arith.mulf %73, %41 : vector<2x32xf32>
    %77 = arith.mulf %72, %74 : vector<2x32xf32>
    %78 = arith.addf %76, %77 : vector<2x32xf32>
    %79 = math.tanh %78 : vector<2x32xf32>
    %80 = arith.mulf %75, %79 : vector<2x32xf32>
    %cst_27 = arith.constant dense<0.000000e+00> : vector<2x128xf32>
    %81 = tpu.matmul %80, %21, %cst_27 {dimension_numbers = #tpu.dot_dimension_numbers<[1], [0], [0], [1], [0, 0, 1, 1], [], []>} : vector<2x32xf32>, vector<32x128xf32>, vector<2x128xf32> -> vector<2x128xf32>
    %cst_28 = arith.constant dense<0.000000e+00> : vector<2x128xf32>
    %82 = tpu.matmul %62, %22, %cst_28 {dimension_numbers = #tpu.dot_dimension_numbers<[1], [0], [0], [1], [0, 0, 1, 1], [], []>} : vector<2x32xf32>, vector<32x128xf32>, vector<2x128xf32> -> vector<2x128xf32>
    %83 = arith.addf %81, %82 : vector<2x128xf32>
    %84 = arith.addf %83, %25 : vector<2x128xf32>
    %85 = arith.negf %84 : vector<2x128xf32>
    %86 = math.exp %85 : vector<2x128xf32>
    %cst_29 = arith.constant 1.000000e+00 : f32
    %87 = vector.broadcast %cst_29 : f32 to vector<2x128xf32>
    %88 = arith.addf %87, %86 : vector<2x128xf32>
    %89 = arith.divf %87, %88 : vector<2x128xf32>
    %90 = math.tanh %84 : vector<2x128xf32>
    %91 = vector.extract_strided_slice %89 {offsets = [0, 0], sizes = [2, 32], strides = [1, 1]} : vector<2x128xf32> to vector<2x32xf32>
    %92 = vector.extract_strided_slice %89 {offsets = [0, 32], sizes = [2, 32], strides = [1, 1]} : vector<2x128xf32> to vector<2x32xf32>
    %93 = vector.extract_strided_slice %90 {offsets = [0, 64], sizes = [2, 32], strides = [1, 1]} : vector<2x128xf32> to vector<2x32xf32>
    %94 = vector.extract_strided_slice %89 {offsets = [0, 96], sizes = [2, 32], strides = [1, 1]} : vector<2x128xf32> to vector<2x32xf32>
    %95 = arith.mulf %92, %60 : vector<2x32xf32>
    %96 = arith.mulf %91, %93 : vector<2x32xf32>
    %97 = arith.addf %95, %96 : vector<2x32xf32>
    %98 = math.tanh %97 : vector<2x32xf32>
    %99 = arith.mulf %94, %98 : vector<2x32xf32>
    %100 = vector.extract_strided_slice %7 {offsets = [4, 0], sizes = [2, 128], strides = [1, 1]} : vector<16x128xf32> to vector<2x128xf32>
    %cst_30 = arith.constant dense<0.000000e+00> : vector<2x128xf32>
    %101 = tpu.matmul %80, %20, %cst_30 {dimension_numbers = #tpu.dot_dimension_numbers<[1], [0], [0], [1], [0, 0, 1, 1], [], []>} : vector<2x32xf32>, vector<32x128xf32>, vector<2x128xf32> -> vector<2x128xf32>
    %102 = arith.addf %100, %101 : vector<2x128xf32>
    %103 = arith.negf %102 : vector<2x128xf32>
    %104 = math.exp %103 : vector<2x128xf32>
    %cst_31 = arith.constant 1.000000e+00 : f32
    %105 = vector.broadcast %cst_31 : f32 to vector<2x128xf32>
    %106 = arith.addf %105, %104 : vector<2x128xf32>
    %107 = arith.divf %105, %106 : vector<2x128xf32>
    %108 = math.tanh %102 : vector<2x128xf32>
    %109 = vector.extract_strided_slice %107 {offsets = [0, 0], sizes = [2, 32], strides = [1, 1]} : vector<2x128xf32> to vector<2x32xf32>
    %110 = vector.extract_strided_slice %107 {offsets = [0, 32], sizes = [2, 32], strides = [1, 1]} : vector<2x128xf32> to vector<2x32xf32>
    %111 = vector.extract_strided_slice %108 {offsets = [0, 64], sizes = [2, 32], strides = [1, 1]} : vector<2x128xf32> to vector<2x32xf32>
    %112 = vector.extract_strided_slice %107 {offsets = [0, 96], sizes = [2, 32], strides = [1, 1]} : vector<2x128xf32> to vector<2x32xf32>
    %113 = arith.mulf %110, %78 : vector<2x32xf32>
    %114 = arith.mulf %109, %111 : vector<2x32xf32>
    %115 = arith.addf %113, %114 : vector<2x32xf32>
    %116 = math.tanh %115 : vector<2x32xf32>
    %117 = arith.mulf %112, %116 : vector<2x32xf32>
    %cst_32 = arith.constant dense<0.000000e+00> : vector<2x128xf32>
    %118 = tpu.matmul %117, %21, %cst_32 {dimension_numbers = #tpu.dot_dimension_numbers<[1], [0], [0], [1], [0, 0, 1, 1], [], []>} : vector<2x32xf32>, vector<32x128xf32>, vector<2x128xf32> -> vector<2x128xf32>
    %cst_33 = arith.constant dense<0.000000e+00> : vector<2x128xf32>
    %119 = tpu.matmul %99, %22, %cst_33 {dimension_numbers = #tpu.dot_dimension_numbers<[1], [0], [0], [1], [0, 0, 1, 1], [], []>} : vector<2x32xf32>, vector<32x128xf32>, vector<2x128xf32> -> vector<2x128xf32>
    %120 = arith.addf %118, %119 : vector<2x128xf32>
    %121 = arith.addf %120, %25 : vector<2x128xf32>
    %122 = arith.negf %121 : vector<2x128xf32>
    %123 = math.exp %122 : vector<2x128xf32>
    %cst_34 = arith.constant 1.000000e+00 : f32
    %124 = vector.broadcast %cst_34 : f32 to vector<2x128xf32>
    %125 = arith.addf %124, %123 : vector<2x128xf32>
    %126 = arith.divf %124, %125 : vector<2x128xf32>
    %127 = math.tanh %121 : vector<2x128xf32>
    %128 = vector.extract_strided_slice %126 {offsets = [0, 0], sizes = [2, 32], strides = [1, 1]} : vector<2x128xf32> to vector<2x32xf32>
    %129 = vector.extract_strided_slice %126 {offsets = [0, 32], sizes = [2, 32], strides = [1, 1]} : vector<2x128xf32> to vector<2x32xf32>
    %130 = vector.extract_strided_slice %127 {offsets = [0, 64], sizes = [2, 32], strides = [1, 1]} : vector<2x128xf32> to vector<2x32xf32>
    %131 = vector.extract_strided_slice %126 {offsets = [0, 96], sizes = [2, 32], strides = [1, 1]} : vector<2x128xf32> to vector<2x32xf32>
    %132 = arith.mulf %129, %97 : vector<2x32xf32>
    %133 = arith.mulf %128, %130 : vector<2x32xf32>
    %134 = arith.addf %132, %133 : vector<2x32xf32>
    %135 = math.tanh %134 : vector<2x32xf32>
    %136 = arith.mulf %131, %135 : vector<2x32xf32>
    %137 = vector.extract_strided_slice %7 {offsets = [6, 0], sizes = [2, 128], strides = [1, 1]} : vector<16x128xf32> to vector<2x128xf32>
    %cst_35 = arith.constant dense<0.000000e+00> : vector<2x128xf32>
    %138 = tpu.matmul %117, %20, %cst_35 {dimension_numbers = #tpu.dot_dimension_numbers<[1], [0], [0], [1], [0, 0, 1, 1], [], []>} : vector<2x32xf32>, vector<32x128xf32>, vector<2x128xf32> -> vector<2x128xf32>
    %139 = arith.addf %137, %138 : vector<2x128xf32>
    %140 = arith.negf %139 : vector<2x128xf32>
    %141 = math.exp %140 : vector<2x128xf32>
    %cst_36 = arith.constant 1.000000e+00 : f32
    %142 = vector.broadcast %cst_36 : f32 to vector<2x128xf32>
    %143 = arith.addf %142, %141 : vector<2x128xf32>
    %144 = arith.divf %142, %143 : vector<2x128xf32>
    %145 = math.tanh %139 : vector<2x128xf32>
    %146 = vector.extract_strided_slice %144 {offsets = [0, 0], sizes = [2, 32], strides = [1, 1]} : vector<2x128xf32> to vector<2x32xf32>
    %147 = vector.extract_strided_slice %144 {offsets = [0, 32], sizes = [2, 32], strides = [1, 1]} : vector<2x128xf32> to vector<2x32xf32>
    %148 = vector.extract_strided_slice %145 {offsets = [0, 64], sizes = [2, 32], strides = [1, 1]} : vector<2x128xf32> to vector<2x32xf32>
    %149 = vector.extract_strided_slice %144 {offsets = [0, 96], sizes = [2, 32], strides = [1, 1]} : vector<2x128xf32> to vector<2x32xf32>
    %150 = arith.mulf %147, %115 : vector<2x32xf32>
    %151 = arith.mulf %146, %148 : vector<2x32xf32>
    %152 = arith.addf %150, %151 : vector<2x32xf32>
    %153 = math.tanh %152 : vector<2x32xf32>
    %154 = arith.mulf %149, %153 : vector<2x32xf32>
    %cst_37 = arith.constant dense<0.000000e+00> : vector<2x128xf32>
    %155 = tpu.matmul %154, %21, %cst_37 {dimension_numbers = #tpu.dot_dimension_numbers<[1], [0], [0], [1], [0, 0, 1, 1], [], []>} : vector<2x32xf32>, vector<32x128xf32>, vector<2x128xf32> -> vector<2x128xf32>
    %cst_38 = arith.constant dense<0.000000e+00> : vector<2x128xf32>
    %156 = tpu.matmul %136, %22, %cst_38 {dimension_numbers = #tpu.dot_dimension_numbers<[1], [0], [0], [1], [0, 0, 1, 1], [], []>} : vector<2x32xf32>, vector<32x128xf32>, vector<2x128xf32> -> vector<2x128xf32>
    %157 = arith.addf %155, %156 : vector<2x128xf32>
    %158 = arith.addf %157, %25 : vector<2x128xf32>
    %159 = arith.negf %158 : vector<2x128xf32>
    %160 = math.exp %159 : vector<2x128xf32>
    %cst_39 = arith.constant 1.000000e+00 : f32
    %161 = vector.broadcast %cst_39 : f32 to vector<2x128xf32>
    %162 = arith.addf %161, %160 : vector<2x128xf32>
    %163 = arith.divf %161, %162 : vector<2x128xf32>
    %164 = math.tanh %158 : vector<2x128xf32>
    %165 = vector.extract_strided_slice %163 {offsets = [0, 0], sizes = [2, 32], strides = [1, 1]} : vector<2x128xf32> to vector<2x32xf32>
    %166 = vector.extract_strided_slice %163 {offsets = [0, 32], sizes = [2, 32], strides = [1, 1]} : vector<2x128xf32> to vector<2x32xf32>
    %167 = vector.extract_strided_slice %164 {offsets = [0, 64], sizes = [2, 32], strides = [1, 1]} : vector<2x128xf32> to vector<2x32xf32>
    %168 = vector.extract_strided_slice %163 {offsets = [0, 96], sizes = [2, 32], strides = [1, 1]} : vector<2x128xf32> to vector<2x32xf32>
    %169 = arith.mulf %166, %134 : vector<2x32xf32>
    %170 = arith.mulf %165, %167 : vector<2x32xf32>
    %171 = arith.addf %169, %170 : vector<2x32xf32>
    %172 = math.tanh %171 : vector<2x32xf32>
    %173 = arith.mulf %168, %172 : vector<2x32xf32>
    %174 = vector.extract_strided_slice %7 {offsets = [8, 0], sizes = [2, 128], strides = [1, 1]} : vector<16x128xf32> to vector<2x128xf32>
    %cst_40 = arith.constant dense<0.000000e+00> : vector<2x128xf32>
    %175 = tpu.matmul %154, %20, %cst_40 {dimension_numbers = #tpu.dot_dimension_numbers<[1], [0], [0], [1], [0, 0, 1, 1], [], []>} : vector<2x32xf32>, vector<32x128xf32>, vector<2x128xf32> -> vector<2x128xf32>
    %176 = arith.addf %174, %175 : vector<2x128xf32>
    %177 = arith.negf %176 : vector<2x128xf32>
    %178 = math.exp %177 : vector<2x128xf32>
    %cst_41 = arith.constant 1.000000e+00 : f32
    %179 = vector.broadcast %cst_41 : f32 to vector<2x128xf32>
    %180 = arith.addf %179, %178 : vector<2x128xf32>
    %181 = arith.divf %179, %180 : vector<2x128xf32>
    %182 = math.tanh %176 : vector<2x128xf32>
    %183 = vector.extract_strided_slice %181 {offsets = [0, 0], sizes = [2, 32], strides = [1, 1]} : vector<2x128xf32> to vector<2x32xf32>
    %184 = vector.extract_strided_slice %181 {offsets = [0, 32], sizes = [2, 32], strides = [1, 1]} : vector<2x128xf32> to vector<2x32xf32>
    %185 = vector.extract_strided_slice %182 {offsets = [0, 64], sizes = [2, 32], strides = [1, 1]} : vector<2x128xf32> to vector<2x32xf32>
    %186 = vector.extract_strided_slice %181 {offsets = [0, 96], sizes = [2, 32], strides = [1, 1]} : vector<2x128xf32> to vector<2x32xf32>
    %187 = arith.mulf %184, %152 : vector<2x32xf32>
    %188 = arith.mulf %183, %185 : vector<2x32xf32>
    %189 = arith.addf %187, %188 : vector<2x32xf32>
    %190 = math.tanh %189 : vector<2x32xf32>
    %191 = arith.mulf %186, %190 : vector<2x32xf32>
    %cst_42 = arith.constant dense<0.000000e+00> : vector<2x128xf32>
    %192 = tpu.matmul %191, %21, %cst_42 {dimension_numbers = #tpu.dot_dimension_numbers<[1], [0], [0], [1], [0, 0, 1, 1], [], []>} : vector<2x32xf32>, vector<32x128xf32>, vector<2x128xf32> -> vector<2x128xf32>
    %cst_43 = arith.constant dense<0.000000e+00> : vector<2x128xf32>
    %193 = tpu.matmul %173, %22, %cst_43 {dimension_numbers = #tpu.dot_dimension_numbers<[1], [0], [0], [1], [0, 0, 1, 1], [], []>} : vector<2x32xf32>, vector<32x128xf32>, vector<2x128xf32> -> vector<2x128xf32>
    %194 = arith.addf %192, %193 : vector<2x128xf32>
    %195 = arith.addf %194, %25 : vector<2x128xf32>
    %196 = arith.negf %195 : vector<2x128xf32>
    %197 = math.exp %196 : vector<2x128xf32>
    %cst_44 = arith.constant 1.000000e+00 : f32
    %198 = vector.broadcast %cst_44 : f32 to vector<2x128xf32>
    %199 = arith.addf %198, %197 : vector<2x128xf32>
    %200 = arith.divf %198, %199 : vector<2x128xf32>
    %201 = math.tanh %195 : vector<2x128xf32>
    %202 = vector.extract_strided_slice %200 {offsets = [0, 0], sizes = [2, 32], strides = [1, 1]} : vector<2x128xf32> to vector<2x32xf32>
    %203 = vector.extract_strided_slice %200 {offsets = [0, 32], sizes = [2, 32], strides = [1, 1]} : vector<2x128xf32> to vector<2x32xf32>
    %204 = vector.extract_strided_slice %201 {offsets = [0, 64], sizes = [2, 32], strides = [1, 1]} : vector<2x128xf32> to vector<2x32xf32>
    %205 = vector.extract_strided_slice %200 {offsets = [0, 96], sizes = [2, 32], strides = [1, 1]} : vector<2x128xf32> to vector<2x32xf32>
    %206 = arith.mulf %203, %171 : vector<2x32xf32>
    %207 = arith.mulf %202, %204 : vector<2x32xf32>
    %208 = arith.addf %206, %207 : vector<2x32xf32>
    %209 = math.tanh %208 : vector<2x32xf32>
    %210 = arith.mulf %205, %209 : vector<2x32xf32>
    %211 = vector.extract_strided_slice %7 {offsets = [10, 0], sizes = [2, 128], strides = [1, 1]} : vector<16x128xf32> to vector<2x128xf32>
    %cst_45 = arith.constant dense<0.000000e+00> : vector<2x128xf32>
    %212 = tpu.matmul %191, %20, %cst_45 {dimension_numbers = #tpu.dot_dimension_numbers<[1], [0], [0], [1], [0, 0, 1, 1], [], []>} : vector<2x32xf32>, vector<32x128xf32>, vector<2x128xf32> -> vector<2x128xf32>
    %213 = arith.addf %211, %212 : vector<2x128xf32>
    %214 = arith.negf %213 : vector<2x128xf32>
    %215 = math.exp %214 : vector<2x128xf32>
    %cst_46 = arith.constant 1.000000e+00 : f32
    %216 = vector.broadcast %cst_46 : f32 to vector<2x128xf32>
    %217 = arith.addf %216, %215 : vector<2x128xf32>
    %218 = arith.divf %216, %217 : vector<2x128xf32>
    %219 = math.tanh %213 : vector<2x128xf32>
    %220 = vector.extract_strided_slice %218 {offsets = [0, 0], sizes = [2, 32], strides = [1, 1]} : vector<2x128xf32> to vector<2x32xf32>
    %221 = vector.extract_strided_slice %218 {offsets = [0, 32], sizes = [2, 32], strides = [1, 1]} : vector<2x128xf32> to vector<2x32xf32>
    %222 = vector.extract_strided_slice %219 {offsets = [0, 64], sizes = [2, 32], strides = [1, 1]} : vector<2x128xf32> to vector<2x32xf32>
    %223 = vector.extract_strided_slice %218 {offsets = [0, 96], sizes = [2, 32], strides = [1, 1]} : vector<2x128xf32> to vector<2x32xf32>
    %224 = arith.mulf %221, %189 : vector<2x32xf32>
    %225 = arith.mulf %220, %222 : vector<2x32xf32>
    %226 = arith.addf %224, %225 : vector<2x32xf32>
    %227 = math.tanh %226 : vector<2x32xf32>
    %228 = arith.mulf %223, %227 : vector<2x32xf32>
    %cst_47 = arith.constant dense<0.000000e+00> : vector<2x128xf32>
    %229 = tpu.matmul %228, %21, %cst_47 {dimension_numbers = #tpu.dot_dimension_numbers<[1], [0], [0], [1], [0, 0, 1, 1], [], []>} : vector<2x32xf32>, vector<32x128xf32>, vector<2x128xf32> -> vector<2x128xf32>
    %cst_48 = arith.constant dense<0.000000e+00> : vector<2x128xf32>
    %230 = tpu.matmul %210, %22, %cst_48 {dimension_numbers = #tpu.dot_dimension_numbers<[1], [0], [0], [1], [0, 0, 1, 1], [], []>} : vector<2x32xf32>, vector<32x128xf32>, vector<2x128xf32> -> vector<2x128xf32>
    %231 = arith.addf %229, %230 : vector<2x128xf32>
    %232 = arith.addf %231, %25 : vector<2x128xf32>
    %233 = arith.negf %232 : vector<2x128xf32>
    %234 = math.exp %233 : vector<2x128xf32>
    %cst_49 = arith.constant 1.000000e+00 : f32
    %235 = vector.broadcast %cst_49 : f32 to vector<2x128xf32>
    %236 = arith.addf %235, %234 : vector<2x128xf32>
    %237 = arith.divf %235, %236 : vector<2x128xf32>
    %238 = math.tanh %232 : vector<2x128xf32>
    %239 = vector.extract_strided_slice %237 {offsets = [0, 0], sizes = [2, 32], strides = [1, 1]} : vector<2x128xf32> to vector<2x32xf32>
    %240 = vector.extract_strided_slice %237 {offsets = [0, 32], sizes = [2, 32], strides = [1, 1]} : vector<2x128xf32> to vector<2x32xf32>
    %241 = vector.extract_strided_slice %238 {offsets = [0, 64], sizes = [2, 32], strides = [1, 1]} : vector<2x128xf32> to vector<2x32xf32>
    %242 = vector.extract_strided_slice %237 {offsets = [0, 96], sizes = [2, 32], strides = [1, 1]} : vector<2x128xf32> to vector<2x32xf32>
    %243 = arith.mulf %240, %208 : vector<2x32xf32>
    %244 = arith.mulf %239, %241 : vector<2x32xf32>
    %245 = arith.addf %243, %244 : vector<2x32xf32>
    %246 = math.tanh %245 : vector<2x32xf32>
    %247 = arith.mulf %242, %246 : vector<2x32xf32>
    %248 = vector.extract_strided_slice %7 {offsets = [12, 0], sizes = [2, 128], strides = [1, 1]} : vector<16x128xf32> to vector<2x128xf32>
    %cst_50 = arith.constant dense<0.000000e+00> : vector<2x128xf32>
    %249 = tpu.matmul %228, %20, %cst_50 {dimension_numbers = #tpu.dot_dimension_numbers<[1], [0], [0], [1], [0, 0, 1, 1], [], []>} : vector<2x32xf32>, vector<32x128xf32>, vector<2x128xf32> -> vector<2x128xf32>
    %250 = arith.addf %248, %249 : vector<2x128xf32>
    %251 = arith.negf %250 : vector<2x128xf32>
    %252 = math.exp %251 : vector<2x128xf32>
    %cst_51 = arith.constant 1.000000e+00 : f32
    %253 = vector.broadcast %cst_51 : f32 to vector<2x128xf32>
    %254 = arith.addf %253, %252 : vector<2x128xf32>
    %255 = arith.divf %253, %254 : vector<2x128xf32>
    %256 = math.tanh %250 : vector<2x128xf32>
    %257 = vector.extract_strided_slice %255 {offsets = [0, 0], sizes = [2, 32], strides = [1, 1]} : vector<2x128xf32> to vector<2x32xf32>
    %258 = vector.extract_strided_slice %255 {offsets = [0, 32], sizes = [2, 32], strides = [1, 1]} : vector<2x128xf32> to vector<2x32xf32>
    %259 = vector.extract_strided_slice %256 {offsets = [0, 64], sizes = [2, 32], strides = [1, 1]} : vector<2x128xf32> to vector<2x32xf32>
    %260 = vector.extract_strided_slice %255 {offsets = [0, 96], sizes = [2, 32], strides = [1, 1]} : vector<2x128xf32> to vector<2x32xf32>
    %261 = arith.mulf %258, %226 : vector<2x32xf32>
    %262 = arith.mulf %257, %259 : vector<2x32xf32>
    %263 = arith.addf %261, %262 : vector<2x32xf32>
    %264 = math.tanh %263 : vector<2x32xf32>
    %265 = arith.mulf %260, %264 : vector<2x32xf32>
    %cst_52 = arith.constant dense<0.000000e+00> : vector<2x128xf32>
    %266 = tpu.matmul %265, %21, %cst_52 {dimension_numbers = #tpu.dot_dimension_numbers<[1], [0], [0], [1], [0, 0, 1, 1], [], []>} : vector<2x32xf32>, vector<32x128xf32>, vector<2x128xf32> -> vector<2x128xf32>
    %cst_53 = arith.constant dense<0.000000e+00> : vector<2x128xf32>
    %267 = tpu.matmul %247, %22, %cst_53 {dimension_numbers = #tpu.dot_dimension_numbers<[1], [0], [0], [1], [0, 0, 1, 1], [], []>} : vector<2x32xf32>, vector<32x128xf32>, vector<2x128xf32> -> vector<2x128xf32>
    %268 = arith.addf %266, %267 : vector<2x128xf32>
    %269 = arith.addf %268, %25 : vector<2x128xf32>
    %270 = arith.negf %269 : vector<2x128xf32>
    %271 = math.exp %270 : vector<2x128xf32>
    %cst_54 = arith.constant 1.000000e+00 : f32
    %272 = vector.broadcast %cst_54 : f32 to vector<2x128xf32>
    %273 = arith.addf %272, %271 : vector<2x128xf32>
    %274 = arith.divf %272, %273 : vector<2x128xf32>
    %275 = math.tanh %269 : vector<2x128xf32>
    %276 = vector.extract_strided_slice %274 {offsets = [0, 0], sizes = [2, 32], strides = [1, 1]} : vector<2x128xf32> to vector<2x32xf32>
    %277 = vector.extract_strided_slice %274 {offsets = [0, 32], sizes = [2, 32], strides = [1, 1]} : vector<2x128xf32> to vector<2x32xf32>
    %278 = vector.extract_strided_slice %275 {offsets = [0, 64], sizes = [2, 32], strides = [1, 1]} : vector<2x128xf32> to vector<2x32xf32>
    %279 = vector.extract_strided_slice %274 {offsets = [0, 96], sizes = [2, 32], strides = [1, 1]} : vector<2x128xf32> to vector<2x32xf32>
    %280 = arith.mulf %277, %245 : vector<2x32xf32>
    %281 = arith.mulf %276, %278 : vector<2x32xf32>
    %282 = arith.addf %280, %281 : vector<2x32xf32>
    %283 = math.tanh %282 : vector<2x32xf32>
    %284 = arith.mulf %279, %283 : vector<2x32xf32>
    %285 = vector.extract_strided_slice %7 {offsets = [14, 0], sizes = [2, 128], strides = [1, 1]} : vector<16x128xf32> to vector<2x128xf32>
    %cst_55 = arith.constant dense<0.000000e+00> : vector<2x128xf32>
    %286 = tpu.matmul %265, %20, %cst_55 {dimension_numbers = #tpu.dot_dimension_numbers<[1], [0], [0], [1], [0, 0, 1, 1], [], []>} : vector<2x32xf32>, vector<32x128xf32>, vector<2x128xf32> -> vector<2x128xf32>
    %287 = arith.addf %285, %286 : vector<2x128xf32>
    %288 = arith.negf %287 : vector<2x128xf32>
    %289 = math.exp %288 : vector<2x128xf32>
    %cst_56 = arith.constant 1.000000e+00 : f32
    %290 = vector.broadcast %cst_56 : f32 to vector<2x128xf32>
    %291 = arith.addf %290, %289 : vector<2x128xf32>
    %292 = arith.divf %290, %291 : vector<2x128xf32>
    %293 = math.tanh %287 : vector<2x128xf32>
    %294 = vector.extract_strided_slice %292 {offsets = [0, 0], sizes = [2, 32], strides = [1, 1]} : vector<2x128xf32> to vector<2x32xf32>
    %295 = vector.extract_strided_slice %292 {offsets = [0, 32], sizes = [2, 32], strides = [1, 1]} : vector<2x128xf32> to vector<2x32xf32>
    %296 = vector.extract_strided_slice %293 {offsets = [0, 64], sizes = [2, 32], strides = [1, 1]} : vector<2x128xf32> to vector<2x32xf32>
    %297 = vector.extract_strided_slice %292 {offsets = [0, 96], sizes = [2, 32], strides = [1, 1]} : vector<2x128xf32> to vector<2x32xf32>
    %298 = arith.mulf %295, %263 : vector<2x32xf32>
    %299 = arith.mulf %294, %296 : vector<2x32xf32>
    %300 = arith.addf %298, %299 : vector<2x32xf32>
    %301 = math.tanh %300 : vector<2x32xf32>
    %302 = arith.mulf %297, %301 : vector<2x32xf32>
    %cst_57 = arith.constant dense<0.000000e+00> : vector<2x128xf32>
    %303 = tpu.matmul %302, %21, %cst_57 {dimension_numbers = #tpu.dot_dimension_numbers<[1], [0], [0], [1], [0, 0, 1, 1], [], []>} : vector<2x32xf32>, vector<32x128xf32>, vector<2x128xf32> -> vector<2x128xf32>
    %cst_58 = arith.constant dense<0.000000e+00> : vector<2x128xf32>
    %304 = tpu.matmul %284, %22, %cst_58 {dimension_numbers = #tpu.dot_dimension_numbers<[1], [0], [0], [1], [0, 0, 1, 1], [], []>} : vector<2x32xf32>, vector<32x128xf32>, vector<2x128xf32> -> vector<2x128xf32>
    %305 = arith.addf %303, %304 : vector<2x128xf32>
    %306 = arith.addf %305, %25 : vector<2x128xf32>
    %307 = arith.negf %306 : vector<2x128xf32>
    %308 = math.exp %307 : vector<2x128xf32>
    %cst_59 = arith.constant 1.000000e+00 : f32
    %309 = vector.broadcast %cst_59 : f32 to vector<2x128xf32>
    %310 = arith.addf %309, %308 : vector<2x128xf32>
    %311 = arith.divf %309, %310 : vector<2x128xf32>
    %312 = math.tanh %306 : vector<2x128xf32>
    %313 = vector.extract_strided_slice %311 {offsets = [0, 0], sizes = [2, 32], strides = [1, 1]} : vector<2x128xf32> to vector<2x32xf32>
    %314 = vector.extract_strided_slice %311 {offsets = [0, 32], sizes = [2, 32], strides = [1, 1]} : vector<2x128xf32> to vector<2x32xf32>
    %315 = vector.extract_strided_slice %312 {offsets = [0, 64], sizes = [2, 32], strides = [1, 1]} : vector<2x128xf32> to vector<2x32xf32>
    %316 = vector.extract_strided_slice %311 {offsets = [0, 96], sizes = [2, 32], strides = [1, 1]} : vector<2x128xf32> to vector<2x32xf32>
    %317 = arith.mulf %314, %282 : vector<2x32xf32>
    %318 = arith.mulf %313, %315 : vector<2x32xf32>
    %319 = arith.addf %317, %318 : vector<2x32xf32>
    %320 = math.tanh %319 : vector<2x32xf32>
    %321 = arith.mulf %316, %320 : vector<2x32xf32>
    %c0_60 = arith.constant 0 : index
    %c0_61 = arith.constant 0 : index
    %322 = vector.load %arg8[%c0_60, %c0_61] : memref<32x128xf32, #tpu.memory_space<vmem>>, vector<32x128xf32>
    %c0_62 = arith.constant 0 : index
    %c0_63 = arith.constant 0 : index
    %323 = vector.load %arg9[%c0_62, %c0_63] : memref<32x128xf32, #tpu.memory_space<vmem>>, vector<32x128xf32>
    %c0_64 = arith.constant 0 : index
    %c0_65 = arith.constant 0 : index
    %324 = vector.load %arg10[%c0_64, %c0_65] : memref<32x128xf32, #tpu.memory_space<vmem>>, vector<32x128xf32>
    %c0_66 = arith.constant 0 : index
    %c0_67 = arith.constant 0 : index
    %325 = vector.load %arg11[%c0_66, %c0_67] : memref<1x128xf32, #tpu.memory_space<vmem>>, vector<1x128xf32>
    %326 = vector.shape_cast %325 : vector<1x128xf32> to vector<1x128xf32>
    %327 = vector.broadcast %326 : vector<1x128xf32> to vector<2x128xf32>
    %328 = vector.extract_strided_slice %15 {offsets = [0, 0], sizes = [2, 128], strides = [1, 1]} : vector<14x128xf32> to vector<2x128xf32>
    %cst_68 = arith.constant dense<0.000000e+00> : vector<2x128xf32>
    %329 = tpu.matmul %302, %322, %cst_68 {dimension_numbers = #tpu.dot_dimension_numbers<[1], [0], [0], [1], [0, 0, 1, 1], [], []>} : vector<2x32xf32>, vector<32x128xf32>, vector<2x128xf32> -> vector<2x128xf32>
    %330 = arith.addf %328, %329 : vector<2x128xf32>
    %331 = arith.negf %330 : vector<2x128xf32>
    %332 = math.exp %331 : vector<2x128xf32>
    %cst_69 = arith.constant 1.000000e+00 : f32
    %333 = vector.broadcast %cst_69 : f32 to vector<2x128xf32>
    %334 = arith.addf %333, %332 : vector<2x128xf32>
    %335 = arith.divf %333, %334 : vector<2x128xf32>
    %336 = math.tanh %330 : vector<2x128xf32>
    %337 = vector.extract_strided_slice %335 {offsets = [0, 0], sizes = [2, 32], strides = [1, 1]} : vector<2x128xf32> to vector<2x32xf32>
    %338 = vector.extract_strided_slice %335 {offsets = [0, 32], sizes = [2, 32], strides = [1, 1]} : vector<2x128xf32> to vector<2x32xf32>
    %339 = vector.extract_strided_slice %336 {offsets = [0, 64], sizes = [2, 32], strides = [1, 1]} : vector<2x128xf32> to vector<2x32xf32>
    %340 = vector.extract_strided_slice %335 {offsets = [0, 96], sizes = [2, 32], strides = [1, 1]} : vector<2x128xf32> to vector<2x32xf32>
    %341 = arith.mulf %338, %300 : vector<2x32xf32>
    %342 = arith.mulf %337, %339 : vector<2x32xf32>
    %343 = arith.addf %341, %342 : vector<2x32xf32>
    %344 = math.tanh %343 : vector<2x32xf32>
    %345 = arith.mulf %340, %344 : vector<2x32xf32>
    %cst_70 = arith.constant dense<0.000000e+00> : vector<2x128xf32>
    %346 = tpu.matmul %345, %323, %cst_70 {dimension_numbers = #tpu.dot_dimension_numbers<[1], [0], [0], [1], [0, 0, 1, 1], [], []>} : vector<2x32xf32>, vector<32x128xf32>, vector<2x128xf32> -> vector<2x128xf32>
    %cst_71 = arith.constant dense<0.000000e+00> : vector<2x128xf32>
    %347 = tpu.matmul %321, %324, %cst_71 {dimension_numbers = #tpu.dot_dimension_numbers<[1], [0], [0], [1], [0, 0, 1, 1], [], []>} : vector<2x32xf32>, vector<32x128xf32>, vector<2x128xf32> -> vector<2x128xf32>
    %348 = arith.addf %346, %347 : vector<2x128xf32>
    %349 = arith.addf %348, %327 : vector<2x128xf32>
    %350 = arith.negf %349 : vector<2x128xf32>
    %351 = math.exp %350 : vector<2x128xf32>
    %cst_72 = arith.constant 1.000000e+00 : f32
    %352 = vector.broadcast %cst_72 : f32 to vector<2x128xf32>
    %353 = arith.addf %352, %351 : vector<2x128xf32>
    %354 = arith.divf %352, %353 : vector<2x128xf32>
    %355 = math.tanh %349 : vector<2x128xf32>
    %356 = vector.extract_strided_slice %354 {offsets = [0, 0], sizes = [2, 32], strides = [1, 1]} : vector<2x128xf32> to vector<2x32xf32>
    %357 = vector.extract_strided_slice %354 {offsets = [0, 32], sizes = [2, 32], strides = [1, 1]} : vector<2x128xf32> to vector<2x32xf32>
    %358 = vector.extract_strided_slice %355 {offsets = [0, 64], sizes = [2, 32], strides = [1, 1]} : vector<2x128xf32> to vector<2x32xf32>
    %359 = vector.extract_strided_slice %354 {offsets = [0, 96], sizes = [2, 32], strides = [1, 1]} : vector<2x128xf32> to vector<2x32xf32>
    %360 = arith.mulf %357, %319 : vector<2x32xf32>
    %361 = arith.mulf %356, %358 : vector<2x32xf32>
    %362 = arith.addf %360, %361 : vector<2x32xf32>
    %363 = math.tanh %362 : vector<2x32xf32>
    %364 = arith.mulf %359, %363 : vector<2x32xf32>
    %365 = vector.extract_strided_slice %15 {offsets = [2, 0], sizes = [2, 128], strides = [1, 1]} : vector<14x128xf32> to vector<2x128xf32>
    %cst_73 = arith.constant dense<0.000000e+00> : vector<2x128xf32>
    %366 = tpu.matmul %345, %322, %cst_73 {dimension_numbers = #tpu.dot_dimension_numbers<[1], [0], [0], [1], [0, 0, 1, 1], [], []>} : vector<2x32xf32>, vector<32x128xf32>, vector<2x128xf32> -> vector<2x128xf32>
    %367 = arith.addf %365, %366 : vector<2x128xf32>
    %368 = arith.negf %367 : vector<2x128xf32>
    %369 = math.exp %368 : vector<2x128xf32>
    %cst_74 = arith.constant 1.000000e+00 : f32
    %370 = vector.broadcast %cst_74 : f32 to vector<2x128xf32>
    %371 = arith.addf %370, %369 : vector<2x128xf32>
    %372 = arith.divf %370, %371 : vector<2x128xf32>
    %373 = math.tanh %367 : vector<2x128xf32>
    %374 = vector.extract_strided_slice %372 {offsets = [0, 0], sizes = [2, 32], strides = [1, 1]} : vector<2x128xf32> to vector<2x32xf32>
    %375 = vector.extract_strided_slice %372 {offsets = [0, 32], sizes = [2, 32], strides = [1, 1]} : vector<2x128xf32> to vector<2x32xf32>
    %376 = vector.extract_strided_slice %373 {offsets = [0, 64], sizes = [2, 32], strides = [1, 1]} : vector<2x128xf32> to vector<2x32xf32>
    %377 = vector.extract_strided_slice %372 {offsets = [0, 96], sizes = [2, 32], strides = [1, 1]} : vector<2x128xf32> to vector<2x32xf32>
    %378 = arith.mulf %375, %343 : vector<2x32xf32>
    %379 = arith.mulf %374, %376 : vector<2x32xf32>
    %380 = arith.addf %378, %379 : vector<2x32xf32>
    %381 = math.tanh %380 : vector<2x32xf32>
    %382 = arith.mulf %377, %381 : vector<2x32xf32>
    %cst_75 = arith.constant dense<0.000000e+00> : vector<2x128xf32>
    %383 = tpu.matmul %382, %323, %cst_75 {dimension_numbers = #tpu.dot_dimension_numbers<[1], [0], [0], [1], [0, 0, 1, 1], [], []>} : vector<2x32xf32>, vector<32x128xf32>, vector<2x128xf32> -> vector<2x128xf32>
    %cst_76 = arith.constant dense<0.000000e+00> : vector<2x128xf32>
    %384 = tpu.matmul %364, %324, %cst_76 {dimension_numbers = #tpu.dot_dimension_numbers<[1], [0], [0], [1], [0, 0, 1, 1], [], []>} : vector<2x32xf32>, vector<32x128xf32>, vector<2x128xf32> -> vector<2x128xf32>
    %385 = arith.addf %383, %384 : vector<2x128xf32>
    %386 = arith.addf %385, %327 : vector<2x128xf32>
    %387 = arith.negf %386 : vector<2x128xf32>
    %388 = math.exp %387 : vector<2x128xf32>
    %cst_77 = arith.constant 1.000000e+00 : f32
    %389 = vector.broadcast %cst_77 : f32 to vector<2x128xf32>
    %390 = arith.addf %389, %388 : vector<2x128xf32>
    %391 = arith.divf %389, %390 : vector<2x128xf32>
    %392 = math.tanh %386 : vector<2x128xf32>
    %393 = vector.extract_strided_slice %391 {offsets = [0, 0], sizes = [2, 32], strides = [1, 1]} : vector<2x128xf32> to vector<2x32xf32>
    %394 = vector.extract_strided_slice %391 {offsets = [0, 32], sizes = [2, 32], strides = [1, 1]} : vector<2x128xf32> to vector<2x32xf32>
    %395 = vector.extract_strided_slice %392 {offsets = [0, 64], sizes = [2, 32], strides = [1, 1]} : vector<2x128xf32> to vector<2x32xf32>
    %396 = vector.extract_strided_slice %391 {offsets = [0, 96], sizes = [2, 32], strides = [1, 1]} : vector<2x128xf32> to vector<2x32xf32>
    %397 = arith.mulf %394, %362 : vector<2x32xf32>
    %398 = arith.mulf %393, %395 : vector<2x32xf32>
    %399 = arith.addf %397, %398 : vector<2x32xf32>
    %400 = math.tanh %399 : vector<2x32xf32>
    %401 = arith.mulf %396, %400 : vector<2x32xf32>
    %402 = vector.extract_strided_slice %15 {offsets = [4, 0], sizes = [2, 128], strides = [1, 1]} : vector<14x128xf32> to vector<2x128xf32>
    %cst_78 = arith.constant dense<0.000000e+00> : vector<2x128xf32>
    %403 = tpu.matmul %382, %322, %cst_78 {dimension_numbers = #tpu.dot_dimension_numbers<[1], [0], [0], [1], [0, 0, 1, 1], [], []>} : vector<2x32xf32>, vector<32x128xf32>, vector<2x128xf32> -> vector<2x128xf32>
    %404 = arith.addf %402, %403 : vector<2x128xf32>
    %405 = arith.negf %404 : vector<2x128xf32>
    %406 = math.exp %405 : vector<2x128xf32>
    %cst_79 = arith.constant 1.000000e+00 : f32
    %407 = vector.broadcast %cst_79 : f32 to vector<2x128xf32>
    %408 = arith.addf %407, %406 : vector<2x128xf32>
    %409 = arith.divf %407, %408 : vector<2x128xf32>
    %410 = math.tanh %404 : vector<2x128xf32>
    %411 = vector.extract_strided_slice %409 {offsets = [0, 0], sizes = [2, 32], strides = [1, 1]} : vector<2x128xf32> to vector<2x32xf32>
    %412 = vector.extract_strided_slice %409 {offsets = [0, 32], sizes = [2, 32], strides = [1, 1]} : vector<2x128xf32> to vector<2x32xf32>
    %413 = vector.extract_strided_slice %410 {offsets = [0, 64], sizes = [2, 32], strides = [1, 1]} : vector<2x128xf32> to vector<2x32xf32>
    %414 = vector.extract_strided_slice %409 {offsets = [0, 96], sizes = [2, 32], strides = [1, 1]} : vector<2x128xf32> to vector<2x32xf32>
    %415 = arith.mulf %412, %380 : vector<2x32xf32>
    %416 = arith.mulf %411, %413 : vector<2x32xf32>
    %417 = arith.addf %415, %416 : vector<2x32xf32>
    %418 = math.tanh %417 : vector<2x32xf32>
    %419 = arith.mulf %414, %418 : vector<2x32xf32>
    %cst_80 = arith.constant dense<0.000000e+00> : vector<2x128xf32>
    %420 = tpu.matmul %419, %323, %cst_80 {dimension_numbers = #tpu.dot_dimension_numbers<[1], [0], [0], [1], [0, 0, 1, 1], [], []>} : vector<2x32xf32>, vector<32x128xf32>, vector<2x128xf32> -> vector<2x128xf32>
    %cst_81 = arith.constant dense<0.000000e+00> : vector<2x128xf32>
    %421 = tpu.matmul %401, %324, %cst_81 {dimension_numbers = #tpu.dot_dimension_numbers<[1], [0], [0], [1], [0, 0, 1, 1], [], []>} : vector<2x32xf32>, vector<32x128xf32>, vector<2x128xf32> -> vector<2x128xf32>
    %422 = arith.addf %420, %421 : vector<2x128xf32>
    %423 = arith.addf %422, %327 : vector<2x128xf32>
    %424 = arith.negf %423 : vector<2x128xf32>
    %425 = math.exp %424 : vector<2x128xf32>
    %cst_82 = arith.constant 1.000000e+00 : f32
    %426 = vector.broadcast %cst_82 : f32 to vector<2x128xf32>
    %427 = arith.addf %426, %425 : vector<2x128xf32>
    %428 = arith.divf %426, %427 : vector<2x128xf32>
    %429 = math.tanh %423 : vector<2x128xf32>
    %430 = vector.extract_strided_slice %428 {offsets = [0, 0], sizes = [2, 32], strides = [1, 1]} : vector<2x128xf32> to vector<2x32xf32>
    %431 = vector.extract_strided_slice %428 {offsets = [0, 32], sizes = [2, 32], strides = [1, 1]} : vector<2x128xf32> to vector<2x32xf32>
    %432 = vector.extract_strided_slice %429 {offsets = [0, 64], sizes = [2, 32], strides = [1, 1]} : vector<2x128xf32> to vector<2x32xf32>
    %433 = vector.extract_strided_slice %428 {offsets = [0, 96], sizes = [2, 32], strides = [1, 1]} : vector<2x128xf32> to vector<2x32xf32>
    %434 = arith.mulf %431, %399 : vector<2x32xf32>
    %435 = arith.mulf %430, %432 : vector<2x32xf32>
    %436 = arith.addf %434, %435 : vector<2x32xf32>
    %437 = math.tanh %436 : vector<2x32xf32>
    %438 = arith.mulf %433, %437 : vector<2x32xf32>
    %439 = vector.extract_strided_slice %15 {offsets = [6, 0], sizes = [2, 128], strides = [1, 1]} : vector<14x128xf32> to vector<2x128xf32>
    %cst_83 = arith.constant dense<0.000000e+00> : vector<2x128xf32>
    %440 = tpu.matmul %419, %322, %cst_83 {dimension_numbers = #tpu.dot_dimension_numbers<[1], [0], [0], [1], [0, 0, 1, 1], [], []>} : vector<2x32xf32>, vector<32x128xf32>, vector<2x128xf32> -> vector<2x128xf32>
    %441 = arith.addf %439, %440 : vector<2x128xf32>
    %442 = arith.negf %441 : vector<2x128xf32>
    %443 = math.exp %442 : vector<2x128xf32>
    %cst_84 = arith.constant 1.000000e+00 : f32
    %444 = vector.broadcast %cst_84 : f32 to vector<2x128xf32>
    %445 = arith.addf %444, %443 : vector<2x128xf32>
    %446 = arith.divf %444, %445 : vector<2x128xf32>
    %447 = math.tanh %441 : vector<2x128xf32>
    %448 = vector.extract_strided_slice %446 {offsets = [0, 0], sizes = [2, 32], strides = [1, 1]} : vector<2x128xf32> to vector<2x32xf32>
    %449 = vector.extract_strided_slice %446 {offsets = [0, 32], sizes = [2, 32], strides = [1, 1]} : vector<2x128xf32> to vector<2x32xf32>
    %450 = vector.extract_strided_slice %447 {offsets = [0, 64], sizes = [2, 32], strides = [1, 1]} : vector<2x128xf32> to vector<2x32xf32>
    %451 = vector.extract_strided_slice %446 {offsets = [0, 96], sizes = [2, 32], strides = [1, 1]} : vector<2x128xf32> to vector<2x32xf32>
    %452 = arith.mulf %449, %417 : vector<2x32xf32>
    %453 = arith.mulf %448, %450 : vector<2x32xf32>
    %454 = arith.addf %452, %453 : vector<2x32xf32>
    %455 = math.tanh %454 : vector<2x32xf32>
    %456 = arith.mulf %451, %455 : vector<2x32xf32>
    %cst_85 = arith.constant dense<0.000000e+00> : vector<2x128xf32>
    %457 = tpu.matmul %456, %323, %cst_85 {dimension_numbers = #tpu.dot_dimension_numbers<[1], [0], [0], [1], [0, 0, 1, 1], [], []>} : vector<2x32xf32>, vector<32x128xf32>, vector<2x128xf32> -> vector<2x128xf32>
    %cst_86 = arith.constant dense<0.000000e+00> : vector<2x128xf32>
    %458 = tpu.matmul %438, %324, %cst_86 {dimension_numbers = #tpu.dot_dimension_numbers<[1], [0], [0], [1], [0, 0, 1, 1], [], []>} : vector<2x32xf32>, vector<32x128xf32>, vector<2x128xf32> -> vector<2x128xf32>
    %459 = arith.addf %457, %458 : vector<2x128xf32>
    %460 = arith.addf %459, %327 : vector<2x128xf32>
    %461 = arith.negf %460 : vector<2x128xf32>
    %462 = math.exp %461 : vector<2x128xf32>
    %cst_87 = arith.constant 1.000000e+00 : f32
    %463 = vector.broadcast %cst_87 : f32 to vector<2x128xf32>
    %464 = arith.addf %463, %462 : vector<2x128xf32>
    %465 = arith.divf %463, %464 : vector<2x128xf32>
    %466 = math.tanh %460 : vector<2x128xf32>
    %467 = vector.extract_strided_slice %465 {offsets = [0, 0], sizes = [2, 32], strides = [1, 1]} : vector<2x128xf32> to vector<2x32xf32>
    %468 = vector.extract_strided_slice %465 {offsets = [0, 32], sizes = [2, 32], strides = [1, 1]} : vector<2x128xf32> to vector<2x32xf32>
    %469 = vector.extract_strided_slice %466 {offsets = [0, 64], sizes = [2, 32], strides = [1, 1]} : vector<2x128xf32> to vector<2x32xf32>
    %470 = vector.extract_strided_slice %465 {offsets = [0, 96], sizes = [2, 32], strides = [1, 1]} : vector<2x128xf32> to vector<2x32xf32>
    %471 = arith.mulf %468, %436 : vector<2x32xf32>
    %472 = arith.mulf %467, %469 : vector<2x32xf32>
    %473 = arith.addf %471, %472 : vector<2x32xf32>
    %474 = math.tanh %473 : vector<2x32xf32>
    %475 = arith.mulf %470, %474 : vector<2x32xf32>
    %476 = vector.extract_strided_slice %15 {offsets = [8, 0], sizes = [2, 128], strides = [1, 1]} : vector<14x128xf32> to vector<2x128xf32>
    %cst_88 = arith.constant dense<0.000000e+00> : vector<2x128xf32>
    %477 = tpu.matmul %456, %322, %cst_88 {dimension_numbers = #tpu.dot_dimension_numbers<[1], [0], [0], [1], [0, 0, 1, 1], [], []>} : vector<2x32xf32>, vector<32x128xf32>, vector<2x128xf32> -> vector<2x128xf32>
    %478 = arith.addf %476, %477 : vector<2x128xf32>
    %479 = arith.negf %478 : vector<2x128xf32>
    %480 = math.exp %479 : vector<2x128xf32>
    %cst_89 = arith.constant 1.000000e+00 : f32
    %481 = vector.broadcast %cst_89 : f32 to vector<2x128xf32>
    %482 = arith.addf %481, %480 : vector<2x128xf32>
    %483 = arith.divf %481, %482 : vector<2x128xf32>
    %484 = math.tanh %478 : vector<2x128xf32>
    %485 = vector.extract_strided_slice %483 {offsets = [0, 0], sizes = [2, 32], strides = [1, 1]} : vector<2x128xf32> to vector<2x32xf32>
    %486 = vector.extract_strided_slice %483 {offsets = [0, 32], sizes = [2, 32], strides = [1, 1]} : vector<2x128xf32> to vector<2x32xf32>
    %487 = vector.extract_strided_slice %484 {offsets = [0, 64], sizes = [2, 32], strides = [1, 1]} : vector<2x128xf32> to vector<2x32xf32>
    %488 = vector.extract_strided_slice %483 {offsets = [0, 96], sizes = [2, 32], strides = [1, 1]} : vector<2x128xf32> to vector<2x32xf32>
    %489 = arith.mulf %486, %454 : vector<2x32xf32>
    %490 = arith.mulf %485, %487 : vector<2x32xf32>
    %491 = arith.addf %489, %490 : vector<2x32xf32>
    %492 = math.tanh %491 : vector<2x32xf32>
    %493 = arith.mulf %488, %492 : vector<2x32xf32>
    %cst_90 = arith.constant dense<0.000000e+00> : vector<2x128xf32>
    %494 = tpu.matmul %493, %323, %cst_90 {dimension_numbers = #tpu.dot_dimension_numbers<[1], [0], [0], [1], [0, 0, 1, 1], [], []>} : vector<2x32xf32>, vector<32x128xf32>, vector<2x128xf32> -> vector<2x128xf32>
    %cst_91 = arith.constant dense<0.000000e+00> : vector<2x128xf32>
    %495 = tpu.matmul %475, %324, %cst_91 {dimension_numbers = #tpu.dot_dimension_numbers<[1], [0], [0], [1], [0, 0, 1, 1], [], []>} : vector<2x32xf32>, vector<32x128xf32>, vector<2x128xf32> -> vector<2x128xf32>
    %496 = arith.addf %494, %495 : vector<2x128xf32>
    %497 = arith.addf %496, %327 : vector<2x128xf32>
    %498 = arith.negf %497 : vector<2x128xf32>
    %499 = math.exp %498 : vector<2x128xf32>
    %cst_92 = arith.constant 1.000000e+00 : f32
    %500 = vector.broadcast %cst_92 : f32 to vector<2x128xf32>
    %501 = arith.addf %500, %499 : vector<2x128xf32>
    %502 = arith.divf %500, %501 : vector<2x128xf32>
    %503 = math.tanh %497 : vector<2x128xf32>
    %504 = vector.extract_strided_slice %502 {offsets = [0, 0], sizes = [2, 32], strides = [1, 1]} : vector<2x128xf32> to vector<2x32xf32>
    %505 = vector.extract_strided_slice %502 {offsets = [0, 32], sizes = [2, 32], strides = [1, 1]} : vector<2x128xf32> to vector<2x32xf32>
    %506 = vector.extract_strided_slice %503 {offsets = [0, 64], sizes = [2, 32], strides = [1, 1]} : vector<2x128xf32> to vector<2x32xf32>
    %507 = vector.extract_strided_slice %502 {offsets = [0, 96], sizes = [2, 32], strides = [1, 1]} : vector<2x128xf32> to vector<2x32xf32>
    %508 = arith.mulf %505, %473 : vector<2x32xf32>
    %509 = arith.mulf %504, %506 : vector<2x32xf32>
    %510 = arith.addf %508, %509 : vector<2x32xf32>
    %511 = math.tanh %510 : vector<2x32xf32>
    %512 = arith.mulf %507, %511 : vector<2x32xf32>
    %513 = vector.extract_strided_slice %15 {offsets = [10, 0], sizes = [2, 128], strides = [1, 1]} : vector<14x128xf32> to vector<2x128xf32>
    %cst_93 = arith.constant dense<0.000000e+00> : vector<2x128xf32>
    %514 = tpu.matmul %493, %322, %cst_93 {dimension_numbers = #tpu.dot_dimension_numbers<[1], [0], [0], [1], [0, 0, 1, 1], [], []>} : vector<2x32xf32>, vector<32x128xf32>, vector<2x128xf32> -> vector<2x128xf32>
    %515 = arith.addf %513, %514 : vector<2x128xf32>
    %516 = arith.negf %515 : vector<2x128xf32>
    %517 = math.exp %516 : vector<2x128xf32>
    %cst_94 = arith.constant 1.000000e+00 : f32
    %518 = vector.broadcast %cst_94 : f32 to vector<2x128xf32>
    %519 = arith.addf %518, %517 : vector<2x128xf32>
    %520 = arith.divf %518, %519 : vector<2x128xf32>
    %521 = math.tanh %515 : vector<2x128xf32>
    %522 = vector.extract_strided_slice %520 {offsets = [0, 0], sizes = [2, 32], strides = [1, 1]} : vector<2x128xf32> to vector<2x32xf32>
    %523 = vector.extract_strided_slice %520 {offsets = [0, 32], sizes = [2, 32], strides = [1, 1]} : vector<2x128xf32> to vector<2x32xf32>
    %524 = vector.extract_strided_slice %521 {offsets = [0, 64], sizes = [2, 32], strides = [1, 1]} : vector<2x128xf32> to vector<2x32xf32>
    %525 = vector.extract_strided_slice %520 {offsets = [0, 96], sizes = [2, 32], strides = [1, 1]} : vector<2x128xf32> to vector<2x32xf32>
    %526 = arith.mulf %523, %491 : vector<2x32xf32>
    %527 = arith.mulf %522, %524 : vector<2x32xf32>
    %528 = arith.addf %526, %527 : vector<2x32xf32>
    %529 = math.tanh %528 : vector<2x32xf32>
    %530 = arith.mulf %525, %529 : vector<2x32xf32>
    %cst_95 = arith.constant dense<0.000000e+00> : vector<2x128xf32>
    %531 = tpu.matmul %530, %323, %cst_95 {dimension_numbers = #tpu.dot_dimension_numbers<[1], [0], [0], [1], [0, 0, 1, 1], [], []>} : vector<2x32xf32>, vector<32x128xf32>, vector<2x128xf32> -> vector<2x128xf32>
    %cst_96 = arith.constant dense<0.000000e+00> : vector<2x128xf32>
    %532 = tpu.matmul %512, %324, %cst_96 {dimension_numbers = #tpu.dot_dimension_numbers<[1], [0], [0], [1], [0, 0, 1, 1], [], []>} : vector<2x32xf32>, vector<32x128xf32>, vector<2x128xf32> -> vector<2x128xf32>
    %533 = arith.addf %531, %532 : vector<2x128xf32>
    %534 = arith.addf %533, %327 : vector<2x128xf32>
    %535 = arith.negf %534 : vector<2x128xf32>
    %536 = math.exp %535 : vector<2x128xf32>
    %cst_97 = arith.constant 1.000000e+00 : f32
    %537 = vector.broadcast %cst_97 : f32 to vector<2x128xf32>
    %538 = arith.addf %537, %536 : vector<2x128xf32>
    %539 = arith.divf %537, %538 : vector<2x128xf32>
    %540 = math.tanh %534 : vector<2x128xf32>
    %541 = vector.extract_strided_slice %539 {offsets = [0, 0], sizes = [2, 32], strides = [1, 1]} : vector<2x128xf32> to vector<2x32xf32>
    %542 = vector.extract_strided_slice %539 {offsets = [0, 32], sizes = [2, 32], strides = [1, 1]} : vector<2x128xf32> to vector<2x32xf32>
    %543 = vector.extract_strided_slice %540 {offsets = [0, 64], sizes = [2, 32], strides = [1, 1]} : vector<2x128xf32> to vector<2x32xf32>
    %544 = vector.extract_strided_slice %539 {offsets = [0, 96], sizes = [2, 32], strides = [1, 1]} : vector<2x128xf32> to vector<2x32xf32>
    %545 = arith.mulf %542, %510 : vector<2x32xf32>
    %546 = arith.mulf %541, %543 : vector<2x32xf32>
    %547 = arith.addf %545, %546 : vector<2x32xf32>
    %548 = math.tanh %547 : vector<2x32xf32>
    %549 = arith.mulf %544, %548 : vector<2x32xf32>
    %550 = vector.extract_strided_slice %15 {offsets = [12, 0], sizes = [2, 128], strides = [1, 1]} : vector<14x128xf32> to vector<2x128xf32>
    %cst_98 = arith.constant dense<0.000000e+00> : vector<2x128xf32>
    %551 = tpu.matmul %530, %322, %cst_98 {dimension_numbers = #tpu.dot_dimension_numbers<[1], [0], [0], [1], [0, 0, 1, 1], [], []>} : vector<2x32xf32>, vector<32x128xf32>, vector<2x128xf32> -> vector<2x128xf32>
    %552 = arith.addf %550, %551 : vector<2x128xf32>
    %553 = arith.negf %552 : vector<2x128xf32>
    %554 = math.exp %553 : vector<2x128xf32>
    %cst_99 = arith.constant 1.000000e+00 : f32
    %555 = vector.broadcast %cst_99 : f32 to vector<2x128xf32>
    %556 = arith.addf %555, %554 : vector<2x128xf32>
    %557 = arith.divf %555, %556 : vector<2x128xf32>
    %558 = math.tanh %552 : vector<2x128xf32>
    %559 = vector.extract_strided_slice %557 {offsets = [0, 0], sizes = [2, 32], strides = [1, 1]} : vector<2x128xf32> to vector<2x32xf32>
    %560 = vector.extract_strided_slice %557 {offsets = [0, 32], sizes = [2, 32], strides = [1, 1]} : vector<2x128xf32> to vector<2x32xf32>
    %561 = vector.extract_strided_slice %558 {offsets = [0, 64], sizes = [2, 32], strides = [1, 1]} : vector<2x128xf32> to vector<2x32xf32>
    %562 = vector.extract_strided_slice %557 {offsets = [0, 96], sizes = [2, 32], strides = [1, 1]} : vector<2x128xf32> to vector<2x32xf32>
    %563 = arith.mulf %560, %528 : vector<2x32xf32>
    %564 = arith.mulf %559, %561 : vector<2x32xf32>
    %565 = arith.addf %563, %564 : vector<2x32xf32>
    %566 = math.tanh %565 : vector<2x32xf32>
    %567 = arith.mulf %562, %566 : vector<2x32xf32>
    %cst_100 = arith.constant dense<0.000000e+00> : vector<2x128xf32>
    %568 = tpu.matmul %567, %323, %cst_100 {dimension_numbers = #tpu.dot_dimension_numbers<[1], [0], [0], [1], [0, 0, 1, 1], [], []>} : vector<2x32xf32>, vector<32x128xf32>, vector<2x128xf32> -> vector<2x128xf32>
    %cst_101 = arith.constant dense<0.000000e+00> : vector<2x128xf32>
    %569 = tpu.matmul %549, %324, %cst_101 {dimension_numbers = #tpu.dot_dimension_numbers<[1], [0], [0], [1], [0, 0, 1, 1], [], []>} : vector<2x32xf32>, vector<32x128xf32>, vector<2x128xf32> -> vector<2x128xf32>
    %570 = arith.addf %568, %569 : vector<2x128xf32>
    %571 = arith.addf %570, %327 : vector<2x128xf32>
    %572 = arith.negf %571 : vector<2x128xf32>
    %573 = math.exp %572 : vector<2x128xf32>
    %cst_102 = arith.constant 1.000000e+00 : f32
    %574 = vector.broadcast %cst_102 : f32 to vector<2x128xf32>
    %575 = arith.addf %574, %573 : vector<2x128xf32>
    %576 = arith.divf %574, %575 : vector<2x128xf32>
    %577 = math.tanh %571 : vector<2x128xf32>
    %578 = vector.extract_strided_slice %576 {offsets = [0, 0], sizes = [2, 32], strides = [1, 1]} : vector<2x128xf32> to vector<2x32xf32>
    %579 = vector.extract_strided_slice %576 {offsets = [0, 32], sizes = [2, 32], strides = [1, 1]} : vector<2x128xf32> to vector<2x32xf32>
    %580 = vector.extract_strided_slice %577 {offsets = [0, 64], sizes = [2, 32], strides = [1, 1]} : vector<2x128xf32> to vector<2x32xf32>
    %581 = vector.extract_strided_slice %576 {offsets = [0, 96], sizes = [2, 32], strides = [1, 1]} : vector<2x128xf32> to vector<2x32xf32>
    %582 = arith.mulf %579, %547 : vector<2x32xf32>
    %583 = arith.mulf %578, %580 : vector<2x32xf32>
    %584 = arith.addf %582, %583 : vector<2x32xf32>
    %585 = math.tanh %584 : vector<2x32xf32>
    %586 = arith.mulf %581, %585 : vector<2x32xf32>
    %587 = tpu.concatenate %364, %401, %438, %475, %512, %549, %586 in 0 : vector<2x32xf32>, vector<2x32xf32>, vector<2x32xf32>, vector<2x32xf32>, vector<2x32xf32>, vector<2x32xf32>, vector<2x32xf32> -> vector<14x32xf32>
    %c0_103 = arith.constant 0 : index
    %c0_104 = arith.constant 0 : index
    %588 = vector.load %arg12[%c0_103, %c0_104] : memref<32x128xf32, #tpu.memory_space<vmem>>, vector<32x128xf32>
    %cst_105 = arith.constant dense<0.000000e+00> : vector<14x128xf32>
    %589 = tpu.matmul %587, %588, %cst_105 {dimension_numbers = #tpu.dot_dimension_numbers<[1], [0], [0], [1], [0, 0, 1, 1], [], []>} : vector<14x32xf32>, vector<32x128xf32>, vector<14x128xf32> -> vector<14x128xf32>
    %c0_106 = arith.constant 0 : index
    %c0_107 = arith.constant 0 : index
    %590 = vector.load %arg13[%c0_106, %c0_107] : memref<1x128xf32, #tpu.memory_space<vmem>>, vector<1x128xf32>
    %591 = vector.broadcast %590 : vector<1x128xf32> to vector<14x128xf32>
    %592 = arith.addf %589, %591 : vector<14x128xf32>
    %cst_108 = arith.constant 0.000000e+00 : f32
    %593 = vector.broadcast %cst_108 : f32 to vector<14x128xf32>
    %594 = arith.maximumf %592, %593 : vector<14x128xf32>
    %cst_109 = arith.constant 0.000000e+00 : f32
    %595 = vector.broadcast %cst_109 : f32 to vector<2x128xf32>
    %596 = tpu.concatenate %595, %594 in 0 : vector<2x128xf32>, vector<14x128xf32> -> vector<16x128xf32>
    %c0_110 = arith.constant 0 : index
    %c0_111 = arith.constant 0 : index
    %597 = vector.load %arg14[%c0_110, %c0_111] : memref<16x128xf32, #tpu.memory_space<vmem>>, vector<16x128xf32>
    tpu.vector_store %arg14[%c0_110, %c0_111], %596 {strides = array<i32>} : memref<16x128xf32, #tpu.memory_space<vmem>>, vector<16x128xf32>,
    return
  }
}

</mosaic_0001>

<llo_original>
// kernel: tpu_custom_call.1
$region0: #{tpu_custom_call.1}
  #allocation0 [shape = 'u32[]', space=smem, size = 0x4, offset = 0x4, fixed_abs, tag = 'smem constant byte address 0x4 - core index']
  #allocation1 [shape = 'u32[144,128]{1,0:T(1,128)}', space=vmem, size = 0x12000, scoped, tag = 'internal scratch']
  %s0 = inlined_call_operand.vmem [shape: s32[16,1], index: 0, kind: input, shape index: {}]
  %s1 = inlined_call_operand.vmem [shape: s32[14,1], index: 1, kind: input, shape index: {}]
  %s2 = inlined_call_operand.hbm [shape: f32[128,128], index: 2, kind: input, shape index: {}]
  %s3 = inlined_call_operand.vmem [shape: f32[32,128], index: 3, kind: input, shape index: {}]
  %s4 = inlined_call_operand.hbm [shape: f32[32,128], index: 4, kind: input, shape index: {}]
  %s5 = inlined_call_operand.hbm [shape: f32[32,128], index: 5, kind: input, shape index: {}]
  %s6 = inlined_call_operand.hbm [shape: f32[1,128], index: 6, kind: input, shape index: {}]
  %s7 = inlined_call_operand.hbm [shape: f32[128,128], index: 7, kind: input, shape index: {}]
  %s8 = inlined_call_operand.vmem [shape: f32[32,128], index: 8, kind: input, shape index: {}]
  %s9 = inlined_call_operand.hbm [shape: f32[32,128], index: 9, kind: input, shape index: {}]
  %s10 = inlined_call_operand.hbm [shape: f32[32,128], index: 10, kind: input, shape index: {}]
  %s11 = inlined_call_operand.vmem [shape: f32[1,128], index: 11, kind: input, shape index: {}]
  %s12 = inlined_call_operand.hbm [shape: f32[32,128], index: 12, kind: input, shape index: {}]
  %s13 = inlined_call_operand.vmem [shape: f32[1,128], index: 13, kind: input, shape index: {}]
  %s14 = inlined_call_operand.hbm [shape: f32[16,128], index: 14, kind: output, shape index: {}]
  %s15 = sld [smem:[#allocation0]]
  $region98: #{tpu_custom_call.1} parent=0
    _
  %s17 = ssub.s32 1, %s15
  %s18 = scalar_select 0, %s17, %s15
  $region1: #{tpu_custom_call.1} parent=0
    #allocation2 [shape = 'u8[65536]{0}', space=vmem, size = 0x10000, scoped, tag = 'input window, operand 2, single buffered']
    #allocation3 [shape = 's32[1]{0}', space=sflag, size = 0x4, scoped, tag = 'scoped memory for tpu_custom_call.1']
    #allocation4 [shape = 's32[1]{0}', space=sflag, size = 0x4, scoped, tag = 'scoped memory for tpu_custom_call.1']
    #allocation5 [shape = 'u8[16384]{0}', space=vmem, size = 0x4000, scoped, tag = 'input window, operand 4, single buffered']
    #allocation6 [shape = 's32[1]{0}', space=sflag, size = 0x4, scoped, tag = 'scoped memory for tpu_custom_call.1']
    #allocation7 [shape = 'u8[16384]{0}', space=vmem, size = 0x4000, scoped, tag = 'input window, operand 5, single buffered']
    #allocation8 [shape = 'u8[512]{0}', space=vmem, size = 0x400, scoped, tag = 'input window, operand 6, single buffered']
    #allocation9 [shape = 's32[1]{0}', space=sflag, size = 0x4, scoped, tag = 'scoped memory for tpu_custom_call.1']
    #allocation10 [shape = 'u8[65536]{0}', space=vmem, size = 0x10000, scoped, tag = 'input window, operand 7, single buffered']
    #allocation11 [shape = 'u8[16384]{0}', space=vmem, size = 0x4000, scoped, tag = 'input window, operand 9, single buffered']
    #allocation12 [shape = 's32[1]{0}', space=sflag, size = 0x4, scoped, tag = 'scoped memory for tpu_custom_call.1']
    #allocation13 [shape = 'u8[16384]{0}', space=vmem, size = 0x4000, scoped, tag = 'input window, operand 10, single buffered']
    #allocation14 [shape = 'u8[16384]{0}', space=vmem, size = 0x4000, scoped, tag = 'input window, operand 12, single buffered']
    #allocation15 [shape = 's32[1]{0}', space=sflag, size = 0x4, scoped, tag = 'scoped memory for tpu_custom_call.1']
    #allocation16 [shape = 'u8[8192]{0}', space=vmem, size = 0x2000, scoped, tag = 'output window, operand 0, single buffered']
    %19 = vsyncpa [#allocation3], 0
    %20 = vsyncpa [#allocation6], 0
    %21 = vsyncpa [#allocation9], 0
    %22 = vsyncpa [#allocation12], 0
    %23 = vsyncpa [#allocation15], 0
    %24 = vsyncpa [#allocation4], 0
    // Predicated region
    $region2: #{tpu_custom_call.1} parent=1 // pred_check
      _
    $region3: #{tpu_custom_call.1} parent=1 // pred_check_branch
      %26 = sbr.rel (0) target = $region5
    $region4: #{tpu_custom_call.1} parent=1 // pred_region
      _
    $region5: #{tpu_custom_call.1} parent=1 // pred_fallthru
      _
    // Predicated region
    $region6: #{tpu_custom_call.1} parent=1 // pred_check
      _
    $region7: #{tpu_custom_call.1} parent=1 // pred_check_branch
      %28 = sbr.rel (0) target = $region9
    $region8: #{tpu_custom_call.1} parent=1 // pred_region
      _
    $region9: #{tpu_custom_call.1} parent=1 // pred_fallthru
      _
    // Predicated region
    $region10: #{tpu_custom_call.1} parent=1 // pred_check
      _
    $region11: #{tpu_custom_call.1} parent=1 // pred_check_branch
      %30 = sbr.rel (0) target = $region13
    $region12: #{tpu_custom_call.1} parent=1 // pred_region
      %s32 = ssub.s32 2048, 2048
      %33 = vsyncadd [#allocation3], %s32
      %s34 = sshll.u32 [#allocation2], 4
      %s35 = int_to_ptr.vmem [resolvable:$true] %s34
      %40 = dma.hbm_to_vmem [thread:$0]  %s2, 2048, %s35, [#allocation3], 128, 128, 8
    $region13: #{tpu_custom_call.1} parent=1 // pred_fallthru
      _
    // Predicated region
    $region14: #{tpu_custom_call.1} parent=1 // pred_check
      _
    $region15: #{tpu_custom_call.1} parent=1 // pred_check_branch
      %42 = sbr.rel (0) target = $region17
    $region16: #{tpu_custom_call.1} parent=1 // pred_region
      _
    $region17: #{tpu_custom_call.1} parent=1 // pred_fallthru
      _
    // Predicated region
    $region18: #{tpu_custom_call.1} parent=1 // pred_check
      _
    $region19: #{tpu_custom_call.1} parent=1 // pred_check_branch
      %44 = sbr.rel (0) target = $region21
    $region20: #{tpu_custom_call.1} parent=1 // pred_region
      %s46 = ssub.s32 512, 512
      %47 = vsyncadd [#allocation6], %s46
      %s48 = sshll.u32 [#allocation5], 4
      %s49 = int_to_ptr.vmem [resolvable:$true] %s48
      %54 = dma.hbm_to_vmem [thread:$0]  %s4, 512, %s49, [#allocation6], 128, 128, 8
    $region21: #{tpu_custom_call.1} parent=1 // pred_fallthru
      _
    // Predicated region
    $region22: #{tpu_custom_call.1} parent=1 // pred_check
      _
    $region23: #{tpu_custom_call.1} parent=1 // pred_check_branch
      %56 = sbr.rel (0) target = $region25
    $region24: #{tpu_custom_call.1} parent=1 // pred_region
      %s58 = ssub.s32 512, 512
      %59 = vsyncadd [#allocation6], %s58
      %s60 = sshll.u32 [#allocation7], 4
      %s61 = int_to_ptr.vmem [resolvable:$true] %s60
      %66 = dma.hbm_to_vmem [thread:$0]  %s5, 512, %s61, [#allocation6], 128, 128, 8
    $region25: #{tpu_custom_call.1} parent=1 // pred_fallthru
      _
    // Predicated region
    $region26: #{tpu_custom_call.1} parent=1 // pred_check
      _
    $region27: #{tpu_custom_call.1} parent=1 // pred_check_branch
      %68 = sbr.rel (0) target = $region29
    $region28: #{tpu_custom_call.1} parent=1 // pred_region
      %s70 = ssub.s32 16, 16
      %71 = vsyncadd [#allocation9], %s70
      %s73 = sshll.u32 [#allocation8], 4
      %s74 = int_to_ptr.vmem [resolvable:$true] %s73
      %76 = dma.hbm_to_vmem [thread:$0]  %s6, 16, %s74, [#allocation9]
    $region29: #{tpu_custom_call.1} parent=1 // pred_fallthru
      _
    // Predicated region
    $region30: #{tpu_custom_call.1} parent=1 // pred_check
      _
    $region31: #{tpu_custom_call.1} parent=1 // pred_check_branch
      %78 = sbr.rel (0) target = $region33
    $region32: #{tpu_custom_call.1} parent=1 // pred_region
      %s80 = ssub.s32 2048, 2048
      %81 = vsyncadd [#allocation9], %s80
      %s82 = sshll.u32 [#allocation10], 4
      %s83 = int_to_ptr.vmem [resolvable:$true] %s82
      %88 = dma.hbm_to_vmem [thread:$0]  %s7, 2048, %s83, [#allocation9], 128, 128, 8
    $region33: #{tpu_custom_call.1} parent=1 // pred_fallthru
      _
    // Predicated region
    $region34: #{tpu_custom_call.1} parent=1 // pred_check
      _
    $region35: #{tpu_custom_call.1} parent=1 // pred_check_branch
      %90 = sbr.rel (0) target = $region37
    $region36: #{tpu_custom_call.1} parent=1 // pred_region
      _
    $region37: #{tpu_custom_call.1} parent=1 // pred_fallthru
      _
    // Predicated region
    $region38: #{tpu_custom_call.1} parent=1 // pred_check
      _
    $region39: #{tpu_custom_call.1} parent=1 // pred_check_branch
      %92 = sbr.rel (0) target = $region41
    $region40: #{tpu_custom_call.1} parent=1 // pred_region
      %s94 = ssub.s32 512, 512
      %95 = vsyncadd [#allocation12], %s94
      %s96 = sshll.u32 [#allocation11], 4
      %s97 = int_to_ptr.vmem [resolvable:$true] %s96
      %102 = dma.hbm_to_vmem [thread:$0]  %s9, 512, %s97, [#allocation12], 128, 128, 8
    $region41: #{tpu_custom_call.1} parent=1 // pred_fallthru
      _
    // Predicated region
    $region42: #{tpu_custom_call.1} parent=1 // pred_check
      _
    $region43: #{tpu_custom_call.1} parent=1 // pred_check_branch
      %104 = sbr.rel (0) target = $region45
    $region44: #{tpu_custom_call.1} parent=1 // pred_region
      %s106 = ssub.s32 512, 512
      %107 = vsyncadd [#allocation12], %s106
      %s108 = sshll.u32 [#allocation13], 4
      %s109 = int_to_ptr.vmem [resolvable:$true] %s108
      %114 = dma.hbm_to_vmem [thread:$0]  %s10, 512, %s109, [#allocation12], 128, 128, 8
    $region45: #{tpu_custom_call.1} parent=1 // pred_fallthru
      _
    // Predicated region
    $region46: #{tpu_custom_call.1} parent=1 // pred_check
      _
    $region47: #{tpu_custom_call.1} parent=1 // pred_check_branch
      %116 = sbr.rel (0) target = $region49
    $region48: #{tpu_custom_call.1} parent=1 // pred_region
      _
    $region49: #{tpu_custom_call.1} parent=1 // pred_fallthru
      _
    // Predicated region
    $region50: #{tpu_custom_call.1} parent=1 // pred_check
      _
    $region51: #{tpu_custom_call.1} parent=1 // pred_check_branch
      %118 = sbr.rel (0) target = $region53
    $region52: #{tpu_custom_call.1} parent=1 // pred_region
      %s120 = ssub.s32 512, 512
      %121 = vsyncadd [#allocation15], %s120
      %s122 = sshll.u32 [#allocation14], 4
      %s123 = int_to_ptr.vmem [resolvable:$true] %s122
      %128 = dma.hbm_to_vmem [thread:$0]  %s12, 512, %s123, [#allocation15], 128, 128, 8
    $region53: #{tpu_custom_call.1} parent=1 // pred_fallthru
      _
    // Predicated region
    $region54: #{tpu_custom_call.1} parent=1 // pred_check
      _
    $region55: #{tpu_custom_call.1} parent=1 // pred_check_branch
      %130 = sbr.rel (0) target = $region57
    $region56: #{tpu_custom_call.1} parent=1 // pred_region
      _
    $region57: #{tpu_custom_call.1} parent=1 // pred_fallthru
      _
    // Predicated region
    $region58: #{tpu_custom_call.1} parent=1 // pred_check
      _
    $region59: #{tpu_custom_call.1} parent=1 // pred_check_branch
      %132 = sbr.rel (0) target = $region61
    $region60: #{tpu_custom_call.1} parent=1 // pred_region
      %133 = dma.done [#allocation3], 2048
    $region61: #{tpu_custom_call.1} parent=1 // pred_fallthru
      _
    // Predicated region
    $region62: #{tpu_custom_call.1} parent=1 // pred_check
      _
    $region63: #{tpu_custom_call.1} parent=1 // pred_check_branch
      %135 = sbr.rel (0) target = $region65
    $region64: #{tpu_custom_call.1} parent=1 // pred_region
      %136 = dma.done [#allocation6], 512
    $region65: #{tpu_custom_call.1} parent=1 // pred_fallthru
      _
    // Predicated region
    $region66: #{tpu_custom_call.1} parent=1 // pred_check
      _
    $region67: #{tpu_custom_call.1} parent=1 // pred_check_branch
      %138 = sbr.rel (0) target = $region69
    $region68: #{tpu_custom_call.1} parent=1 // pred_region
      %139 = dma.done [#allocation6], 512
    $region69: #{tpu_custom_call.1} parent=1 // pred_fallthru
      _
    // Predicated region
    $region70: #{tpu_custom_call.1} parent=1 // pred_check
      _
    $region71: #{tpu_custom_call.1} parent=1 // pred_check_branch
      %141 = sbr.rel (0) target = $region73
    $region72: #{tpu_custom_call.1} parent=1 // pred_region
      %142 = dma.done [#allocation9], 16
    $region73: #{tpu_custom_call.1} parent=1 // pred_fallthru
      _
    // Predicated region
    $region74: #{tpu_custom_call.1} parent=1 // pred_check
      _
    $region75: #{tpu_custom_call.1} parent=1 // pred_check_branch
      %144 = sbr.rel (0) target = $region77
    $region76: #{tpu_custom_call.1} parent=1 // pred_region
      %145 = dma.done [#allocation9], 2048
    $region77: #{tpu_custom_call.1} parent=1 // pred_fallthru
      _
    // Predicated region
    $region78: #{tpu_custom_call.1} parent=1 // pred_check
      _
    $region79: #{tpu_custom_call.1} parent=1 // pred_check_branch
      %147 = sbr.rel (0) target = $region81
    $region80: #{tpu_custom_call.1} parent=1 // pred_region
      %148 = dma.done [#allocation12], 512
    $region81: #{tpu_custom_call.1} parent=1 // pred_fallthru
      _
    // Predicated region
    $region82: #{tpu_custom_call.1} parent=1 // pred_check
      _
    $region83: #{tpu_custom_call.1} parent=1 // pred_check_branch
      %150 = sbr.rel (0) target = $region85
    $region84: #{tpu_custom_call.1} parent=1 // pred_region
      %151 = dma.done [#allocation12], 512
    $region85: #{tpu_custom_call.1} parent=1 // pred_fallthru
      _
    // Predicated region
    $region86: #{tpu_custom_call.1} parent=1 // pred_check
      _
    $region87: #{tpu_custom_call.1} parent=1 // pred_check_branch
      %153 = sbr.rel (0) target = $region89
    $region88: #{tpu_custom_call.1} parent=1 // pred_region
      %154 = dma.done [#allocation15], 512
    $region89: #{tpu_custom_call.1} parent=1 // pred_fallthru
      _
    %v155 = vld [vmem:[%s0] sm:$0xff]
    %v156 = vld [vmem:[%s0 + $0x8] sm:$0xff]
    %v157 = vlaneseq
    %v158 = vand.u32 %v157, 127
    %159 = vset.pattern.permute.xlu0 0
    %160 = vperm.xlu0 %159, %v155
    %v161 = vpop.permute.xlu0 %160
    %162 = vset.pattern.permute.xlu0 0
    %163 = vperm.xlu0 %162, %v156
    %v164 = vpop.permute.xlu0 %163
    %vm165 = vcmp.eq.s32.totalorder %v161, %v158
    %vm166 = vcmp.eq.s32.totalorder %v164, %v158
    %v167 = vsel %vm165, 1, 0
    %v168 = vsel %vm166, 1, 0
    %v169 = vcvt.s32.f32 %v167
    %v170 = vcvt.s32.f32 %v168
    %v171 = vld [vmem:[#allocation2] sm:$0xff]
    %v172 = vld [vmem:[#allocation2 + $0x8] sm:$0xff]
    %v173 = vld [vmem:[#allocation2 + $0x10] sm:$0xff]
    %v174 = vld [vmem:[#allocation2 + $0x18] sm:$0xff]
    %v175 = vld [vmem:[#allocation2 + $0x20] sm:$0xff]
    %v176 = vld [vmem:[#allocation2 + $0x28] sm:$0xff]
    %v177 = vld [vmem:[#allocation2 + $0x30] sm:$0xff]
    %v178 = vld [vmem:[#allocation2 + $0x38] sm:$0xff]
    %v179 = vld [vmem:[#allocation2 + $0x40] sm:$0xff]
    %v180 = vld [vmem:[#allocation2 + $0x48] sm:$0xff]
    %v181 = vld [vmem:[#allocation2 + $0x50] sm:$0xff]
    %v182 = vld [vmem:[#allocation2 + $0x58] sm:$0xff]
    %v183 = vld [vmem:[#allocation2 + $0x60] sm:$0xff]
    %v184 = vld [vmem:[#allocation2 + $0x68] sm:$0xff]
    %v185 = vld [vmem:[#allocation2 + $0x70] sm:$0xff]
    %v186 = vld [vmem:[#allocation2 + $0x78] sm:$0xff]
    %187 = vmatprep.subr.mxu0 0.0
    %188 = vmatpush1.msra.mxu0 %v171
    %189 = vmatprep.subr.mxu0 0.0
    %190 = vmatpush1.msra.mxu0 %v172
    %191 = vmatprep.subr.mxu0 0.0
    %192 = vmatpush1.msra.mxu0 %v173
    %193 = vmatprep.subr.mxu0 0.0
    %194 = vmatpush1.msra.mxu0 %v174
    %195 = vmatprep.subr.mxu0 0.0
    %196 = vmatpush1.msra.mxu0 %v175
    %197 = vmatprep.subr.mxu0 0.0
    %198 = vmatpush1.msra.mxu0 %v176
    %199 = vmatprep.subr.mxu0 0.0
    %200 = vmatpush1.msra.mxu0 %v177
    %201 = vmatprep.subr.mxu0 0.0
    %202 = vmatpush1.msra.mxu0 %v178
    %203 = vmatprep.subr.mxu0 0.0
    %204 = vmatpush1.msra.mxu0 %v179
    %205 = vmatprep.subr.mxu0 0.0
    %206 = vmatpush1.msra.mxu0 %v180
    %207 = vmatprep.subr.mxu0 0.0
    %208 = vmatpush1.msra.mxu0 %v181
    %209 = vmatprep.subr.mxu0 0.0
    %210 = vmatpush1.msra.mxu0 %v182
    %211 = vmatprep.subr.mxu0 0.0
    %212 = vmatpush1.msra.mxu0 %v183
    %213 = vmatprep.subr.mxu0 0.0
    %214 = vmatpush1.msra.mxu0 %v184
    %215 = vmatprep.subr.mxu0 0.0
    %216 = vmatpush1.msra.mxu0 %v185
    %217 = vmatprep.subr.mxu0 0.0
    %218 = vmatpush1.msra.mxu0 %v186
    %219 = vmatprep.subr.mxu0 0.0
    %220 = vmatpush1.msra.mxu0 0.0
    %221 = vmatprep.subr.mxu0 0.0
    %222 = vmatpush1.msra.mxu0 0.0
    %223 = vmatprep.subr.mxu0 0.0
    %224 = vmatpush1.msra.mxu0 0.0
    %225 = vmatprep.subr.mxu0 0.0
    %226 = vmatpush1.msra.mxu0 0.0
    %227 = vmatprep.subr.mxu0 0.0
    %228 = vmatpush1.msra.mxu0 0.0
    %229 = vmatprep.subr.mxu0 0.0
    %230 = vmatpush1.msra.mxu0 0.0
    %231 = vmatprep.subr.mxu0 0.0
    %232 = vmatpush1.msra.mxu0 0.0
    %233 = vmatprep.subr.mxu0 0.0
    %234 = vmatpush1.msra.mxu0 0.0
    %235 = vmatprep.subr.mxu0 0.0
    %236 = vmatpush1.msra.mxu0 0.0
    %237 = vmatprep.subr.mxu0 0.0
    %238 = vmatpush1.msra.mxu0 0.0
    %239 = vmatprep.subr.mxu0 0.0
    %240 = vmatpush1.msra.mxu0 0.0
    %241 = vmatprep.subr.mxu0 0.0
    %242 = vmatpush1.msra.mxu0 0.0
    %243 = vmatprep.subr.mxu0 0.0
    %244 = vmatpush1.msra.mxu0 0.0
    %245 = vmatprep.subr.mxu0 0.0
    %246 = vmatpush1.msra.mxu0 0.0
    %247 = vmatprep.subr.mxu0 0.0
    %248 = vmatpush1.msra.mxu0 0.0
    %249 = vmatprep.subr.mxu0 0.0
    %250 = vmatpush1.msra.mxu0 0.0
    %251 = vmatprep.mubr.f32.mxu0 0.0
    %252 = vmatmul.mubr.f32.gmra.mrb[0].mxu0 %v169
    %v253 = vpop.f32.mrb[0].mxu0
    %v254 = vadd.f32 0.0, %v253
    %v255 = vpop.f32.mrb[0].mxu0
    %256 = vmatprep.mubr.f32.mxu0 0.0
    %257 = vmatmul.mubr.f32.gmra.mrb[0].mxu0 %v170
    %v258 = vpop.f32.mrb[0].mxu0
    %v259 = vadd.f32 0.0, %v258
    %v260 = vpop.f32.mrb[0].mxu0
    %261 = vdwg.mxu0
    %v262 = vld [vmem:[%s1] sm:$0xff]
    %v263 = vld [vmem:[%s1 + $0x8] sm:$0x3f]
    %264 = vset.pattern.permute.xlu0 0
    %265 = vperm.xlu0 %264, %v262
    %v266 = vpop.permute.xlu0 %265
    %267 = vset.pattern.permute.xlu0 0
    %268 = vperm.xlu0 %267, %v263
    %v269 = vpop.permute.xlu0 %268
    %vm270 = vcmp.eq.s32.totalorder %v266, %v158
    %vm271 = vcmp.eq.s32.totalorder %v269, %v158
    %v272 = vsel %vm270, 1, 0
    %v273 = vsel %vm271, 1, 0
    %v274 = vcvt.s32.f32 %v272
    %v275 = vcvt.s32.f32 %v273
    %v276 = vld [vmem:[#allocation10] sm:$0xff]
    %v277 = vld [vmem:[#allocation10 + $0x8] sm:$0xff]
    %v278 = vld [vmem:[#allocation10 + $0x10] sm:$0xff]
    %v279 = vld [vmem:[#allocation10 + $0x18] sm:$0xff]
    %v280 = vld [vmem:[#allocation10 + $0x20] sm:$0xff]
    %v281 = vld [vmem:[#allocation10 + $0x28] sm:$0xff]
    %v282 = vld [vmem:[#allocation10 + $0x30] sm:$0xff]
    %v283 = vld [vmem:[#allocation10 + $0x38] sm:$0xff]
    %v284 = vld [vmem:[#allocation10 + $0x40] sm:$0xff]
    %v285 = vld [vmem:[#allocation10 + $0x48] sm:$0xff]
    %v286 = vld [vmem:[#allocation10 + $0x50] sm:$0xff]
    %v287 = vld [vmem:[#allocation10 + $0x58] sm:$0xff]
    %v288 = vld [vmem:[#allocation10 + $0x60] sm:$0xff]
    %v289 = vld [vmem:[#allocation10 + $0x68] sm:$0xff]
    %v290 = vld [vmem:[#allocation10 + $0x70] sm:$0xff]
    %v291 = vld [vmem:[#allocation10 + $0x78] sm:$0xff]
    %292 = vmatprep.subr.mxu0 0.0
    %293 = vmatpush1.msra.mxu0 %v276
    %294 = vmatprep.subr.mxu0 0.0
    %295 = vmatpush1.msra.mxu0 %v277
    %296 = vmatprep.subr.mxu0 0.0
    %297 = vmatpush1.msra.mxu0 %v278
    %298 = vmatprep.subr.mxu0 0.0
    %299 = vmatpush1.msra.mxu0 %v279
    %300 = vmatprep.subr.mxu0 0.0
    %301 = vmatpush1.msra.mxu0 %v280
    %302 = vmatprep.subr.mxu0 0.0
    %303 = vmatpush1.msra.mxu0 %v281
    %304 = vmatprep.subr.mxu0 0.0
    %305 = vmatpush1.msra.mxu0 %v282
    %306 = vmatprep.subr.mxu0 0.0
    %307 = vmatpush1.msra.mxu0 %v283
    %308 = vmatprep.subr.mxu0 0.0
    %309 = vmatpush1.msra.mxu0 %v284
    %310 = vmatprep.subr.mxu0 0.0
    %311 = vmatpush1.msra.mxu0 %v285
    %312 = vmatprep.subr.mxu0 0.0
    %313 = vmatpush1.msra.mxu0 %v286
    %314 = vmatprep.subr.mxu0 0.0
    %315 = vmatpush1.msra.mxu0 %v287
    %316 = vmatprep.subr.mxu0 0.0
    %317 = vmatpush1.msra.mxu0 %v288
    %318 = vmatprep.subr.mxu0 0.0
    %319 = vmatpush1.msra.mxu0 %v289
    %320 = vmatprep.subr.mxu0 0.0
    %321 = vmatpush1.msra.mxu0 %v290
    %322 = vmatprep.subr.mxu0 0.0
    %323 = vmatpush1.msra.mxu0 %v291
    %324 = vmatprep.subr.mxu0 0.0
    %325 = vmatpush1.msra.mxu0 0.0
    %326 = vmatprep.subr.mxu0 0.0
    %327 = vmatpush1.msra.mxu0 0.0
    %328 = vmatprep.subr.mxu0 0.0
    %329 = vmatpush1.msra.mxu0 0.0
    %330 = vmatprep.subr.mxu0 0.0
    %331 = vmatpush1.msra.mxu0 0.0
    %332 = vmatprep.subr.mxu0 0.0
    %333 = vmatpush1.msra.mxu0 0.0
    %334 = vmatprep.subr.mxu0 0.0
    %335 = vmatpush1.msra.mxu0 0.0
    %336 = vmatprep.subr.mxu0 0.0
    %337 = vmatpush1.msra.mxu0 0.0
    %338 = vmatprep.subr.mxu0 0.0
    %339 = vmatpush1.msra.mxu0 0.0
    %340 = vmatprep.subr.mxu0 0.0
    %341 = vmatpush1.msra.mxu0 0.0
    %342 = vmatprep.subr.mxu0 0.0
    %343 = vmatpush1.msra.mxu0 0.0
    %344 = vmatprep.subr.mxu0 0.0
    %345 = vmatpush1.msra.mxu0 0.0
    %346 = vmatprep.subr.mxu0 0.0
    %347 = vmatpush1.msra.mxu0 0.0
    %348 = vmatprep.subr.mxu0 0.0
    %349 = vmatpush1.msra.mxu0 0.0
    %350 = vmatprep.subr.mxu0 0.0
    %351 = vmatpush1.msra.mxu0 0.0
    %352 = vmatprep.subr.mxu0 0.0
    %353 = vmatpush1.msra.mxu0 0.0
    %354 = vmatprep.subr.mxu0 0.0
    %355 = vmatpush1.msra.mxu0 0.0
    %356 = vmatprep.mubr.f32.mxu0 0.0
    %357 = vmatmul.mubr.f32.gmra.mrb[0].mxu0 %v274
    %v358 = vpop.f32.mrb[0].mxu0
    %v359 = vadd.f32 0.0, %v358
    %v360 = vpop.f32.mrb[0].mxu0
    %361 = vmatprep.mubr.f32.mxu0 0.0
    %362 = vmatmul.mubr.f32.gmra.mrb[0].mxu0 %v275
    %v363 = vpop.f32.mrb[0].mxu0
    %v364 = vadd.f32 0.0, %v363
    %v365 = vpop.f32.mrb[0].mxu0
    %366 = vdwg.mxu0
    %v367 = vld [vmem:[%s3] sm:$0xff]
    %v368 = vld [vmem:[%s3 + $0x8] sm:$0xff]
    %v369 = vld [vmem:[%s3 + $0x10] sm:$0xff]
    %v370 = vld [vmem:[%s3 + $0x18] sm:$0xff]
    %v371 = vld [vmem:[#allocation5] sm:$0xff]
    %v372 = vld [vmem:[#allocation5 + $0x8] sm:$0xff]
    %v373 = vld [vmem:[#allocation5 + $0x10] sm:$0xff]
    %v374 = vld [vmem:[#allocation5 + $0x18] sm:$0xff]
    %v375 = vld [vmem:[#allocation7] sm:$0xff]
    %v376 = vld [vmem:[#allocation7 + $0x8] sm:$0xff]
    %v377 = vld [vmem:[#allocation7 + $0x10] sm:$0xff]
    %v378 = vld [vmem:[#allocation7 + $0x18] sm:$0xff]
    %v379 = vld [vmem:[#allocation8] sm:$0x1]
    %v381 = vlaneseq
    %v382 = vshrl.u32 %v381, 7
    %v383 = vsub.s32 0, %v382
    %v384 = vrot.slane %v379, %v383
    %vm386 = vcmask 261120
    %v388 = vsel %vm386, 0.0, 0
    %390 = vmatprep.subr.mxu0 0.0
    %391 = vmatpush1.msra.mxu0 %v367
    %392 = vmatprep.subr.mxu0 0.0
    %393 = vmatpush1.msra.mxu0 %v368
    %394 = vmatprep.subr.mxu0 0.0
    %395 = vmatpush1.msra.mxu0 %v369
    %396 = vmatprep.subr.mxu0 0.0
    %397 = vmatpush1.msra.mxu0 %v370
    %398 = vmatprep.subr.mxu0 0.0
    %399 = vmatpush1.msra.mxu0 0.0
    %400 = vmatprep.subr.mxu0 0.0
    %401 = vmatpush1.msra.mxu0 0.0
    %402 = vmatprep.subr.mxu0 0.0
    %403 = vmatpush1.msra.mxu0 0.0
    %404 = vmatprep.subr.mxu0 0.0
    %405 = vmatpush1.msra.mxu0 0.0
    %406 = vmatprep.subr.mxu0 0.0
    %407 = vmatpush1.msra.mxu0 0.0
    %408 = vmatprep.subr.mxu0 0.0
    %409 = vmatpush1.msra.mxu0 0.0
    %410 = vmatprep.subr.mxu0 0.0
    %411 = vmatpush1.msra.mxu0 0.0
    %412 = vmatprep.subr.mxu0 0.0
    %413 = vmatpush1.msra.mxu0 0.0
    %414 = vmatprep.subr.mxu0 0.0
    %415 = vmatpush1.msra.mxu0 0.0
    %416 = vmatprep.subr.mxu0 0.0
    %417 = vmatpush1.msra.mxu0 0.0
    %418 = vmatprep.subr.mxu0 0.0
    %419 = vmatpush1.msra.mxu0 0.0
    %420 = vmatprep.subr.mxu0 0.0
    %421 = vmatpush1.msra.mxu0 0.0
    %422 = vmatprep.subr.mxu0 0.0
    %423 = vmatpush1.msra.mxu0 0.0
    %424 = vmatprep.subr.mxu0 0.0
    %425 = vmatpush1.msra.mxu0 0.0
    %426 = vmatprep.subr.mxu0 0.0
    %427 = vmatpush1.msra.mxu0 0.0
    %428 = vmatprep.subr.mxu0 0.0
    %429 = vmatpush1.msra.mxu0 0.0
    %430 = vmatprep.subr.mxu0 0.0
    %431 = vmatpush1.msra.mxu0 0.0
    %432 = vmatprep.subr.mxu0 0.0
    %433 = vmatpush1.msra.mxu0 0.0
    %434 = vmatprep.subr.mxu0 0.0
    %435 = vmatpush1.msra.mxu0 0.0
    %436 = vmatprep.subr.mxu0 0.0
    %437 = vmatpush1.msra.mxu0 0.0
    %438 = vmatprep.subr.mxu0 0.0
    %439 = vmatpush1.msra.mxu0 0.0
    %440 = vmatprep.subr.mxu0 0.0
    %441 = vmatpush1.msra.mxu0 0.0
    %442 = vmatprep.subr.mxu0 0.0
    %443 = vmatpush1.msra.mxu0 0.0
    %444 = vmatprep.subr.mxu0 0.0
    %445 = vmatpush1.msra.mxu0 0.0
    %446 = vmatprep.subr.mxu0 0.0
    %447 = vmatpush1.msra.mxu0 0.0
    %448 = vmatprep.subr.mxu0 0.0
    %449 = vmatpush1.msra.mxu0 0.0
    %450 = vmatprep.subr.mxu0 0.0
    %451 = vmatpush1.msra.mxu0 0.0
    %452 = vmatprep.subr.mxu0 0.0
    %453 = vmatpush1.msra.mxu0 0.0
    %454 = vmatprep.mubr.f32.mxu0 0.0
    %455 = vmatmul.mubr.f32.gmra.mrb[0].mxu0 %v388
    %v456 = vpop.f32.mrb[0].mxu0
    %v457 = vadd.f32 0.0, %v456
    %v458 = vpop.f32.mrb[0].mxu0
    %459 = vdwg.mxu0
    %v460 = vadd.f32 %v254, %v457
    %v461 = vxor.u32 %v460, 2147483648
    %v462 = vmul.f32 %v461, 1.442695
    %v463 = vpow.pop %v462
    %v464 = vadd.f32 %v463, 1.0
    %v465 = vrcp.pop %v464
    %v466 = vmul.f32 1.0, %v465
    %v467 = vtanh.pop %v460
    %v468 = vmul.f32 %v466, 0.0
    %470 = vrot.lane.b32.xlu0 %v467, 64
    %v471 = vpop.permute.xlu0 %470
    %v473 = vmul.f32 %v466, %v471
    %475 = vrot.lane.b32.xlu0 %v473, 32
    %v476 = vpop.permute.xlu0 %475
    %v478 = vadd.f32 %v468, %v476
    %v479 = vtanh.pop %v478
    %481 = vrot.lane.b32.xlu0 %v479, 64
    %v482 = vpop.permute.xlu0 %481
    %v484 = vmul.f32 %v466, %v482
    %485 = vmatprep.subr.mxu0 0.0
    %486 = vmatpush1.msra.mxu0 %v375
    %487 = vmatprep.subr.mxu0 0.0
    %488 = vmatpush1.msra.mxu0 %v376
    %489 = vmatprep.subr.mxu0 0.0
    %490 = vmatpush1.msra.mxu0 %v377
    %491 = vmatprep.subr.mxu0 0.0
    %492 = vmatpush1.msra.mxu0 %v378
    %493 = vmatprep.subr.mxu0 0.0
    %494 = vmatpush1.msra.mxu0 0.0
    %495 = vmatprep.subr.mxu0 0.0
    %496 = vmatpush1.msra.mxu0 0.0
    %497 = vmatprep.subr.mxu0 0.0
    %498 = vmatpush1.msra.mxu0 0.0
    %499 = vmatprep.subr.mxu0 0.0
    %500 = vmatpush1.msra.mxu0 0.0
    %501 = vmatprep.subr.mxu0 0.0
    %502 = vmatpush1.msra.mxu0 0.0
    %503 = vmatprep.subr.mxu0 0.0
    %504 = vmatpush1.msra.mxu0 0.0
    %505 = vmatprep.subr.mxu0 0.0
    %506 = vmatpush1.msra.mxu0 0.0
    %507 = vmatprep.subr.mxu0 0.0
    %508 = vmatpush1.msra.mxu0 0.0
    %509 = vmatprep.subr.mxu0 0.0
    %510 = vmatpush1.msra.mxu0 0.0
    %511 = vmatprep.subr.mxu0 0.0
    %512 = vmatpush1.msra.mxu0 0.0
    %513 = vmatprep.subr.mxu0 0.0
    %514 = vmatpush1.msra.mxu0 0.0
    %515 = vmatprep.subr.mxu0 0.0
    %516 = vmatpush1.msra.mxu0 0.0
    %517 = vmatprep.subr.mxu0 0.0
    %518 = vmatpush1.msra.mxu0 0.0
    %519 = vmatprep.subr.mxu0 0.0
    %520 = vmatpush1.msra.mxu0 0.0
    %521 = vmatprep.subr.mxu0 0.0
    %522 = vmatpush1.msra.mxu0 0.0
    %523 = vmatprep.subr.mxu0 0.0
    %524 = vmatpush1.msra.mxu0 0.0
    %525 = vmatprep.subr.mxu0 0.0
    %526 = vmatpush1.msra.mxu0 0.0
    %527 = vmatprep.subr.mxu0 0.0
    %528 = vmatpush1.msra.mxu0 0.0
    %529 = vmatprep.subr.mxu0 0.0
    %530 = vmatpush1.msra.mxu0 0.0
    %531 = vmatprep.subr.mxu0 0.0
    %532 = vmatpush1.msra.mxu0 0.0
    %533 = vmatprep.subr.mxu0 0.0
    %534 = vmatpush1.msra.mxu0 0.0
    %535 = vmatprep.subr.mxu0 0.0
    %536 = vmatpush1.msra.mxu0 0.0
    %537 = vmatprep.subr.mxu0 0.0
    %538 = vmatpush1.msra.mxu0 0.0
    %539 = vmatprep.subr.mxu0 0.0
    %540 = vmatpush1.msra.mxu0 0.0
    %541 = vmatprep.subr.mxu0 0.0
    %542 = vmatpush1.msra.mxu0 0.0
    %543 = vmatprep.subr.mxu0 0.0
    %544 = vmatpush1.msra.mxu0 0.0
    %545 = vmatprep.subr.mxu0 0.0
    %546 = vmatpush1.msra.mxu0 0.0
    %547 = vmatprep.subr.mxu0 0.0
    %548 = vmatpush1.msra.mxu0 0.0
    %549 = vmatprep.mubr.f32.mxu0 0.0
    %550 = vmatmul.mubr.f32.gmra.mrb[0].mxu0 %v388
    %v551 = vpop.f32.mrb[0].mxu0
    %v552 = vadd.f32 0.0, %v551
    %v553 = vpop.f32.mrb[0].mxu0
    %554 = vdwg.mxu0
    %556 = vrot.lane.b32.xlu0 %v484, 32
    %v557 = vpop.permute.xlu0 %556
    %v558 = vsel %vm386, %v557, 0
    %560 = vmatprep.subr.mxu0 0.0
    %561 = vmatpush1.msra.mxu0 %v371
    %562 = vmatprep.subr.mxu0 0.0
    %563 = vmatpush1.msra.mxu0 %v372
    %564 = vmatprep.subr.mxu0 0.0
    %565 = vmatpush1.msra.mxu0 %v373
    %566 = vmatprep.subr.mxu0 0.0
    %567 = vmatpush1.msra.mxu0 %v374
    %568 = vmatprep.subr.mxu0 0.0
    %569 = vmatpush1.msra.mxu0 0.0
    %570 = vmatprep.subr.mxu0 0.0
    %571 = vmatpush1.msra.mxu0 0.0
    %572 = vmatprep.subr.mxu0 0.0
    %573 = vmatpush1.msra.mxu0 0.0
    %574 = vmatprep.subr.mxu0 0.0
    %575 = vmatpush1.msra.mxu0 0.0
    %576 = vmatprep.subr.mxu0 0.0
    %577 = vmatpush1.msra.mxu0 0.0
    %578 = vmatprep.subr.mxu0 0.0
    %579 = vmatpush1.msra.mxu0 0.0
    %580 = vmatprep.subr.mxu0 0.0
    %581 = vmatpush1.msra.mxu0 0.0
    %582 = vmatprep.subr.mxu0 0.0
    %583 = vmatpush1.msra.mxu0 0.0
    %584 = vmatprep.subr.mxu0 0.0
    %585 = vmatpush1.msra.mxu0 0.0
    %586 = vmatprep.subr.mxu0 0.0
    %587 = vmatpush1.msra.mxu0 0.0
    %588 = vmatprep.subr.mxu0 0.0
    %589 = vmatpush1.msra.mxu0 0.0
    %590 = vmatprep.subr.mxu0 0.0
    %591 = vmatpush1.msra.mxu0 0.0
    %592 = vmatprep.subr.mxu0 0.0
    %593 = vmatpush1.msra.mxu0 0.0
    %594 = vmatprep.subr.mxu0 0.0
    %595 = vmatpush1.msra.mxu0 0.0
    %596 = vmatprep.subr.mxu0 0.0
    %597 = vmatpush1.msra.mxu0 0.0
    %598 = vmatprep.subr.mxu0 0.0
    %599 = vmatpush1.msra.mxu0 0.0
    %600 = vmatprep.subr.mxu0 0.0
    %601 = vmatpush1.msra.mxu0 0.0
    %602 = vmatprep.subr.mxu0 0.0
    %603 = vmatpush1.msra.mxu0 0.0
    %604 = vmatprep.subr.mxu0 0.0
    %605 = vmatpush1.msra.mxu0 0.0
    %606 = vmatprep.subr.mxu0 0.0
    %607 = vmatpush1.msra.mxu0 0.0
    %608 = vmatprep.subr.mxu0 0.0
    %609 = vmatpush1.msra.mxu0 0.0
    %610 = vmatprep.subr.mxu0 0.0
    %611 = vmatpush1.msra.mxu0 0.0
    %612 = vmatprep.subr.mxu0 0.0
    %613 = vmatpush1.msra.mxu0 0.0
    %614 = vmatprep.subr.mxu0 0.0
    %615 = vmatpush1.msra.mxu0 0.0
    %616 = vmatprep.subr.mxu0 0.0
    %617 = vmatpush1.msra.mxu0 0.0
    %618 = vmatprep.subr.mxu0 0.0
    %619 = vmatpush1.msra.mxu0 0.0
    %620 = vmatprep.subr.mxu0 0.0
    %621 = vmatpush1.msra.mxu0 0.0
    %622 = vmatprep.subr.mxu0 0.0
    %623 = vmatpush1.msra.mxu0 0.0
    %624 = vmatprep.mubr.f32.mxu0 0.0
    %625 = vmatmul.mubr.f32.gmra.mrb[0].mxu0 %v558
    %v626 = vpop.f32.mrb[0].mxu0
    %v627 = vadd.f32 %v552, %v626
    %v628 = vpop.f32.mrb[0].mxu0
    %629 = vdwg.mxu0
    %v630 = vadd.f32 %v627, %v384
    %v631 = vxor.u32 %v630, 2147483648
    %v632 = vmul.f32 %v631, 1.442695
    %v633 = vpow.pop %v632
    %v634 = vadd.f32 %v633, 1.0
    %v635 = vrcp.pop %v634
    %v636 = vmul.f32 1.0, %v635
    %v637 = vtanh.pop %v630
    %v638 = vmul.f32 %v636, 0.0
    %640 = vrot.lane.b32.xlu0 %v637, 64
    %v641 = vpop.permute.xlu0 %640
    %v643 = vmul.f32 %v636, %v641
    %645 = vrot.lane.b32.xlu0 %v643, 32
    %v646 = vpop.permute.xlu0 %645
    %v648 = vadd.f32 %v638, %v646
    %v649 = vtanh.pop %v648
    %651 = vrot.lane.b32.xlu0 %v649, 64
    %v652 = vpop.permute.xlu0 %651
    %v654 = vmul.f32 %v636, %v652
    %655 = vmatprep.subr.mxu0 0.0
    %656 = vmatpush1.msra.mxu0 %v367
    %657 = vmatprep.subr.mxu0 0.0
    %658 = vmatpush1.msra.mxu0 %v368
    %659 = vmatprep.subr.mxu0 0.0
    %660 = vmatpush1.msra.mxu0 %v369
    %661 = vmatprep.subr.mxu0 0.0
    %662 = vmatpush1.msra.mxu0 %v370
    %663 = vmatprep.subr.mxu0 0.0
    %664 = vmatpush1.msra.mxu0 0.0
    %665 = vmatprep.subr.mxu0 0.0
    %666 = vmatpush1.msra.mxu0 0.0
    %667 = vmatprep.subr.mxu0 0.0
    %668 = vmatpush1.msra.mxu0 0.0
    %669 = vmatprep.subr.mxu0 0.0
    %670 = vmatpush1.msra.mxu0 0.0
    %671 = vmatprep.subr.mxu0 0.0
    %672 = vmatpush1.msra.mxu0 0.0
    %673 = vmatprep.subr.mxu0 0.0
    %674 = vmatpush1.msra.mxu0 0.0
    %675 = vmatprep.subr.mxu0 0.0
    %676 = vmatpush1.msra.mxu0 0.0
    %677 = vmatprep.subr.mxu0 0.0
    %678 = vmatpush1.msra.mxu0 0.0
    %679 = vmatprep.subr.mxu0 0.0
    %680 = vmatpush1.msra.mxu0 0.0
    %681 = vmatprep.subr.mxu0 0.0
    %682 = vmatpush1.msra.mxu0 0.0
    %683 = vmatprep.subr.mxu0 0.0
    %684 = vmatpush1.msra.mxu0 0.0
    %685 = vmatprep.subr.mxu0 0.0
    %686 = vmatpush1.msra.mxu0 0.0
    %687 = vmatprep.subr.mxu0 0.0
    %688 = vmatpush1.msra.mxu0 0.0
    %689 = vmatprep.subr.mxu0 0.0
    %690 = vmatpush1.msra.mxu0 0.0
    %691 = vmatprep.subr.mxu0 0.0
    %692 = vmatpush1.msra.mxu0 0.0
    %693 = vmatprep.subr.mxu0 0.0
    %694 = vmatpush1.msra.mxu0 0.0
    %695 = vmatprep.subr.mxu0 0.0
    %696 = vmatpush1.msra.mxu0 0.0
    %697 = vmatprep.subr.mxu0 0.0
    %698 = vmatpush1.msra.mxu0 0.0
    %699 = vmatprep.subr.mxu0 0.0
    %700 = vmatpush1.msra.mxu0 0.0
    %701 = vmatprep.subr.mxu0 0.0
    %702 = vmatpush1.msra.mxu0 0.0
    %703 = vmatprep.subr.mxu0 0.0
    %704 = vmatpush1.msra.mxu0 0.0
    %705 = vmatprep.subr.mxu0 0.0
    %706 = vmatpush1.msra.mxu0 0.0
    %707 = vmatprep.subr.mxu0 0.0
    %708 = vmatpush1.msra.mxu0 0.0
    %709 = vmatprep.subr.mxu0 0.0
    %710 = vmatpush1.msra.mxu0 0.0
    %711 = vmatprep.subr.mxu0 0.0
    %712 = vmatpush1.msra.mxu0 0.0
    %713 = vmatprep.subr.mxu0 0.0
    %714 = vmatpush1.msra.mxu0 0.0
    %715 = vmatprep.subr.mxu0 0.0
    %716 = vmatpush1.msra.mxu0 0.0
    %717 = vmatprep.subr.mxu0 0.0
    %718 = vmatpush1.msra.mxu0 0.0
    %719 = vmatprep.mubr.f32.mxu0 0.0
    %720 = vmatmul.mubr.f32.gmra.mrb[0].mxu0 %v558
    %v721 = vpop.f32.mrb[0].mxu0
    %v722 = vadd.f32 0.0, %v721
    %v723 = vpop.f32.mrb[0].mxu0
    %724 = vdwg.mxu0
    %v726 = vrot.slane %v722, 6
    %v728 = vadd.f32 %v254, %v726
    %v729 = vxor.u32 %v728, 2147483648
    %v730 = vmul.f32 %v729, 1.442695
    %v731 = vpow.pop %v730
    %v732 = vadd.f32 %v731, 1.0
    %v733 = vrcp.pop %v732
    %v734 = vmul.f32 1.0, %v733
    %v735 = vtanh.pop %v728
    %v737 = vrot.slane %v478, 6
    %v739 = vmul.f32 %v734, %v737
    %741 = vrot.lane.b32.xlu0 %v735, 64
    %v742 = vpop.permute.xlu0 %741
    %v744 = vmul.f32 %v734, %v742
    %746 = vrot.lane.b32.xlu0 %v744, 32
    %v747 = vpop.permute.xlu0 %746
    %v749 = vadd.f32 %v739, %v747
    %v750 = vtanh.pop %v749
    %752 = vrot.lane.b32.xlu0 %v750, 64
    %v753 = vpop.permute.xlu0 %752
    %v755 = vmul.f32 %v734, %v753
    %757 = vrot.lane.b32.xlu0 %v654, 32
    %v758 = vpop.permute.xlu0 %757
    %v759 = vsel %vm386, %v758, 0
    %761 = vmatprep.subr.mxu0 0.0
    %762 = vmatpush1.msra.mxu0 %v375
    %763 = vmatprep.subr.mxu0 0.0
    %764 = vmatpush1.msra.mxu0 %v376
    %765 = vmatprep.subr.mxu0 0.0
    %766 = vmatpush1.msra.mxu0 %v377
    %767 = vmatprep.subr.mxu0 0.0
    %768 = vmatpush1.msra.mxu0 %v378
    %769 = vmatprep.subr.mxu0 0.0
    %770 = vmatpush1.msra.mxu0 0.0
    %771 = vmatprep.subr.mxu0 0.0
    %772 = vmatpush1.msra.mxu0 0.0
    %773 = vmatprep.subr.mxu0 0.0
    %774 = vmatpush1.msra.mxu0 0.0
    %775 = vmatprep.subr.mxu0 0.0
    %776 = vmatpush1.msra.mxu0 0.0
    %777 = vmatprep.subr.mxu0 0.0
    %778 = vmatpush1.msra.mxu0 0.0
    %779 = vmatprep.subr.mxu0 0.0
    %780 = vmatpush1.msra.mxu0 0.0
    %781 = vmatprep.subr.mxu0 0.0
    %782 = vmatpush1.msra.mxu0 0.0
    %783 = vmatprep.subr.mxu0 0.0
    %784 = vmatpush1.msra.mxu0 0.0
    %785 = vmatprep.subr.mxu0 0.0
    %786 = vmatpush1.msra.mxu0 0.0
    %787 = vmatprep.subr.mxu0 0.0
    %788 = vmatpush1.msra.mxu0 0.0
    %789 = vmatprep.subr.mxu0 0.0
    %790 = vmatpush1.msra.mxu0 0.0
    %791 = vmatprep.subr.mxu0 0.0
    %792 = vmatpush1.msra.mxu0 0.0
    %793 = vmatprep.subr.mxu0 0.0
    %794 = vmatpush1.msra.mxu0 0.0
    %795 = vmatprep.subr.mxu0 0.0
    %796 = vmatpush1.msra.mxu0 0.0
    %797 = vmatprep.subr.mxu0 0.0
    %798 = vmatpush1.msra.mxu0 0.0
    %799 = vmatprep.subr.mxu0 0.0
    %800 = vmatpush1.msra.mxu0 0.0
    %801 = vmatprep.subr.mxu0 0.0
    %802 = vmatpush1.msra.mxu0 0.0
    %803 = vmatprep.subr.mxu0 0.0
    %804 = vmatpush1.msra.mxu0 0.0
    %805 = vmatprep.subr.mxu0 0.0
    %806 = vmatpush1.msra.mxu0 0.0
    %807 = vmatprep.subr.mxu0 0.0
    %808 = vmatpush1.msra.mxu0 0.0
    %809 = vmatprep.subr.mxu0 0.0
    %810 = vmatpush1.msra.mxu0 0.0
    %811 = vmatprep.subr.mxu0 0.0
    %812 = vmatpush1.msra.mxu0 0.0
    %813 = vmatprep.subr.mxu0 0.0
    %814 = vmatpush1.msra.mxu0 0.0
    %815 = vmatprep.subr.mxu0 0.0
    %816 = vmatpush1.msra.mxu0 0.0
    %817 = vmatprep.subr.mxu0 0.0
    %818 = vmatpush1.msra.mxu0 0.0
    %819 = vmatprep.subr.mxu0 0.0
    %820 = vmatpush1.msra.mxu0 0.0
    %821 = vmatprep.subr.mxu0 0.0
    %822 = vmatpush1.msra.mxu0 0.0
    %823 = vmatprep.subr.mxu0 0.0
    %824 = vmatpush1.msra.mxu0 0.0
    %825 = vmatprep.mubr.f32.mxu0 0.0
    %826 = vmatmul.mubr.f32.gmra.mrb[0].mxu0 %v759
    %v827 = vpop.f32.mrb[0].mxu0
    %v828 = vadd.f32 0.0, %v827
    %v829 = vpop.f32.mrb[0].mxu0
    %830 = vdwg.mxu0
    %v832 = vrot.slane %v755, 2
    %833 = vrot.lane.b32.xlu0 %v832, 32
    %v834 = vpop.permute.xlu0 %833
    %v835 = vsel %vm386, %v834, 0
    %837 = vmatprep.subr.mxu0 0.0
    %838 = vmatpush1.msra.mxu0 %v371
    %839 = vmatprep.subr.mxu0 0.0
    %840 = vmatpush1.msra.mxu0 %v372
    %841 = vmatprep.subr.mxu0 0.0
    %842 = vmatpush1.msra.mxu0 %v373
    %843 = vmatprep.subr.mxu0 0.0
    %844 = vmatpush1.msra.mxu0 %v374
    %845 = vmatprep.subr.mxu0 0.0
    %846 = vmatpush1.msra.mxu0 0.0
    %847 = vmatprep.subr.mxu0 0.0
    %848 = vmatpush1.msra.mxu0 0.0
    %849 = vmatprep.subr.mxu0 0.0
    %850 = vmatpush1.msra.mxu0 0.0
    %851 = vmatprep.subr.mxu0 0.0
    %852 = vmatpush1.msra.mxu0 0.0
    %853 = vmatprep.subr.mxu0 0.0
    %854 = vmatpush1.msra.mxu0 0.0
    %855 = vmatprep.subr.mxu0 0.0
    %856 = vmatpush1.msra.mxu0 0.0
    %857 = vmatprep.subr.mxu0 0.0
    %858 = vmatpush1.msra.mxu0 0.0
    %859 = vmatprep.subr.mxu0 0.0
    %860 = vmatpush1.msra.mxu0 0.0
    %861 = vmatprep.subr.mxu0 0.0
    %862 = vmatpush1.msra.mxu0 0.0
    %863 = vmatprep.subr.mxu0 0.0
    %864 = vmatpush1.msra.mxu0 0.0
    %865 = vmatprep.subr.mxu0 0.0
    %866 = vmatpush1.msra.mxu0 0.0
    %867 = vmatprep.subr.mxu0 0.0
    %868 = vmatpush1.msra.mxu0 0.0
    %869 = vmatprep.subr.mxu0 0.0
    %870 = vmatpush1.msra.mxu0 0.0
    %871 = vmatprep.subr.mxu0 0.0
    %872 = vmatpush1.msra.mxu0 0.0
    %873 = vmatprep.subr.mxu0 0.0
    %874 = vmatpush1.msra.mxu0 0.0
    %875 = vmatprep.subr.mxu0 0.0
    %876 = vmatpush1.msra.mxu0 0.0
    %877 = vmatprep.subr.mxu0 0.0
    %878 = vmatpush1.msra.mxu0 0.0
    %879 = vmatprep.subr.mxu0 0.0
    %880 = vmatpush1.msra.mxu0 0.0
    %881 = vmatprep.subr.mxu0 0.0
    %882 = vmatpush1.msra.mxu0 0.0
    %883 = vmatprep.subr.mxu0 0.0
    %884 = vmatpush1.msra.mxu0 0.0
    %885 = vmatprep.subr.mxu0 0.0
    %886 = vmatpush1.msra.mxu0 0.0
    %887 = vmatprep.subr.mxu0 0.0
    %888 = vmatpush1.msra.mxu0 0.0
    %889 = vmatprep.subr.mxu0 0.0
    %890 = vmatpush1.msra.mxu0 0.0
    %891 = vmatprep.subr.mxu0 0.0
    %892 = vmatpush1.msra.mxu0 0.0
    %893 = vmatprep.subr.mxu0 0.0
    %894 = vmatpush1.msra.mxu0 0.0
    %895 = vmatprep.subr.mxu0 0.0
    %896 = vmatpush1.msra.mxu0 0.0
    %897 = vmatprep.subr.mxu0 0.0
    %898 = vmatpush1.msra.mxu0 0.0
    %899 = vmatprep.subr.mxu0 0.0
    %900 = vmatpush1.msra.mxu0 0.0
    %901 = vmatprep.mubr.f32.mxu0 0.0
    %902 = vmatmul.mubr.f32.gmra.mrb[0].mxu0 %v835
    %v903 = vpop.f32.mrb[0].mxu0
    %v904 = vadd.f32 %v828, %v903
    %v905 = vpop.f32.mrb[0].mxu0
    %906 = vdwg.mxu0
    %v907 = vadd.f32 %v904, %v384
    %v908 = vxor.u32 %v907, 2147483648
    %v909 = vmul.f32 %v908, 1.442695
    %v910 = vpow.pop %v909
    %v911 = vadd.f32 %v910, 1.0
    %v912 = vrcp.pop %v911
    %v913 = vmul.f32 1.0, %v912
    %v914 = vtanh.pop %v907
    %v915 = vmul.f32 %v913, %v648
    %917 = vrot.lane.b32.xlu0 %v914, 64
    %v918 = vpop.permute.xlu0 %917
    %v920 = vmul.f32 %v913, %v918
    %922 = vrot.lane.b32.xlu0 %v920, 32
    %v923 = vpop.permute.xlu0 %922
    %v925 = vadd.f32 %v915, %v923
    %v926 = vtanh.pop %v925
    %928 = vrot.lane.b32.xlu0 %v926, 64
    %v929 = vpop.permute.xlu0 %928
    %v931 = vmul.f32 %v913, %v929
    %932 = vmatprep.subr.mxu0 0.0
    %933 = vmatpush1.msra.mxu0 %v367
    %934 = vmatprep.subr.mxu0 0.0
    %935 = vmatpush1.msra.mxu0 %v368
    %936 = vmatprep.subr.mxu0 0.0
    %937 = vmatpush1.msra.mxu0 %v369
    %938 = vmatprep.subr.mxu0 0.0
    %939 = vmatpush1.msra.mxu0 %v370
    %940 = vmatprep.subr.mxu0 0.0
    %941 = vmatpush1.msra.mxu0 0.0
    %942 = vmatprep.subr.mxu0 0.0
    %943 = vmatpush1.msra.mxu0 0.0
    %944 = vmatprep.subr.mxu0 0.0
    %945 = vmatpush1.msra.mxu0 0.0
    %946 = vmatprep.subr.mxu0 0.0
    %947 = vmatpush1.msra.mxu0 0.0
    %948 = vmatprep.subr.mxu0 0.0
    %949 = vmatpush1.msra.mxu0 0.0
    %950 = vmatprep.subr.mxu0 0.0
    %951 = vmatpush1.msra.mxu0 0.0
    %952 = vmatprep.subr.mxu0 0.0
    %953 = vmatpush1.msra.mxu0 0.0
    %954 = vmatprep.subr.mxu0 0.0
    %955 = vmatpush1.msra.mxu0 0.0
    %956 = vmatprep.subr.mxu0 0.0
    %957 = vmatpush1.msra.mxu0 0.0
    %958 = vmatprep.subr.mxu0 0.0
    %959 = vmatpush1.msra.mxu0 0.0
    %960 = vmatprep.subr.mxu0 0.0
    %961 = vmatpush1.msra.mxu0 0.0
    %962 = vmatprep.subr.mxu0 0.0
    %963 = vmatpush1.msra.mxu0 0.0
    %964 = vmatprep.subr.mxu0 0.0
    %965 = vmatpush1.msra.mxu0 0.0
    %966 = vmatprep.subr.mxu0 0.0
    %967 = vmatpush1.msra.mxu0 0.0
    %968 = vmatprep.subr.mxu0 0.0
    %969 = vmatpush1.msra.mxu0 0.0
    %970 = vmatprep.subr.mxu0 0.0
    %971 = vmatpush1.msra.mxu0 0.0
    %972 = vmatprep.subr.mxu0 0.0
    %973 = vmatpush1.msra.mxu0 0.0
    %974 = vmatprep.subr.mxu0 0.0
    %975 = vmatpush1.msra.mxu0 0.0
    %976 = vmatprep.subr.mxu0 0.0
    %977 = vmatpush1.msra.mxu0 0.0
    %978 = vmatprep.subr.mxu0 0.0
    %979 = vmatpush1.msra.mxu0 0.0
    %980 = vmatprep.subr.mxu0 0.0
    %981 = vmatpush1.msra.mxu0 0.0
    %982 = vmatprep.subr.mxu0 0.0
    %983 = vmatpush1.msra.mxu0 0.0
    %984 = vmatprep.subr.mxu0 0.0
    %985 = vmatpush1.msra.mxu0 0.0
    %986 = vmatprep.subr.mxu0 0.0
    %987 = vmatpush1.msra.mxu0 0.0
    %988 = vmatprep.subr.mxu0 0.0
    %989 = vmatpush1.msra.mxu0 0.0
    %990 = vmatprep.subr.mxu0 0.0
    %991 = vmatpush1.msra.mxu0 0.0
    %992 = vmatprep.subr.mxu0 0.0
    %993 = vmatpush1.msra.mxu0 0.0
    %994 = vmatprep.subr.mxu0 0.0
    %995 = vmatpush1.msra.mxu0 0.0
    %996 = vmatprep.mubr.f32.mxu0 0.0
    %997 = vmatmul.mubr.f32.gmra.mrb[0].mxu0 %v835
    %v998 = vpop.f32.mrb[0].mxu0
    %v999 = vadd.f32 0.0, %v998
    %v1000 = vpop.f32.mrb[0].mxu0
    %1001 = vdwg.mxu0
    %v1003 = vrot.slane %v999, 4
    %v1005 = vadd.f32 %v254, %v1003
    %v1006 = vxor.u32 %v1005, 2147483648
    %v1007 = vmul.f32 %v1006, 1.442695
    %v1008 = vpow.pop %v1007
    %v1009 = vadd.f32 %v1008, 1.0
    %v1010 = vrcp.pop %v1009
    %v1011 = vmul.f32 1.0, %v1010
    %v1012 = vtanh.pop %v1005
    %v1014 = vrot.slane %v749, 6
    %v1016 = vmul.f32 %v1011, %v1014
    %1018 = vrot.lane.b32.xlu0 %v1012, 64
    %v1019 = vpop.permute.xlu0 %1018
    %v1021 = vmul.f32 %v1011, %v1019
    %1023 = vrot.lane.b32.xlu0 %v1021, 32
    %v1024 = vpop.permute.xlu0 %1023
    %v1026 = vadd.f32 %v1016, %v1024
    %v1027 = vtanh.pop %v1026
    %1029 = vrot.lane.b32.xlu0 %v1027, 64
    %v1030 = vpop.permute.xlu0 %1029
    %v1032 = vmul.f32 %v1011, %v1030
    %1034 = vrot.lane.b32.xlu0 %v931, 32
    %v1035 = vpop.permute.xlu0 %1034
    %v1036 = vsel %vm386, %v1035, 0
    %1038 = vmatprep.subr.mxu0 0.0
    %1039 = vmatpush1.msra.mxu0 %v375
    %1040 = vmatprep.subr.mxu0 0.0
    %1041 = vmatpush1.msra.mxu0 %v376
    %1042 = vmatprep.subr.mxu0 0.0
    %1043 = vmatpush1.msra.mxu0 %v377
    %1044 = vmatprep.subr.mxu0 0.0
    %1045 = vmatpush1.msra.mxu0 %v378
    %1046 = vmatprep.subr.mxu0 0.0
    %1047 = vmatpush1.msra.mxu0 0.0
    %1048 = vmatprep.subr.mxu0 0.0
    %1049 = vmatpush1.msra.mxu0 0.0
    %1050 = vmatprep.subr.mxu0 0.0
    %1051 = vmatpush1.msra.mxu0 0.0
    %1052 = vmatprep.subr.mxu0 0.0
    %1053 = vmatpush1.msra.mxu0 0.0
    %1054 = vmatprep.subr.mxu0 0.0
    %1055 = vmatpush1.msra.mxu0 0.0
    %1056 = vmatprep.subr.mxu0 0.0
    %1057 = vmatpush1.msra.mxu0 0.0
    %1058 = vmatprep.subr.mxu0 0.0
    %1059 = vmatpush1.msra.mxu0 0.0
    %1060 = vmatprep.subr.mxu0 0.0
    %1061 = vmatpush1.msra.mxu0 0.0
    %1062 = vmatprep.subr.mxu0 0.0
    %1063 = vmatpush1.msra.mxu0 0.0
    %1064 = vmatprep.subr.mxu0 0.0
    %1065 = vmatpush1.msra.mxu0 0.0
    %1066 = vmatprep.subr.mxu0 0.0
    %1067 = vmatpush1.msra.mxu0 0.0
    %1068 = vmatprep.subr.mxu0 0.0
    %1069 = vmatpush1.msra.mxu0 0.0
    %1070 = vmatprep.subr.mxu0 0.0
    %1071 = vmatpush1.msra.mxu0 0.0
    %1072 = vmatprep.subr.mxu0 0.0
    %1073 = vmatpush1.msra.mxu0 0.0
    %1074 = vmatprep.subr.mxu0 0.0
    %1075 = vmatpush1.msra.mxu0 0.0
    %1076 = vmatprep.subr.mxu0 0.0
    %1077 = vmatpush1.msra.mxu0 0.0
    %1078 = vmatprep.subr.mxu0 0.0
    %1079 = vmatpush1.msra.mxu0 0.0
    %1080 = vmatprep.subr.mxu0 0.0
    %1081 = vmatpush1.msra.mxu0 0.0
    %1082 = vmatprep.subr.mxu0 0.0
    %1083 = vmatpush1.msra.mxu0 0.0
    %1084 = vmatprep.subr.mxu0 0.0
    %1085 = vmatpush1.msra.mxu0 0.0
    %1086 = vmatprep.subr.mxu0 0.0
    %1087 = vmatpush1.msra.mxu0 0.0
    %1088 = vmatprep.subr.mxu0 0.0
    %1089 = vmatpush1.msra.mxu0 0.0
    %1090 = vmatprep.subr.mxu0 0.0
    %1091 = vmatpush1.msra.mxu0 0.0
    %1092 = vmatprep.subr.mxu0 0.0
    %1093 = vmatpush1.msra.mxu0 0.0
    %1094 = vmatprep.subr.mxu0 0.0
    %1095 = vmatpush1.msra.mxu0 0.0
    %1096 = vmatprep.subr.mxu0 0.0
    %1097 = vmatpush1.msra.mxu0 0.0
    %1098 = vmatprep.subr.mxu0 0.0
    %1099 = vmatpush1.msra.mxu0 0.0
    %1100 = vmatprep.subr.mxu0 0.0
    %1101 = vmatpush1.msra.mxu0 0.0
    %1102 = vmatprep.mubr.f32.mxu0 0.0
    %1103 = vmatmul.mubr.f32.gmra.mrb[0].mxu0 %v1036
    %v1104 = vpop.f32.mrb[0].mxu0
    %v1105 = vadd.f32 0.0, %v1104
    %v1106 = vpop.f32.mrb[0].mxu0
    %1107 = vdwg.mxu0
    %v1109 = vrot.slane %v1032, 4
    %1110 = vrot.lane.b32.xlu0 %v1109, 32
    %v1111 = vpop.permute.xlu0 %1110
    %v1112 = vsel %vm386, %v1111, 0
    %1114 = vmatprep.subr.mxu0 0.0
    %1115 = vmatpush1.msra.mxu0 %v371
    %1116 = vmatprep.subr.mxu0 0.0
    %1117 = vmatpush1.msra.mxu0 %v372
    %1118 = vmatprep.subr.mxu0 0.0
    %1119 = vmatpush1.msra.mxu0 %v373
    %1120 = vmatprep.subr.mxu0 0.0
    %1121 = vmatpush1.msra.mxu0 %v374
    %1122 = vmatprep.subr.mxu0 0.0
    %1123 = vmatpush1.msra.mxu0 0.0
    %1124 = vmatprep.subr.mxu0 0.0
    %1125 = vmatpush1.msra.mxu0 0.0
    %1126 = vmatprep.subr.mxu0 0.0
    %1127 = vmatpush1.msra.mxu0 0.0
    %1128 = vmatprep.subr.mxu0 0.0
    %1129 = vmatpush1.msra.mxu0 0.0
    %1130 = vmatprep.subr.mxu0 0.0
    %1131 = vmatpush1.msra.mxu0 0.0
    %1132 = vmatprep.subr.mxu0 0.0
    %1133 = vmatpush1.msra.mxu0 0.0
    %1134 = vmatprep.subr.mxu0 0.0
    %1135 = vmatpush1.msra.mxu0 0.0
    %1136 = vmatprep.subr.mxu0 0.0
    %1137 = vmatpush1.msra.mxu0 0.0
    %1138 = vmatprep.subr.mxu0 0.0
    %1139 = vmatpush1.msra.mxu0 0.0
    %1140 = vmatprep.subr.mxu0 0.0
    %1141 = vmatpush1.msra.mxu0 0.0
    %1142 = vmatprep.subr.mxu0 0.0
    %1143 = vmatpush1.msra.mxu0 0.0
    %1144 = vmatprep.subr.mxu0 0.0
    %1145 = vmatpush1.msra.mxu0 0.0
    %1146 = vmatprep.subr.mxu0 0.0
    %1147 = vmatpush1.msra.mxu0 0.0
    %1148 = vmatprep.subr.mxu0 0.0
    %1149 = vmatpush1.msra.mxu0 0.0
    %1150 = vmatprep.subr.mxu0 0.0
    %1151 = vmatpush1.msra.mxu0 0.0
    %1152 = vmatprep.subr.mxu0 0.0
    %1153 = vmatpush1.msra.mxu0 0.0
    %1154 = vmatprep.subr.mxu0 0.0
    %1155 = vmatpush1.msra.mxu0 0.0
    %1156 = vmatprep.subr.mxu0 0.0
    %1157 = vmatpush1.msra.mxu0 0.0
    %1158 = vmatprep.subr.mxu0 0.0
    %1159 = vmatpush1.msra.mxu0 0.0
    %1160 = vmatprep.subr.mxu0 0.0
    %1161 = vmatpush1.msra.mxu0 0.0
    %1162 = vmatprep.subr.mxu0 0.0
    %1163 = vmatpush1.msra.mxu0 0.0
    %1164 = vmatprep.subr.mxu0 0.0
    %1165 = vmatpush1.msra.mxu0 0.0
    %1166 = vmatprep.subr.mxu0 0.0
    %1167 = vmatpush1.msra.mxu0 0.0
    %1168 = vmatprep.subr.mxu0 0.0
    %1169 = vmatpush1.msra.mxu0 0.0
    %1170 = vmatprep.subr.mxu0 0.0
    %1171 = vmatpush1.msra.mxu0 0.0
    %1172 = vmatprep.subr.mxu0 0.0
    %1173 = vmatpush1.msra.mxu0 0.0
    %1174 = vmatprep.subr.mxu0 0.0
    %1175 = vmatpush1.msra.mxu0 0.0
    %1176 = vmatprep.subr.mxu0 0.0
    %1177 = vmatpush1.msra.mxu0 0.0
    %1178 = vmatprep.mubr.f32.mxu0 0.0
    %1179 = vmatmul.mubr.f32.gmra.mrb[0].mxu0 %v1112
    %v1180 = vpop.f32.mrb[0].mxu0
    %v1181 = vadd.f32 %v1105, %v1180
    %v1182 = vpop.f32.mrb[0].mxu0
    %1183 = vdwg.mxu0
    %v1184 = vadd.f32 %v1181, %v384
    %v1185 = vxor.u32 %v1184, 2147483648
    %v1186 = vmul.f32 %v1185, 1.442695
    %v1187 = vpow.pop %v1186
    %v1188 = vadd.f32 %v1187, 1.0
    %v1189 = vrcp.pop %v1188
    %v1190 = vmul.f32 1.0, %v1189
    %v1191 = vtanh.pop %v1184
    %v1192 = vmul.f32 %v1190, %v925
    %1194 = vrot.lane.b32.xlu0 %v1191, 64
    %v1195 = vpop.permute.xlu0 %1194
    %v1197 = vmul.f32 %v1190, %v1195
    %1199 = vrot.lane.b32.xlu0 %v1197, 32
    %v1200 = vpop.permute.xlu0 %1199
    %v1202 = vadd.f32 %v1192, %v1200
    %v1203 = vtanh.pop %v1202
    %1205 = vrot.lane.b32.xlu0 %v1203, 64
    %v1206 = vpop.permute.xlu0 %1205
    %v1208 = vmul.f32 %v1190, %v1206
    %1209 = vmatprep.subr.mxu0 0.0
    %1210 = vmatpush1.msra.mxu0 %v367
    %1211 = vmatprep.subr.mxu0 0.0
    %1212 = vmatpush1.msra.mxu0 %v368
    %1213 = vmatprep.subr.mxu0 0.0
    %1214 = vmatpush1.msra.mxu0 %v369
    %1215 = vmatprep.subr.mxu0 0.0
    %1216 = vmatpush1.msra.mxu0 %v370
    %1217 = vmatprep.subr.mxu0 0.0
    %1218 = vmatpush1.msra.mxu0 0.0
    %1219 = vmatprep.subr.mxu0 0.0
    %1220 = vmatpush1.msra.mxu0 0.0
    %1221 = vmatprep.subr.mxu0 0.0
    %1222 = vmatpush1.msra.mxu0 0.0
    %1223 = vmatprep.subr.mxu0 0.0
    %1224 = vmatpush1.msra.mxu0 0.0
    %1225 = vmatprep.subr.mxu0 0.0
    %1226 = vmatpush1.msra.mxu0 0.0
    %1227 = vmatprep.subr.mxu0 0.0
    %1228 = vmatpush1.msra.mxu0 0.0
    %1229 = vmatprep.subr.mxu0 0.0
    %1230 = vmatpush1.msra.mxu0 0.0
    %1231 = vmatprep.subr.mxu0 0.0
    %1232 = vmatpush1.msra.mxu0 0.0
    %1233 = vmatprep.subr.mxu0 0.0
    %1234 = vmatpush1.msra.mxu0 0.0
    %1235 = vmatprep.subr.mxu0 0.0
    %1236 = vmatpush1.msra.mxu0 0.0
    %1237 = vmatprep.subr.mxu0 0.0
    %1238 = vmatpush1.msra.mxu0 0.0
    %1239 = vmatprep.subr.mxu0 0.0
    %1240 = vmatpush1.msra.mxu0 0.0
    %1241 = vmatprep.subr.mxu0 0.0
    %1242 = vmatpush1.msra.mxu0 0.0
    %1243 = vmatprep.subr.mxu0 0.0
    %1244 = vmatpush1.msra.mxu0 0.0
    %1245 = vmatprep.subr.mxu0 0.0
    %1246 = vmatpush1.msra.mxu0 0.0
    %1247 = vmatprep.subr.mxu0 0.0
    %1248 = vmatpush1.msra.mxu0 0.0
    %1249 = vmatprep.subr.mxu0 0.0
    %1250 = vmatpush1.msra.mxu0 0.0
    %1251 = vmatprep.subr.mxu0 0.0
    %1252 = vmatpush1.msra.mxu0 0.0
    %1253 = vmatprep.subr.mxu0 0.0
    %1254 = vmatpush1.msra.mxu0 0.0
    %1255 = vmatprep.subr.mxu0 0.0
    %1256 = vmatpush1.msra.mxu0 0.0
    %1257 = vmatprep.subr.mxu0 0.0
    %1258 = vmatpush1.msra.mxu0 0.0
    %1259 = vmatprep.subr.mxu0 0.0
    %1260 = vmatpush1.msra.mxu0 0.0
    %1261 = vmatprep.subr.mxu0 0.0
    %1262 = vmatpush1.msra.mxu0 0.0
    %1263 = vmatprep.subr.mxu0 0.0
    %1264 = vmatpush1.msra.mxu0 0.0
    %1265 = vmatprep.subr.mxu0 0.0
    %1266 = vmatpush1.msra.mxu0 0.0
    %1267 = vmatprep.subr.mxu0 0.0
    %1268 = vmatpush1.msra.mxu0 0.0
    %1269 = vmatprep.subr.mxu0 0.0
    %1270 = vmatpush1.msra.mxu0 0.0
    %1271 = vmatprep.subr.mxu0 0.0
    %1272 = vmatpush1.msra.mxu0 0.0
    %1273 = vmatprep.mubr.f32.mxu0 0.0
    %1274 = vmatmul.mubr.f32.gmra.mrb[0].mxu0 %v1112
    %v1275 = vpop.f32.mrb[0].mxu0
    %v1276 = vadd.f32 0.0, %v1275
    %v1277 = vpop.f32.mrb[0].mxu0
    %1278 = vdwg.mxu0
    %v1280 = vrot.slane %v1276, 2
    %v1282 = vadd.f32 %v254, %v1280
    %v1283 = vxor.u32 %v1282, 2147483648
    %v1284 = vmul.f32 %v1283, 1.442695
    %v1285 = vpow.pop %v1284
    %v1286 = vadd.f32 %v1285, 1.0
    %v1287 = vrcp.pop %v1286
    %v1288 = vmul.f32 1.0, %v1287
    %v1289 = vtanh.pop %v1282
    %v1291 = vrot.slane %v1026, 6
    %v1293 = vmul.f32 %v1288, %v1291
    %1295 = vrot.lane.b32.xlu0 %v1289, 64
    %v1296 = vpop.permute.xlu0 %1295
    %v1298 = vmul.f32 %v1288, %v1296
    %1300 = vrot.lane.b32.xlu0 %v1298, 32
    %v1301 = vpop.permute.xlu0 %1300
    %v1303 = vadd.f32 %v1293, %v1301
    %v1304 = vtanh.pop %v1303
    %1306 = vrot.lane.b32.xlu0 %v1304, 64
    %v1307 = vpop.permute.xlu0 %1306
    %v1309 = vmul.f32 %v1288, %v1307
    %1311 = vrot.lane.b32.xlu0 %v1208, 32
    %v1312 = vpop.permute.xlu0 %1311
    %v1313 = vsel %vm386, %v1312, 0
    %1315 = vmatprep.subr.mxu0 0.0
    %1316 = vmatpush1.msra.mxu0 %v375
    %1317 = vmatprep.subr.mxu0 0.0
    %1318 = vmatpush1.msra.mxu0 %v376
    %1319 = vmatprep.subr.mxu0 0.0
    %1320 = vmatpush1.msra.mxu0 %v377
    %1321 = vmatprep.subr.mxu0 0.0
    %1322 = vmatpush1.msra.mxu0 %v378
    %1323 = vmatprep.subr.mxu0 0.0
    %1324 = vmatpush1.msra.mxu0 0.0
    %1325 = vmatprep.subr.mxu0 0.0
    %1326 = vmatpush1.msra.mxu0 0.0
    %1327 = vmatprep.subr.mxu0 0.0
    %1328 = vmatpush1.msra.mxu0 0.0
    %1329 = vmatprep.subr.mxu0 0.0
    %1330 = vmatpush1.msra.mxu0 0.0
    %1331 = vmatprep.subr.mxu0 0.0
    %1332 = vmatpush1.msra.mxu0 0.0
    %1333 = vmatprep.subr.mxu0 0.0
    %1334 = vmatpush1.msra.mxu0 0.0
    %1335 = vmatprep.subr.mxu0 0.0
    %1336 = vmatpush1.msra.mxu0 0.0
    %1337 = vmatprep.subr.mxu0 0.0
    %1338 = vmatpush1.msra.mxu0 0.0
    %1339 = vmatprep.subr.mxu0 0.0
    %1340 = vmatpush1.msra.mxu0 0.0
    %1341 = vmatprep.subr.mxu0 0.0
    %1342 = vmatpush1.msra.mxu0 0.0
    %1343 = vmatprep.subr.mxu0 0.0
    %1344 = vmatpush1.msra.mxu0 0.0
    %1345 = vmatprep.subr.mxu0 0.0
    %1346 = vmatpush1.msra.mxu0 0.0
    %1347 = vmatprep.subr.mxu0 0.0
    %1348 = vmatpush1.msra.mxu0 0.0
    %1349 = vmatprep.subr.mxu0 0.0
    %1350 = vmatpush1.msra.mxu0 0.0
    %1351 = vmatprep.subr.mxu0 0.0
    %1352 = vmatpush1.msra.mxu0 0.0
    %1353 = vmatprep.subr.mxu0 0.0
    %1354 = vmatpush1.msra.mxu0 0.0
    %1355 = vmatprep.subr.mxu0 0.0
    %1356 = vmatpush1.msra.mxu0 0.0
    %1357 = vmatprep.subr.mxu0 0.0
    %1358 = vmatpush1.msra.mxu0 0.0
    %1359 = vmatprep.subr.mxu0 0.0
    %1360 = vmatpush1.msra.mxu0 0.0
    %1361 = vmatprep.subr.mxu0 0.0
    %1362 = vmatpush1.msra.mxu0 0.0
    %1363 = vmatprep.subr.mxu0 0.0
    %1364 = vmatpush1.msra.mxu0 0.0
    %1365 = vmatprep.subr.mxu0 0.0
    %1366 = vmatpush1.msra.mxu0 0.0
    %1367 = vmatprep.subr.mxu0 0.0
    %1368 = vmatpush1.msra.mxu0 0.0
    %1369 = vmatprep.subr.mxu0 0.0
    %1370 = vmatpush1.msra.mxu0 0.0
    %1371 = vmatprep.subr.mxu0 0.0
    %1372 = vmatpush1.msra.mxu0 0.0
    %1373 = vmatprep.subr.mxu0 0.0
    %1374 = vmatpush1.msra.mxu0 0.0
    %1375 = vmatprep.subr.mxu0 0.0
    %1376 = vmatpush1.msra.mxu0 0.0
    %1377 = vmatprep.subr.mxu0 0.0
    %1378 = vmatpush1.msra.mxu0 0.0
    %1379 = vmatprep.mubr.f32.mxu0 0.0
    %1380 = vmatmul.mubr.f32.gmra.mrb[0].mxu0 %v1313
    %v1381 = vpop.f32.mrb[0].mxu0
    %v1382 = vadd.f32 0.0, %v1381
    %v1383 = vpop.f32.mrb[0].mxu0
    %1384 = vdwg.mxu0
    %v1386 = vrot.slane %v1309, 6
    %1387 = vrot.lane.b32.xlu0 %v1386, 32
    %v1388 = vpop.permute.xlu0 %1387
    %v1389 = vsel %vm386, %v1388, 0
    %1391 = vmatprep.subr.mxu0 0.0
    %1392 = vmatpush1.msra.mxu0 %v371
    %1393 = vmatprep.subr.mxu0 0.0
    %1394 = vmatpush1.msra.mxu0 %v372
    %1395 = vmatprep.subr.mxu0 0.0
    %1396 = vmatpush1.msra.mxu0 %v373
    %1397 = vmatprep.subr.mxu0 0.0
    %1398 = vmatpush1.msra.mxu0 %v374
    %1399 = vmatprep.subr.mxu0 0.0
    %1400 = vmatpush1.msra.mxu0 0.0
    %1401 = vmatprep.subr.mxu0 0.0
    %1402 = vmatpush1.msra.mxu0 0.0
    %1403 = vmatprep.subr.mxu0 0.0
    %1404 = vmatpush1.msra.mxu0 0.0
    %1405 = vmatprep.subr.mxu0 0.0
    %1406 = vmatpush1.msra.mxu0 0.0
    %1407 = vmatprep.subr.mxu0 0.0
    %1408 = vmatpush1.msra.mxu0 0.0
    %1409 = vmatprep.subr.mxu0 0.0
    %1410 = vmatpush1.msra.mxu0 0.0
    %1411 = vmatprep.subr.mxu0 0.0
    %1412 = vmatpush1.msra.mxu0 0.0
    %1413 = vmatprep.subr.mxu0 0.0
    %1414 = vmatpush1.msra.mxu0 0.0
    %1415 = vmatprep.subr.mxu0 0.0
    %1416 = vmatpush1.msra.mxu0 0.0
    %1417 = vmatprep.subr.mxu0 0.0
    %1418 = vmatpush1.msra.mxu0 0.0
    %1419 = vmatprep.subr.mxu0 0.0
    %1420 = vmatpush1.msra.mxu0 0.0
    %1421 = vmatprep.subr.mxu0 0.0
    %1422 = vmatpush1.msra.mxu0 0.0
    %1423 = vmatprep.subr.mxu0 0.0
    %1424 = vmatpush1.msra.mxu0 0.0
    %1425 = vmatprep.subr.mxu0 0.0
    %1426 = vmatpush1.msra.mxu0 0.0
    %1427 = vmatprep.subr.mxu0 0.0
    %1428 = vmatpush1.msra.mxu0 0.0
    %1429 = vmatprep.subr.mxu0 0.0
    %1430 = vmatpush1.msra.mxu0 0.0
    %1431 = vmatprep.subr.mxu0 0.0
    %1432 = vmatpush1.msra.mxu0 0.0
    %1433 = vmatprep.subr.mxu0 0.0
    %1434 = vmatpush1.msra.mxu0 0.0
    %1435 = vmatprep.subr.mxu0 0.0
    %1436 = vmatpush1.msra.mxu0 0.0
    %1437 = vmatprep.subr.mxu0 0.0
    %1438 = vmatpush1.msra.mxu0 0.0
    %1439 = vmatprep.subr.mxu0 0.0
    %1440 = vmatpush1.msra.mxu0 0.0
    %1441 = vmatprep.subr.mxu0 0.0
    %1442 = vmatpush1.msra.mxu0 0.0
    %1443 = vmatprep.subr.mxu0 0.0
    %1444 = vmatpush1.msra.mxu0 0.0
    %1445 = vmatprep.subr.mxu0 0.0
    %1446 = vmatpush1.msra.mxu0 0.0
    %1447 = vmatprep.subr.mxu0 0.0
    %1448 = vmatpush1.msra.mxu0 0.0
    %1449 = vmatprep.subr.mxu0 0.0
    %1450 = vmatpush1.msra.mxu0 0.0
    %1451 = vmatprep.subr.mxu0 0.0
    %1452 = vmatpush1.msra.mxu0 0.0
    %1453 = vmatprep.subr.mxu0 0.0
    %1454 = vmatpush1.msra.mxu0 0.0
    %1455 = vmatprep.mubr.f32.mxu0 0.0
    %1456 = vmatmul.mubr.f32.gmra.mrb[0].mxu0 %v1389
    %v1457 = vpop.f32.mrb[0].mxu0
    %v1458 = vadd.f32 %v1382, %v1457
    %v1459 = vpop.f32.mrb[0].mxu0
    %1460 = vdwg.mxu0
    %v1461 = vadd.f32 %v1458, %v384
    %v1462 = vxor.u32 %v1461, 2147483648
    %v1463 = vmul.f32 %v1462, 1.442695
    %v1464 = vpow.pop %v1463
    %v1465 = vadd.f32 %v1464, 1.0
    %v1466 = vrcp.pop %v1465
    %v1467 = vmul.f32 1.0, %v1466
    %v1468 = vtanh.pop %v1461
    %v1469 = vmul.f32 %v1467, %v1202
    %1471 = vrot.lane.b32.xlu0 %v1468, 64
    %v1472 = vpop.permute.xlu0 %1471
    %v1474 = vmul.f32 %v1467, %v1472
    %1476 = vrot.lane.b32.xlu0 %v1474, 32
    %v1477 = vpop.permute.xlu0 %1476
    %v1479 = vadd.f32 %v1469, %v1477
    %v1480 = vtanh.pop %v1479
    %1482 = vrot.lane.b32.xlu0 %v1480, 64
    %v1483 = vpop.permute.xlu0 %1482
    %v1485 = vmul.f32 %v1467, %v1483
    %1486 = vmatprep.subr.mxu0 0.0
    %1487 = vmatpush1.msra.mxu0 %v367
    %1488 = vmatprep.subr.mxu0 0.0
    %1489 = vmatpush1.msra.mxu0 %v368
    %1490 = vmatprep.subr.mxu0 0.0
    %1491 = vmatpush1.msra.mxu0 %v369
    %1492 = vmatprep.subr.mxu0 0.0
    %1493 = vmatpush1.msra.mxu0 %v370
    %1494 = vmatprep.subr.mxu0 0.0
    %1495 = vmatpush1.msra.mxu0 0.0
    %1496 = vmatprep.subr.mxu0 0.0
    %1497 = vmatpush1.msra.mxu0 0.0
    %1498 = vmatprep.subr.mxu0 0.0
    %1499 = vmatpush1.msra.mxu0 0.0
    %1500 = vmatprep.subr.mxu0 0.0
    %1501 = vmatpush1.msra.mxu0 0.0
    %1502 = vmatprep.subr.mxu0 0.0
    %1503 = vmatpush1.msra.mxu0 0.0
    %1504 = vmatprep.subr.mxu0 0.0
    %1505 = vmatpush1.msra.mxu0 0.0
    %1506 = vmatprep.subr.mxu0 0.0
    %1507 = vmatpush1.msra.mxu0 0.0
    %1508 = vmatprep.subr.mxu0 0.0
    %1509 = vmatpush1.msra.mxu0 0.0
    %1510 = vmatprep.subr.mxu0 0.0
    %1511 = vmatpush1.msra.mxu0 0.0
    %1512 = vmatprep.subr.mxu0 0.0
    %1513 = vmatpush1.msra.mxu0 0.0
    %1514 = vmatprep.subr.mxu0 0.0
    %1515 = vmatpush1.msra.mxu0 0.0
    %1516 = vmatprep.subr.mxu0 0.0
    %1517 = vmatpush1.msra.mxu0 0.0
    %1518 = vmatprep.subr.mxu0 0.0
    %1519 = vmatpush1.msra.mxu0 0.0
    %1520 = vmatprep.subr.mxu0 0.0
    %1521 = vmatpush1.msra.mxu0 0.0
    %1522 = vmatprep.subr.mxu0 0.0
    %1523 = vmatpush1.msra.mxu0 0.0
    %1524 = vmatprep.subr.mxu0 0.0
    %1525 = vmatpush1.msra.mxu0 0.0
    %1526 = vmatprep.subr.mxu0 0.0
    %1527 = vmatpush1.msra.mxu0 0.0
    %1528 = vmatprep.subr.mxu0 0.0
    %1529 = vmatpush1.msra.mxu0 0.0
    %1530 = vmatprep.subr.mxu0 0.0
    %1531 = vmatpush1.msra.mxu0 0.0
    %1532 = vmatprep.subr.mxu0 0.0
    %1533 = vmatpush1.msra.mxu0 0.0
    %1534 = vmatprep.subr.mxu0 0.0
    %1535 = vmatpush1.msra.mxu0 0.0
    %1536 = vmatprep.subr.mxu0 0.0
    %1537 = vmatpush1.msra.mxu0 0.0
    %1538 = vmatprep.subr.mxu0 0.0
    %1539 = vmatpush1.msra.mxu0 0.0
    %1540 = vmatprep.subr.mxu0 0.0
    %1541 = vmatpush1.msra.mxu0 0.0
    %1542 = vmatprep.subr.mxu0 0.0
    %1543 = vmatpush1.msra.mxu0 0.0
    %1544 = vmatprep.subr.mxu0 0.0
    %1545 = vmatpush1.msra.mxu0 0.0
    %1546 = vmatprep.subr.mxu0 0.0
    %1547 = vmatpush1.msra.mxu0 0.0
    %1548 = vmatprep.subr.mxu0 0.0
    %1549 = vmatpush1.msra.mxu0 0.0
    %1550 = vmatprep.mubr.f32.mxu0 0.0
    %1551 = vmatmul.mubr.f32.gmra.mrb[0].mxu0 %v1389
    %v1552 = vpop.f32.mrb[0].mxu0
    %v1553 = vadd.f32 0.0, %v1552
    %v1554 = vpop.f32.mrb[0].mxu0
    %1555 = vdwg.mxu0
    %v1556 = vadd.f32 %v259, %v1553
    %v1557 = vxor.u32 %v1556, 2147483648
    %v1558 = vmul.f32 %v1557, 1.442695
    %v1559 = vpow.pop %v1558
    %v1560 = vadd.f32 %v1559, 1.0
    %v1561 = vrcp.pop %v1560
    %v1562 = vmul.f32 1.0, %v1561
    %v1563 = vtanh.pop %v1556
    %v1565 = vrot.slane %v1303, 6
    %v1567 = vmul.f32 %v1562, %v1565
    %1569 = vrot.lane.b32.xlu0 %v1563, 64
    %v1570 = vpop.permute.xlu0 %1569
    %v1572 = vmul.f32 %v1562, %v1570
    %1574 = vrot.lane.b32.xlu0 %v1572, 32
    %v1575 = vpop.permute.xlu0 %1574
    %v1577 = vadd.f32 %v1567, %v1575
    %v1578 = vtanh.pop %v1577
    %1580 = vrot.lane.b32.xlu0 %v1578, 64
    %v1581 = vpop.permute.xlu0 %1580
    %v1583 = vmul.f32 %v1562, %v1581
    %1585 = vrot.lane.b32.xlu0 %v1485, 32
    %v1586 = vpop.permute.xlu0 %1585
    %v1587 = vsel %vm386, %v1586, 0
    %1589 = vmatprep.subr.mxu0 0.0
    %1590 = vmatpush1.msra.mxu0 %v375
    %1591 = vmatprep.subr.mxu0 0.0
    %1592 = vmatpush1.msra.mxu0 %v376
    %1593 = vmatprep.subr.mxu0 0.0
    %1594 = vmatpush1.msra.mxu0 %v377
    %1595 = vmatprep.subr.mxu0 0.0
    %1596 = vmatpush1.msra.mxu0 %v378
    %1597 = vmatprep.subr.mxu0 0.0
    %1598 = vmatpush1.msra.mxu0 0.0
    %1599 = vmatprep.subr.mxu0 0.0
    %1600 = vmatpush1.msra.mxu0 0.0
    %1601 = vmatprep.subr.mxu0 0.0
    %1602 = vmatpush1.msra.mxu0 0.0
    %1603 = vmatprep.subr.mxu0 0.0
    %1604 = vmatpush1.msra.mxu0 0.0
    %1605 = vmatprep.subr.mxu0 0.0
    %1606 = vmatpush1.msra.mxu0 0.0
    %1607 = vmatprep.subr.mxu0 0.0
    %1608 = vmatpush1.msra.mxu0 0.0
    %1609 = vmatprep.subr.mxu0 0.0
    %1610 = vmatpush1.msra.mxu0 0.0
    %1611 = vmatprep.subr.mxu0 0.0
    %1612 = vmatpush1.msra.mxu0 0.0
    %1613 = vmatprep.subr.mxu0 0.0
    %1614 = vmatpush1.msra.mxu0 0.0
    %1615 = vmatprep.subr.mxu0 0.0
    %1616 = vmatpush1.msra.mxu0 0.0
    %1617 = vmatprep.subr.mxu0 0.0
    %1618 = vmatpush1.msra.mxu0 0.0
    %1619 = vmatprep.subr.mxu0 0.0
    %1620 = vmatpush1.msra.mxu0 0.0
    %1621 = vmatprep.subr.mxu0 0.0
    %1622 = vmatpush1.msra.mxu0 0.0
    %1623 = vmatprep.subr.mxu0 0.0
    %1624 = vmatpush1.msra.mxu0 0.0
    %1625 = vmatprep.subr.mxu0 0.0
    %1626 = vmatpush1.msra.mxu0 0.0
    %1627 = vmatprep.subr.mxu0 0.0
    %1628 = vmatpush1.msra.mxu0 0.0
    %1629 = vmatprep.subr.mxu0 0.0
    %1630 = vmatpush1.msra.mxu0 0.0
    %1631 = vmatprep.subr.mxu0 0.0
    %1632 = vmatpush1.msra.mxu0 0.0
    %1633 = vmatprep.subr.mxu0 0.0
    %1634 = vmatpush1.msra.mxu0 0.0
    %1635 = vmatprep.subr.mxu0 0.0
    %1636 = vmatpush1.msra.mxu0 0.0
    %1637 = vmatprep.subr.mxu0 0.0
    %1638 = vmatpush1.msra.mxu0 0.0
    %1639 = vmatprep.subr.mxu0 0.0
    %1640 = vmatpush1.msra.mxu0 0.0
    %1641 = vmatprep.subr.mxu0 0.0
    %1642 = vmatpush1.msra.mxu0 0.0
    %1643 = vmatprep.subr.mxu0 0.0
    %1644 = vmatpush1.msra.mxu0 0.0
    %1645 = vmatprep.subr.mxu0 0.0
    %1646 = vmatpush1.msra.mxu0 0.0
    %1647 = vmatprep.subr.mxu0 0.0
    %1648 = vmatpush1.msra.mxu0 0.0
    %1649 = vmatprep.subr.mxu0 0.0
    %1650 = vmatpush1.msra.mxu0 0.0
    %1651 = vmatprep.subr.mxu0 0.0
    %1652 = vmatpush1.msra.mxu0 0.0
    %1653 = vmatprep.mubr.f32.mxu0 0.0
    %1654 = vmatmul.mubr.f32.gmra.mrb[0].mxu0 %v1587
    %v1655 = vpop.f32.mrb[0].mxu0
    %v1656 = vadd.f32 0.0, %v1655
    %v1657 = vpop.f32.mrb[0].mxu0
    %1658 = vdwg.mxu0
    %1660 = vrot.lane.b32.xlu0 %v1583, 32
    %v1661 = vpop.permute.xlu0 %1660
    %v1662 = vsel %vm386, %v1661, 0
    %1664 = vmatprep.subr.mxu0 0.0
    %1665 = vmatpush1.msra.mxu0 %v371
    %1666 = vmatprep.subr.mxu0 0.0
    %1667 = vmatpush1.msra.mxu0 %v372
    %1668 = vmatprep.subr.mxu0 0.0
    %1669 = vmatpush1.msra.mxu0 %v373
    %1670 = vmatprep.subr.mxu0 0.0
    %1671 = vmatpush1.msra.mxu0 %v374
    %1672 = vmatprep.subr.mxu0 0.0
    %1673 = vmatpush1.msra.mxu0 0.0
    %1674 = vmatprep.subr.mxu0 0.0
    %1675 = vmatpush1.msra.mxu0 0.0
    %1676 = vmatprep.subr.mxu0 0.0
    %1677 = vmatpush1.msra.mxu0 0.0
    %1678 = vmatprep.subr.mxu0 0.0
    %1679 = vmatpush1.msra.mxu0 0.0
    %1680 = vmatprep.subr.mxu0 0.0
    %1681 = vmatpush1.msra.mxu0 0.0
    %1682 = vmatprep.subr.mxu0 0.0
    %1683 = vmatpush1.msra.mxu0 0.0
    %1684 = vmatprep.subr.mxu0 0.0
    %1685 = vmatpush1.msra.mxu0 0.0
    %1686 = vmatprep.subr.mxu0 0.0
    %1687 = vmatpush1.msra.mxu0 0.0
    %1688 = vmatprep.subr.mxu0 0.0
    %1689 = vmatpush1.msra.mxu0 0.0
    %1690 = vmatprep.subr.mxu0 0.0
    %1691 = vmatpush1.msra.mxu0 0.0
    %1692 = vmatprep.subr.mxu0 0.0
    %1693 = vmatpush1.msra.mxu0 0.0
    %1694 = vmatprep.subr.mxu0 0.0
    %1695 = vmatpush1.msra.mxu0 0.0
    %1696 = vmatprep.subr.mxu0 0.0
    %1697 = vmatpush1.msra.mxu0 0.0
    %1698 = vmatprep.subr.mxu0 0.0
    %1699 = vmatpush1.msra.mxu0 0.0
    %1700 = vmatprep.subr.mxu0 0.0
    %1701 = vmatpush1.msra.mxu0 0.0
    %1702 = vmatprep.subr.mxu0 0.0
    %1703 = vmatpush1.msra.mxu0 0.0
    %1704 = vmatprep.subr.mxu0 0.0
    %1705 = vmatpush1.msra.mxu0 0.0
    %1706 = vmatprep.subr.mxu0 0.0
    %1707 = vmatpush1.msra.mxu0 0.0
    %1708 = vmatprep.subr.mxu0 0.0
    %1709 = vmatpush1.msra.mxu0 0.0
    %1710 = vmatprep.subr.mxu0 0.0
    %1711 = vmatpush1.msra.mxu0 0.0
    %1712 = vmatprep.subr.mxu0 0.0
    %1713 = vmatpush1.msra.mxu0 0.0
    %1714 = vmatprep.subr.mxu0 0.0
    %1715 = vmatpush1.msra.mxu0 0.0
    %1716 = vmatprep.subr.mxu0 0.0
    %1717 = vmatpush1.msra.mxu0 0.0
    %1718 = vmatprep.subr.mxu0 0.0
    %1719 = vmatpush1.msra.mxu0 0.0
    %1720 = vmatprep.subr.mxu0 0.0
    %1721 = vmatpush1.msra.mxu0 0.0
    %1722 = vmatprep.subr.mxu0 0.0
    %1723 = vmatpush1.msra.mxu0 0.0
    %1724 = vmatprep.subr.mxu0 0.0
    %1725 = vmatpush1.msra.mxu0 0.0
    %1726 = vmatprep.subr.mxu0 0.0
    %1727 = vmatpush1.msra.mxu0 0.0
    %1728 = vmatprep.mubr.f32.mxu0 0.0
    %1729 = vmatmul.mubr.f32.gmra.mrb[0].mxu0 %v1662
    %v1730 = vpop.f32.mrb[0].mxu0
    %v1731 = vadd.f32 %v1656, %v1730
    %v1732 = vpop.f32.mrb[0].mxu0
    %1733 = vdwg.mxu0
    %v1734 = vadd.f32 %v1731, %v384
    %v1735 = vxor.u32 %v1734, 2147483648
    %v1736 = vmul.f32 %v1735, 1.442695
    %v1737 = vpow.pop %v1736
    %v1738 = vadd.f32 %v1737, 1.0
    %v1739 = vrcp.pop %v1738
    %v1740 = vmul.f32 1.0, %v1739
    %v1741 = vtanh.pop %v1734
    %v1742 = vmul.f32 %v1740, %v1479
    %1744 = vrot.lane.b32.xlu0 %v1741, 64
    %v1745 = vpop.permute.xlu0 %1744
    %v1747 = vmul.f32 %v1740, %v1745
    %1749 = vrot.lane.b32.xlu0 %v1747, 32
    %v1750 = vpop.permute.xlu0 %1749
    %v1752 = vadd.f32 %v1742, %v1750
    %v1753 = vtanh.pop %v1752
    %1755 = vrot.lane.b32.xlu0 %v1753, 64
    %v1756 = vpop.permute.xlu0 %1755
    %v1758 = vmul.f32 %v1740, %v1756
    %1759 = vmatprep.subr.mxu0 0.0
    %1760 = vmatpush1.msra.mxu0 %v367
    %1761 = vmatprep.subr.mxu0 0.0
    %1762 = vmatpush1.msra.mxu0 %v368
    %1763 = vmatprep.subr.mxu0 0.0
    %1764 = vmatpush1.msra.mxu0 %v369
    %1765 = vmatprep.subr.mxu0 0.0
    %1766 = vmatpush1.msra.mxu0 %v370
    %1767 = vmatprep.subr.mxu0 0.0
    %1768 = vmatpush1.msra.mxu0 0.0
    %1769 = vmatprep.subr.mxu0 0.0
    %1770 = vmatpush1.msra.mxu0 0.0
    %1771 = vmatprep.subr.mxu0 0.0
    %1772 = vmatpush1.msra.mxu0 0.0
    %1773 = vmatprep.subr.mxu0 0.0
    %1774 = vmatpush1.msra.mxu0 0.0
    %1775 = vmatprep.subr.mxu0 0.0
    %1776 = vmatpush1.msra.mxu0 0.0
    %1777 = vmatprep.subr.mxu0 0.0
    %1778 = vmatpush1.msra.mxu0 0.0
    %1779 = vmatprep.subr.mxu0 0.0
    %1780 = vmatpush1.msra.mxu0 0.0
    %1781 = vmatprep.subr.mxu0 0.0
    %1782 = vmatpush1.msra.mxu0 0.0
    %1783 = vmatprep.subr.mxu0 0.0
    %1784 = vmatpush1.msra.mxu0 0.0
    %1785 = vmatprep.subr.mxu0 0.0
    %1786 = vmatpush1.msra.mxu0 0.0
    %1787 = vmatprep.subr.mxu0 0.0
    %1788 = vmatpush1.msra.mxu0 0.0
    %1789 = vmatprep.subr.mxu0 0.0
    %1790 = vmatpush1.msra.mxu0 0.0
    %1791 = vmatprep.subr.mxu0 0.0
    %1792 = vmatpush1.msra.mxu0 0.0
    %1793 = vmatprep.subr.mxu0 0.0
    %1794 = vmatpush1.msra.mxu0 0.0
    %1795 = vmatprep.subr.mxu0 0.0
    %1796 = vmatpush1.msra.mxu0 0.0
    %1797 = vmatprep.subr.mxu0 0.0
    %1798 = vmatpush1.msra.mxu0 0.0
    %1799 = vmatprep.subr.mxu0 0.0
    %1800 = vmatpush1.msra.mxu0 0.0
    %1801 = vmatprep.subr.mxu0 0.0
    %1802 = vmatpush1.msra.mxu0 0.0
    %1803 = vmatprep.subr.mxu0 0.0
    %1804 = vmatpush1.msra.mxu0 0.0
    %1805 = vmatprep.subr.mxu0 0.0
    %1806 = vmatpush1.msra.mxu0 0.0
    %1807 = vmatprep.subr.mxu0 0.0
    %1808 = vmatpush1.msra.mxu0 0.0
    %1809 = vmatprep.subr.mxu0 0.0
    %1810 = vmatpush1.msra.mxu0 0.0
    %1811 = vmatprep.subr.mxu0 0.0
    %1812 = vmatpush1.msra.mxu0 0.0
    %1813 = vmatprep.subr.mxu0 0.0
    %1814 = vmatpush1.msra.mxu0 0.0
    %1815 = vmatprep.subr.mxu0 0.0
    %1816 = vmatpush1.msra.mxu0 0.0
    %1817 = vmatprep.subr.mxu0 0.0
    %1818 = vmatpush1.msra.mxu0 0.0
    %1819 = vmatprep.subr.mxu0 0.0
    %1820 = vmatpush1.msra.mxu0 0.0
    %1821 = vmatprep.subr.mxu0 0.0
    %1822 = vmatpush1.msra.mxu0 0.0
    %1823 = vmatprep.mubr.f32.mxu0 0.0
    %1824 = vmatmul.mubr.f32.gmra.mrb[0].mxu0 %v1662
    %v1825 = vpop.f32.mrb[0].mxu0
    %v1826 = vadd.f32 0.0, %v1825
    %v1827 = vpop.f32.mrb[0].mxu0
    %1828 = vdwg.mxu0
    %v1830 = vrot.slane %v1826, 6
    %v1832 = vadd.f32 %v259, %v1830
    %v1833 = vxor.u32 %v1832, 2147483648
    %v1834 = vmul.f32 %v1833, 1.442695
    %v1835 = vpow.pop %v1834
    %v1836 = vadd.f32 %v1835, 1.0
    %v1837 = vrcp.pop %v1836
    %v1838 = vmul.f32 1.0, %v1837
    %v1839 = vtanh.pop %v1832
    %v1841 = vrot.slane %v1577, 6
    %v1843 = vmul.f32 %v1838, %v1841
    %1845 = vrot.lane.b32.xlu0 %v1839, 64
    %v1846 = vpop.permute.xlu0 %1845
    %v1848 = vmul.f32 %v1838, %v1846
    %1850 = vrot.lane.b32.xlu0 %v1848, 32
    %v1851 = vpop.permute.xlu0 %1850
    %v1853 = vadd.f32 %v1843, %v1851
    %v1854 = vtanh.pop %v1853
    %1856 = vrot.lane.b32.xlu0 %v1854, 64
    %v1857 = vpop.permute.xlu0 %1856
    %v1859 = vmul.f32 %v1838, %v1857
    %1861 = vrot.lane.b32.xlu0 %v1758, 32
    %v1862 = vpop.permute.xlu0 %1861
    %v1863 = vsel %vm386, %v1862, 0
    %1865 = vmatprep.subr.mxu0 0.0
    %1866 = vmatpush1.msra.mxu0 %v375
    %1867 = vmatprep.subr.mxu0 0.0
    %1868 = vmatpush1.msra.mxu0 %v376
    %1869 = vmatprep.subr.mxu0 0.0
    %1870 = vmatpush1.msra.mxu0 %v377
    %1871 = vmatprep.subr.mxu0 0.0
    %1872 = vmatpush1.msra.mxu0 %v378
    %1873 = vmatprep.subr.mxu0 0.0
    %1874 = vmatpush1.msra.mxu0 0.0
    %1875 = vmatprep.subr.mxu0 0.0
    %1876 = vmatpush1.msra.mxu0 0.0
    %1877 = vmatprep.subr.mxu0 0.0
    %1878 = vmatpush1.msra.mxu0 0.0
    %1879 = vmatprep.subr.mxu0 0.0
    %1880 = vmatpush1.msra.mxu0 0.0
    %1881 = vmatprep.subr.mxu0 0.0
    %1882 = vmatpush1.msra.mxu0 0.0
    %1883 = vmatprep.subr.mxu0 0.0
    %1884 = vmatpush1.msra.mxu0 0.0
    %1885 = vmatprep.subr.mxu0 0.0
    %1886 = vmatpush1.msra.mxu0 0.0
    %1887 = vmatprep.subr.mxu0 0.0
    %1888 = vmatpush1.msra.mxu0 0.0
    %1889 = vmatprep.subr.mxu0 0.0
    %1890 = vmatpush1.msra.mxu0 0.0
    %1891 = vmatprep.subr.mxu0 0.0
    %1892 = vmatpush1.msra.mxu0 0.0
    %1893 = vmatprep.subr.mxu0 0.0
    %1894 = vmatpush1.msra.mxu0 0.0
    %1895 = vmatprep.subr.mxu0 0.0
    %1896 = vmatpush1.msra.mxu0 0.0
    %1897 = vmatprep.subr.mxu0 0.0
    %1898 = vmatpush1.msra.mxu0 0.0
    %1899 = vmatprep.subr.mxu0 0.0
    %1900 = vmatpush1.msra.mxu0 0.0
    %1901 = vmatprep.subr.mxu0 0.0
    %1902 = vmatpush1.msra.mxu0 0.0
    %1903 = vmatprep.subr.mxu0 0.0
    %1904 = vmatpush1.msra.mxu0 0.0
    %1905 = vmatprep.subr.mxu0 0.0
    %1906 = vmatpush1.msra.mxu0 0.0
    %1907 = vmatprep.subr.mxu0 0.0
    %1908 = vmatpush1.msra.mxu0 0.0
    %1909 = vmatprep.subr.mxu0 0.0
    %1910 = vmatpush1.msra.mxu0 0.0
    %1911 = vmatprep.subr.mxu0 0.0
    %1912 = vmatpush1.msra.mxu0 0.0
    %1913 = vmatprep.subr.mxu0 0.0
    %1914 = vmatpush1.msra.mxu0 0.0
    %1915 = vmatprep.subr.mxu0 0.0
    %1916 = vmatpush1.msra.mxu0 0.0
    %1917 = vmatprep.subr.mxu0 0.0
    %1918 = vmatpush1.msra.mxu0 0.0
    %1919 = vmatprep.subr.mxu0 0.0
    %1920 = vmatpush1.msra.mxu0 0.0
    %1921 = vmatprep.subr.mxu0 0.0
    %1922 = vmatpush1.msra.mxu0 0.0
    %1923 = vmatprep.subr.mxu0 0.0
    %1924 = vmatpush1.msra.mxu0 0.0
    %1925 = vmatprep.subr.mxu0 0.0
    %1926 = vmatpush1.msra.mxu0 0.0
    %1927 = vmatprep.subr.mxu0 0.0
    %1928 = vmatpush1.msra.mxu0 0.0
    %1929 = vmatprep.mubr.f32.mxu0 0.0
    %1930 = vmatmul.mubr.f32.gmra.mrb[0].mxu0 %v1863
    %v1931 = vpop.f32.mrb[0].mxu0
    %v1932 = vadd.f32 0.0, %v1931
    %v1933 = vpop.f32.mrb[0].mxu0
    %1934 = vdwg.mxu0
    %v1936 = vrot.slane %v1859, 2
    %1937 = vrot.lane.b32.xlu0 %v1936, 32
    %v1938 = vpop.permute.xlu0 %1937
    %v1939 = vsel %vm386, %v1938, 0
    %1941 = vmatprep.subr.mxu0 0.0
    %1942 = vmatpush1.msra.mxu0 %v371
    %1943 = vmatprep.subr.mxu0 0.0
    %1944 = vmatpush1.msra.mxu0 %v372
    %1945 = vmatprep.subr.mxu0 0.0
    %1946 = vmatpush1.msra.mxu0 %v373
    %1947 = vmatprep.subr.mxu0 0.0
    %1948 = vmatpush1.msra.mxu0 %v374
    %1949 = vmatprep.subr.mxu0 0.0
    %1950 = vmatpush1.msra.mxu0 0.0
    %1951 = vmatprep.subr.mxu0 0.0
    %1952 = vmatpush1.msra.mxu0 0.0
    %1953 = vmatprep.subr.mxu0 0.0
    %1954 = vmatpush1.msra.mxu0 0.0
    %1955 = vmatprep.subr.mxu0 0.0
    %1956 = vmatpush1.msra.mxu0 0.0
    %1957 = vmatprep.subr.mxu0 0.0
    %1958 = vmatpush1.msra.mxu0 0.0
    %1959 = vmatprep.subr.mxu0 0.0
    %1960 = vmatpush1.msra.mxu0 0.0
    %1961 = vmatprep.subr.mxu0 0.0
    %1962 = vmatpush1.msra.mxu0 0.0
    %1963 = vmatprep.subr.mxu0 0.0
    %1964 = vmatpush1.msra.mxu0 0.0
    %1965 = vmatprep.subr.mxu0 0.0
    %1966 = vmatpush1.msra.mxu0 0.0
    %1967 = vmatprep.subr.mxu0 0.0
    %1968 = vmatpush1.msra.mxu0 0.0
    %1969 = vmatprep.subr.mxu0 0.0
    %1970 = vmatpush1.msra.mxu0 0.0
    %1971 = vmatprep.subr.mxu0 0.0
    %1972 = vmatpush1.msra.mxu0 0.0
    %1973 = vmatprep.subr.mxu0 0.0
    %1974 = vmatpush1.msra.mxu0 0.0
    %1975 = vmatprep.subr.mxu0 0.0
    %1976 = vmatpush1.msra.mxu0 0.0
    %1977 = vmatprep.subr.mxu0 0.0
    %1978 = vmatpush1.msra.mxu0 0.0
    %1979 = vmatprep.subr.mxu0 0.0
    %1980 = vmatpush1.msra.mxu0 0.0
    %1981 = vmatprep.subr.mxu0 0.0
    %1982 = vmatpush1.msra.mxu0 0.0
    %1983 = vmatprep.subr.mxu0 0.0
    %1984 = vmatpush1.msra.mxu0 0.0
    %1985 = vmatprep.subr.mxu0 0.0
    %1986 = vmatpush1.msra.mxu0 0.0
    %1987 = vmatprep.subr.mxu0 0.0
    %1988 = vmatpush1.msra.mxu0 0.0
    %1989 = vmatprep.subr.mxu0 0.0
    %1990 = vmatpush1.msra.mxu0 0.0
    %1991 = vmatprep.subr.mxu0 0.0
    %1992 = vmatpush1.msra.mxu0 0.0
    %1993 = vmatprep.subr.mxu0 0.0
    %1994 = vmatpush1.msra.mxu0 0.0
    %1995 = vmatprep.subr.mxu0 0.0
    %1996 = vmatpush1.msra.mxu0 0.0
    %1997 = vmatprep.subr.mxu0 0.0
    %1998 = vmatpush1.msra.mxu0 0.0
    %1999 = vmatprep.subr.mxu0 0.0
    %2000 = vmatpush1.msra.mxu0 0.0
    %2001 = vmatprep.subr.mxu0 0.0
    %2002 = vmatpush1.msra.mxu0 0.0
    %2003 = vmatprep.subr.mxu0 0.0
    %2004 = vmatpush1.msra.mxu0 0.0
    %2005 = vmatprep.mubr.f32.mxu0 0.0
    %2006 = vmatmul.mubr.f32.gmra.mrb[0].mxu0 %v1939
    %v2007 = vpop.f32.mrb[0].mxu0
    %v2008 = vadd.f32 %v1932, %v2007
    %v2009 = vpop.f32.mrb[0].mxu0
    %2010 = vdwg.mxu0
    %v2011 = vadd.f32 %v2008, %v384
    %v2012 = vxor.u32 %v2011, 2147483648
    %v2013 = vmul.f32 %v2012, 1.442695
    %v2014 = vpow.pop %v2013
    %v2015 = vadd.f32 %v2014, 1.0
    %v2016 = vrcp.pop %v2015
    %v2017 = vmul.f32 1.0, %v2016
    %v2018 = vtanh.pop %v2011
    %v2019 = vmul.f32 %v2017, %v1752
    %2021 = vrot.lane.b32.xlu0 %v2018, 64
    %v2022 = vpop.permute.xlu0 %2021
    %v2024 = vmul.f32 %v2017, %v2022
    %2026 = vrot.lane.b32.xlu0 %v2024, 32
    %v2027 = vpop.permute.xlu0 %2026
    %v2029 = vadd.f32 %v2019, %v2027
    %v2030 = vtanh.pop %v2029
    %2032 = vrot.lane.b32.xlu0 %v2030, 64
    %v2033 = vpop.permute.xlu0 %2032
    %v2035 = vmul.f32 %v2017, %v2033
    %2036 = vmatprep.subr.mxu0 0.0
    %2037 = vmatpush1.msra.mxu0 %v367
    %2038 = vmatprep.subr.mxu0 0.0
    %2039 = vmatpush1.msra.mxu0 %v368
    %2040 = vmatprep.subr.mxu0 0.0
    %2041 = vmatpush1.msra.mxu0 %v369
    %2042 = vmatprep.subr.mxu0 0.0
    %2043 = vmatpush1.msra.mxu0 %v370
    %2044 = vmatprep.subr.mxu0 0.0
    %2045 = vmatpush1.msra.mxu0 0.0
    %2046 = vmatprep.subr.mxu0 0.0
    %2047 = vmatpush1.msra.mxu0 0.0
    %2048 = vmatprep.subr.mxu0 0.0
    %2049 = vmatpush1.msra.mxu0 0.0
    %2050 = vmatprep.subr.mxu0 0.0
    %2051 = vmatpush1.msra.mxu0 0.0
    %2052 = vmatprep.subr.mxu0 0.0
    %2053 = vmatpush1.msra.mxu0 0.0
    %2054 = vmatprep.subr.mxu0 0.0
    %2055 = vmatpush1.msra.mxu0 0.0
    %2056 = vmatprep.subr.mxu0 0.0
    %2057 = vmatpush1.msra.mxu0 0.0
    %2058 = vmatprep.subr.mxu0 0.0
    %2059 = vmatpush1.msra.mxu0 0.0
    %2060 = vmatprep.subr.mxu0 0.0
    %2061 = vmatpush1.msra.mxu0 0.0
    %2062 = vmatprep.subr.mxu0 0.0
    %2063 = vmatpush1.msra.mxu0 0.0
    %2064 = vmatprep.subr.mxu0 0.0
    %2065 = vmatpush1.msra.mxu0 0.0
    %2066 = vmatprep.subr.mxu0 0.0
    %2067 = vmatpush1.msra.mxu0 0.0
    %2068 = vmatprep.subr.mxu0 0.0
    %2069 = vmatpush1.msra.mxu0 0.0
    %2070 = vmatprep.subr.mxu0 0.0
    %2071 = vmatpush1.msra.mxu0 0.0
    %2072 = vmatprep.subr.mxu0 0.0
    %2073 = vmatpush1.msra.mxu0 0.0
    %2074 = vmatprep.subr.mxu0 0.0
    %2075 = vmatpush1.msra.mxu0 0.0
    %2076 = vmatprep.subr.mxu0 0.0
    %2077 = vmatpush1.msra.mxu0 0.0
    %2078 = vmatprep.subr.mxu0 0.0
    %2079 = vmatpush1.msra.mxu0 0.0
    %2080 = vmatprep.subr.mxu0 0.0
    %2081 = vmatpush1.msra.mxu0 0.0
    %2082 = vmatprep.subr.mxu0 0.0
    %2083 = vmatpush1.msra.mxu0 0.0
    %2084 = vmatprep.subr.mxu0 0.0
    %2085 = vmatpush1.msra.mxu0 0.0
    %2086 = vmatprep.subr.mxu0 0.0
    %2087 = vmatpush1.msra.mxu0 0.0
    %2088 = vmatprep.subr.mxu0 0.0
    %2089 = vmatpush1.msra.mxu0 0.0
    %2090 = vmatprep.subr.mxu0 0.0
    %2091 = vmatpush1.msra.mxu0 0.0
    %2092 = vmatprep.subr.mxu0 0.0
    %2093 = vmatpush1.msra.mxu0 0.0
    %2094 = vmatprep.subr.mxu0 0.0
    %2095 = vmatpush1.msra.mxu0 0.0
    %2096 = vmatprep.subr.mxu0 0.0
    %2097 = vmatpush1.msra.mxu0 0.0
    %2098 = vmatprep.subr.mxu0 0.0
    %2099 = vmatpush1.msra.mxu0 0.0
    %2100 = vmatprep.mubr.f32.mxu0 0.0
    %2101 = vmatmul.mubr.f32.gmra.mrb[0].mxu0 %v1939
    %v2102 = vpop.f32.mrb[0].mxu0
    %v2103 = vadd.f32 0.0, %v2102
    %v2104 = vpop.f32.mrb[0].mxu0
    %2105 = vdwg.mxu0
    %v2107 = vrot.slane %v2103, 4
    %v2109 = vadd.f32 %v259, %v2107
    %v2110 = vxor.u32 %v2109, 2147483648
    %v2111 = vmul.f32 %v2110, 1.442695
    %v2112 = vpow.pop %v2111
    %v2113 = vadd.f32 %v2112, 1.0
    %v2114 = vrcp.pop %v2113
    %v2115 = vmul.f32 1.0, %v2114
    %v2116 = vtanh.pop %v2109
    %v2118 = vrot.slane %v1853, 6
    %v2120 = vmul.f32 %v2115, %v2118
    %2122 = vrot.lane.b32.xlu0 %v2116, 64
    %v2123 = vpop.permute.xlu0 %2122
    %v2125 = vmul.f32 %v2115, %v2123
    %2127 = vrot.lane.b32.xlu0 %v2125, 32
    %v2128 = vpop.permute.xlu0 %2127
    %v2130 = vadd.f32 %v2120, %v2128
    %v2131 = vtanh.pop %v2130
    %2133 = vrot.lane.b32.xlu0 %v2131, 64
    %v2134 = vpop.permute.xlu0 %2133
    %v2136 = vmul.f32 %v2115, %v2134
    %2138 = vrot.lane.b32.xlu0 %v2035, 32
    %v2139 = vpop.permute.xlu0 %2138
    %v2140 = vsel %vm386, %v2139, 0
    %2142 = vmatprep.subr.mxu0 0.0
    %2143 = vmatpush1.msra.mxu0 %v375
    %2144 = vmatprep.subr.mxu0 0.0
    %2145 = vmatpush1.msra.mxu0 %v376
    %2146 = vmatprep.subr.mxu0 0.0
    %2147 = vmatpush1.msra.mxu0 %v377
    %2148 = vmatprep.subr.mxu0 0.0
    %2149 = vmatpush1.msra.mxu0 %v378
    %2150 = vmatprep.subr.mxu0 0.0
    %2151 = vmatpush1.msra.mxu0 0.0
    %2152 = vmatprep.subr.mxu0 0.0
    %2153 = vmatpush1.msra.mxu0 0.0
    %2154 = vmatprep.subr.mxu0 0.0
    %2155 = vmatpush1.msra.mxu0 0.0
    %2156 = vmatprep.subr.mxu0 0.0
    %2157 = vmatpush1.msra.mxu0 0.0
    %2158 = vmatprep.subr.mxu0 0.0
    %2159 = vmatpush1.msra.mxu0 0.0
    %2160 = vmatprep.subr.mxu0 0.0
    %2161 = vmatpush1.msra.mxu0 0.0
    %2162 = vmatprep.subr.mxu0 0.0
    %2163 = vmatpush1.msra.mxu0 0.0
    %2164 = vmatprep.subr.mxu0 0.0
    %2165 = vmatpush1.msra.mxu0 0.0
    %2166 = vmatprep.subr.mxu0 0.0
    %2167 = vmatpush1.msra.mxu0 0.0
    %2168 = vmatprep.subr.mxu0 0.0
    %2169 = vmatpush1.msra.mxu0 0.0
    %2170 = vmatprep.subr.mxu0 0.0
    %2171 = vmatpush1.msra.mxu0 0.0
    %2172 = vmatprep.subr.mxu0 0.0
    %2173 = vmatpush1.msra.mxu0 0.0
    %2174 = vmatprep.subr.mxu0 0.0
    %2175 = vmatpush1.msra.mxu0 0.0
    %2176 = vmatprep.subr.mxu0 0.0
    %2177 = vmatpush1.msra.mxu0 0.0
    %2178 = vmatprep.subr.mxu0 0.0
    %2179 = vmatpush1.msra.mxu0 0.0
    %2180 = vmatprep.subr.mxu0 0.0
    %2181 = vmatpush1.msra.mxu0 0.0
    %2182 = vmatprep.subr.mxu0 0.0
    %2183 = vmatpush1.msra.mxu0 0.0
    %2184 = vmatprep.subr.mxu0 0.0
    %2185 = vmatpush1.msra.mxu0 0.0
    %2186 = vmatprep.subr.mxu0 0.0
    %2187 = vmatpush1.msra.mxu0 0.0
    %2188 = vmatprep.subr.mxu0 0.0
    %2189 = vmatpush1.msra.mxu0 0.0
    %2190 = vmatprep.subr.mxu0 0.0
    %2191 = vmatpush1.msra.mxu0 0.0
    %2192 = vmatprep.subr.mxu0 0.0
    %2193 = vmatpush1.msra.mxu0 0.0
    %2194 = vmatprep.subr.mxu0 0.0
    %2195 = vmatpush1.msra.mxu0 0.0
    %2196 = vmatprep.subr.mxu0 0.0
    %2197 = vmatpush1.msra.mxu0 0.0
    %2198 = vmatprep.subr.mxu0 0.0
    %2199 = vmatpush1.msra.mxu0 0.0
    %2200 = vmatprep.subr.mxu0 0.0
    %2201 = vmatpush1.msra.mxu0 0.0
    %2202 = vmatprep.subr.mxu0 0.0
    %2203 = vmatpush1.msra.mxu0 0.0
    %2204 = vmatprep.subr.mxu0 0.0
    %2205 = vmatpush1.msra.mxu0 0.0
    %2206 = vmatprep.mubr.f32.mxu0 0.0
    %2207 = vmatmul.mubr.f32.gmra.mrb[0].mxu0 %v2140
    %v2208 = vpop.f32.mrb[0].mxu0
    %v2209 = vadd.f32 0.0, %v2208
    %v2210 = vpop.f32.mrb[0].mxu0
    %2211 = vdwg.mxu0
    %v2213 = vrot.slane %v2136, 4
    %2214 = vrot.lane.b32.xlu0 %v2213, 32
    %v2215 = vpop.permute.xlu0 %2214
    %v2216 = vsel %vm386, %v2215, 0
    %2218 = vmatprep.subr.mxu0 0.0
    %2219 = vmatpush1.msra.mxu0 %v371
    %2220 = vmatprep.subr.mxu0 0.0
    %2221 = vmatpush1.msra.mxu0 %v372
    %2222 = vmatprep.subr.mxu0 0.0
    %2223 = vmatpush1.msra.mxu0 %v373
    %2224 = vmatprep.subr.mxu0 0.0
    %2225 = vmatpush1.msra.mxu0 %v374
    %2226 = vmatprep.subr.mxu0 0.0
    %2227 = vmatpush1.msra.mxu0 0.0
    %2228 = vmatprep.subr.mxu0 0.0
    %2229 = vmatpush1.msra.mxu0 0.0
    %2230 = vmatprep.subr.mxu0 0.0
    %2231 = vmatpush1.msra.mxu0 0.0
    %2232 = vmatprep.subr.mxu0 0.0
    %2233 = vmatpush1.msra.mxu0 0.0
    %2234 = vmatprep.subr.mxu0 0.0
    %2235 = vmatpush1.msra.mxu0 0.0
    %2236 = vmatprep.subr.mxu0 0.0
    %2237 = vmatpush1.msra.mxu0 0.0
    %2238 = vmatprep.subr.mxu0 0.0
    %2239 = vmatpush1.msra.mxu0 0.0
    %2240 = vmatprep.subr.mxu0 0.0
    %2241 = vmatpush1.msra.mxu0 0.0
    %2242 = vmatprep.subr.mxu0 0.0
    %2243 = vmatpush1.msra.mxu0 0.0
    %2244 = vmatprep.subr.mxu0 0.0
    %2245 = vmatpush1.msra.mxu0 0.0
    %2246 = vmatprep.subr.mxu0 0.0
    %2247 = vmatpush1.msra.mxu0 0.0
    %2248 = vmatprep.subr.mxu0 0.0
    %2249 = vmatpush1.msra.mxu0 0.0
    %2250 = vmatprep.subr.mxu0 0.0
    %2251 = vmatpush1.msra.mxu0 0.0
    %2252 = vmatprep.subr.mxu0 0.0
    %2253 = vmatpush1.msra.mxu0 0.0
    %2254 = vmatprep.subr.mxu0 0.0
    %2255 = vmatpush1.msra.mxu0 0.0
    %2256 = vmatprep.subr.mxu0 0.0
    %2257 = vmatpush1.msra.mxu0 0.0
    %2258 = vmatprep.subr.mxu0 0.0
    %2259 = vmatpush1.msra.mxu0 0.0
    %2260 = vmatprep.subr.mxu0 0.0
    %2261 = vmatpush1.msra.mxu0 0.0
    %2262 = vmatprep.subr.mxu0 0.0
    %2263 = vmatpush1.msra.mxu0 0.0
    %2264 = vmatprep.subr.mxu0 0.0
    %2265 = vmatpush1.msra.mxu0 0.0
    %2266 = vmatprep.subr.mxu0 0.0
    %2267 = vmatpush1.msra.mxu0 0.0
    %2268 = vmatprep.subr.mxu0 0.0
    %2269 = vmatpush1.msra.mxu0 0.0
    %2270 = vmatprep.subr.mxu0 0.0
    %2271 = vmatpush1.msra.mxu0 0.0
    %2272 = vmatprep.subr.mxu0 0.0
    %2273 = vmatpush1.msra.mxu0 0.0
    %2274 = vmatprep.subr.mxu0 0.0
    %2275 = vmatpush1.msra.mxu0 0.0
    %2276 = vmatprep.subr.mxu0 0.0
    %2277 = vmatpush1.msra.mxu0 0.0
    %2278 = vmatprep.subr.mxu0 0.0
    %2279 = vmatpush1.msra.mxu0 0.0
    %2280 = vmatprep.subr.mxu0 0.0
    %2281 = vmatpush1.msra.mxu0 0.0
    %2282 = vmatprep.mubr.f32.mxu0 0.0
    %2283 = vmatmul.mubr.f32.gmra.mrb[0].mxu0 %v2216
    %v2284 = vpop.f32.mrb[0].mxu0
    %v2285 = vadd.f32 %v2209, %v2284
    %v2286 = vpop.f32.mrb[0].mxu0
    %2287 = vdwg.mxu0
    %v2288 = vadd.f32 %v2285, %v384
    %v2289 = vxor.u32 %v2288, 2147483648
    %v2290 = vmul.f32 %v2289, 1.442695
    %v2291 = vpow.pop %v2290
    %v2292 = vadd.f32 %v2291, 1.0
    %v2293 = vrcp.pop %v2292
    %v2294 = vmul.f32 1.0, %v2293
    %v2295 = vtanh.pop %v2288
    %v2296 = vmul.f32 %v2294, %v2029
    %2298 = vrot.lane.b32.xlu0 %v2295, 64
    %v2299 = vpop.permute.xlu0 %2298
    %v2301 = vmul.f32 %v2294, %v2299
    %2303 = vrot.lane.b32.xlu0 %v2301, 32
    %v2304 = vpop.permute.xlu0 %2303
    %v2306 = vadd.f32 %v2296, %v2304
    %v2307 = vtanh.pop %v2306
    %2309 = vrot.lane.b32.xlu0 %v2307, 64
    %v2310 = vpop.permute.xlu0 %2309
    %v2312 = vmul.f32 %v2294, %v2310
    %2313 = vmatprep.subr.mxu0 0.0
    %2314 = vmatpush1.msra.mxu0 %v367
    %2315 = vmatprep.subr.mxu0 0.0
    %2316 = vmatpush1.msra.mxu0 %v368
    %2317 = vmatprep.subr.mxu0 0.0
    %2318 = vmatpush1.msra.mxu0 %v369
    %2319 = vmatprep.subr.mxu0 0.0
    %2320 = vmatpush1.msra.mxu0 %v370
    %2321 = vmatprep.subr.mxu0 0.0
    %2322 = vmatpush1.msra.mxu0 0.0
    %2323 = vmatprep.subr.mxu0 0.0
    %2324 = vmatpush1.msra.mxu0 0.0
    %2325 = vmatprep.subr.mxu0 0.0
    %2326 = vmatpush1.msra.mxu0 0.0
    %2327 = vmatprep.subr.mxu0 0.0
    %2328 = vmatpush1.msra.mxu0 0.0
    %2329 = vmatprep.subr.mxu0 0.0
    %2330 = vmatpush1.msra.mxu0 0.0
    %2331 = vmatprep.subr.mxu0 0.0
    %2332 = vmatpush1.msra.mxu0 0.0
    %2333 = vmatprep.subr.mxu0 0.0
    %2334 = vmatpush1.msra.mxu0 0.0
    %2335 = vmatprep.subr.mxu0 0.0
    %2336 = vmatpush1.msra.mxu0 0.0
    %2337 = vmatprep.subr.mxu0 0.0
    %2338 = vmatpush1.msra.mxu0 0.0
    %2339 = vmatprep.subr.mxu0 0.0
    %2340 = vmatpush1.msra.mxu0 0.0
    %2341 = vmatprep.subr.mxu0 0.0
    %2342 = vmatpush1.msra.mxu0 0.0
    %2343 = vmatprep.subr.mxu0 0.0
    %2344 = vmatpush1.msra.mxu0 0.0
    %2345 = vmatprep.subr.mxu0 0.0
    %2346 = vmatpush1.msra.mxu0 0.0
    %2347 = vmatprep.subr.mxu0 0.0
    %2348 = vmatpush1.msra.mxu0 0.0
    %2349 = vmatprep.subr.mxu0 0.0
    %2350 = vmatpush1.msra.mxu0 0.0
    %2351 = vmatprep.subr.mxu0 0.0
    %2352 = vmatpush1.msra.mxu0 0.0
    %2353 = vmatprep.subr.mxu0 0.0
    %2354 = vmatpush1.msra.mxu0 0.0
    %2355 = vmatprep.subr.mxu0 0.0
    %2356 = vmatpush1.msra.mxu0 0.0
    %2357 = vmatprep.subr.mxu0 0.0
    %2358 = vmatpush1.msra.mxu0 0.0
    %2359 = vmatprep.subr.mxu0 0.0
    %2360 = vmatpush1.msra.mxu0 0.0
    %2361 = vmatprep.subr.mxu0 0.0
    %2362 = vmatpush1.msra.mxu0 0.0
    %2363 = vmatprep.subr.mxu0 0.0
    %2364 = vmatpush1.msra.mxu0 0.0
    %2365 = vmatprep.subr.mxu0 0.0
    %2366 = vmatpush1.msra.mxu0 0.0
    %2367 = vmatprep.subr.mxu0 0.0
    %2368 = vmatpush1.msra.mxu0 0.0
    %2369 = vmatprep.subr.mxu0 0.0
    %2370 = vmatpush1.msra.mxu0 0.0
    %2371 = vmatprep.subr.mxu0 0.0
    %2372 = vmatpush1.msra.mxu0 0.0
    %2373 = vmatprep.subr.mxu0 0.0
    %2374 = vmatpush1.msra.mxu0 0.0
    %2375 = vmatprep.subr.mxu0 0.0
    %2376 = vmatpush1.msra.mxu0 0.0
    %2377 = vmatprep.mubr.f32.mxu0 0.0
    %2378 = vmatmul.mubr.f32.gmra.mrb[0].mxu0 %v2216
    %v2379 = vpop.f32.mrb[0].mxu0
    %v2380 = vadd.f32 0.0, %v2379
    %v2381 = vpop.f32.mrb[0].mxu0
    %2382 = vdwg.mxu0
    %v2384 = vrot.slane %v2380, 2
    %v2386 = vadd.f32 %v259, %v2384
    %v2387 = vxor.u32 %v2386, 2147483648
    %v2388 = vmul.f32 %v2387, 1.442695
    %v2389 = vpow.pop %v2388
    %v2390 = vadd.f32 %v2389, 1.0
    %v2391 = vrcp.pop %v2390
    %v2392 = vmul.f32 1.0, %v2391
    %v2393 = vtanh.pop %v2386
    %v2395 = vrot.slane %v2130, 6
    %v2397 = vmul.f32 %v2392, %v2395
    %2399 = vrot.lane.b32.xlu0 %v2393, 64
    %v2400 = vpop.permute.xlu0 %2399
    %v2402 = vmul.f32 %v2392, %v2400
    %2404 = vrot.lane.b32.xlu0 %v2402, 32
    %v2405 = vpop.permute.xlu0 %2404
    %v2407 = vadd.f32 %v2397, %v2405
    %v2408 = vtanh.pop %v2407
    %2410 = vrot.lane.b32.xlu0 %v2408, 64
    %v2411 = vpop.permute.xlu0 %2410
    %v2413 = vmul.f32 %v2392, %v2411
    %2415 = vrot.lane.b32.xlu0 %v2312, 32
    %v2416 = vpop.permute.xlu0 %2415
    %v2417 = vsel %vm386, %v2416, 0
    %2419 = vmatprep.subr.mxu0 0.0
    %2420 = vmatpush1.msra.mxu0 %v375
    %2421 = vmatprep.subr.mxu0 0.0
    %2422 = vmatpush1.msra.mxu0 %v376
    %2423 = vmatprep.subr.mxu0 0.0
    %2424 = vmatpush1.msra.mxu0 %v377
    %2425 = vmatprep.subr.mxu0 0.0
    %2426 = vmatpush1.msra.mxu0 %v378
    %2427 = vmatprep.subr.mxu0 0.0
    %2428 = vmatpush1.msra.mxu0 0.0
    %2429 = vmatprep.subr.mxu0 0.0
    %2430 = vmatpush1.msra.mxu0 0.0
    %2431 = vmatprep.subr.mxu0 0.0
    %2432 = vmatpush1.msra.mxu0 0.0
    %2433 = vmatprep.subr.mxu0 0.0
    %2434 = vmatpush1.msra.mxu0 0.0
    %2435 = vmatprep.subr.mxu0 0.0
    %2436 = vmatpush1.msra.mxu0 0.0
    %2437 = vmatprep.subr.mxu0 0.0
    %2438 = vmatpush1.msra.mxu0 0.0
    %2439 = vmatprep.subr.mxu0 0.0
    %2440 = vmatpush1.msra.mxu0 0.0
    %2441 = vmatprep.subr.mxu0 0.0
    %2442 = vmatpush1.msra.mxu0 0.0
    %2443 = vmatprep.subr.mxu0 0.0
    %2444 = vmatpush1.msra.mxu0 0.0
    %2445 = vmatprep.subr.mxu0 0.0
    %2446 = vmatpush1.msra.mxu0 0.0
    %2447 = vmatprep.subr.mxu0 0.0
    %2448 = vmatpush1.msra.mxu0 0.0
    %2449 = vmatprep.subr.mxu0 0.0
    %2450 = vmatpush1.msra.mxu0 0.0
    %2451 = vmatprep.subr.mxu0 0.0
    %2452 = vmatpush1.msra.mxu0 0.0
    %2453 = vmatprep.subr.mxu0 0.0
    %2454 = vmatpush1.msra.mxu0 0.0
    %2455 = vmatprep.subr.mxu0 0.0
    %2456 = vmatpush1.msra.mxu0 0.0
    %2457 = vmatprep.subr.mxu0 0.0
    %2458 = vmatpush1.msra.mxu0 0.0
    %2459 = vmatprep.subr.mxu0 0.0
    %2460 = vmatpush1.msra.mxu0 0.0
    %2461 = vmatprep.subr.mxu0 0.0
    %2462 = vmatpush1.msra.mxu0 0.0
    %2463 = vmatprep.subr.mxu0 0.0
    %2464 = vmatpush1.msra.mxu0 0.0
    %2465 = vmatprep.subr.mxu0 0.0
    %2466 = vmatpush1.msra.mxu0 0.0
    %2467 = vmatprep.subr.mxu0 0.0
    %2468 = vmatpush1.msra.mxu0 0.0
    %2469 = vmatprep.subr.mxu0 0.0
    %2470 = vmatpush1.msra.mxu0 0.0
    %2471 = vmatprep.subr.mxu0 0.0
    %2472 = vmatpush1.msra.mxu0 0.0
    %2473 = vmatprep.subr.mxu0 0.0
    %2474 = vmatpush1.msra.mxu0 0.0
    %2475 = vmatprep.subr.mxu0 0.0
    %2476 = vmatpush1.msra.mxu0 0.0
    %2477 = vmatprep.subr.mxu0 0.0
    %2478 = vmatpush1.msra.mxu0 0.0
    %2479 = vmatprep.subr.mxu0 0.0
    %2480 = vmatpush1.msra.mxu0 0.0
    %2481 = vmatprep.subr.mxu0 0.0
    %2482 = vmatpush1.msra.mxu0 0.0
    %2483 = vmatprep.mubr.f32.mxu0 0.0
    %2484 = vmatmul.mubr.f32.gmra.mrb[0].mxu0 %v2417
    %v2485 = vpop.f32.mrb[0].mxu0
    %v2486 = vadd.f32 0.0, %v2485
    %v2487 = vpop.f32.mrb[0].mxu0
    %2488 = vdwg.mxu0
    %v2490 = vrot.slane %v2413, 6
    %2491 = vrot.lane.b32.xlu0 %v2490, 32
    %v2492 = vpop.permute.xlu0 %2491
    %v2493 = vsel %vm386, %v2492, 0
    %2495 = vmatprep.subr.mxu0 0.0
    %2496 = vmatpush1.msra.mxu0 %v371
    %2497 = vmatprep.subr.mxu0 0.0
    %2498 = vmatpush1.msra.mxu0 %v372
    %2499 = vmatprep.subr.mxu0 0.0
    %2500 = vmatpush1.msra.mxu0 %v373
    %2501 = vmatprep.subr.mxu0 0.0
    %2502 = vmatpush1.msra.mxu0 %v374
    %2503 = vmatprep.subr.mxu0 0.0
    %2504 = vmatpush1.msra.mxu0 0.0
    %2505 = vmatprep.subr.mxu0 0.0
    %2506 = vmatpush1.msra.mxu0 0.0
    %2507 = vmatprep.subr.mxu0 0.0
    %2508 = vmatpush1.msra.mxu0 0.0
    %2509 = vmatprep.subr.mxu0 0.0
    %2510 = vmatpush1.msra.mxu0 0.0
    %2511 = vmatprep.subr.mxu0 0.0
    %2512 = vmatpush1.msra.mxu0 0.0
    %2513 = vmatprep.subr.mxu0 0.0
    %2514 = vmatpush1.msra.mxu0 0.0
    %2515 = vmatprep.subr.mxu0 0.0
    %2516 = vmatpush1.msra.mxu0 0.0
    %2517 = vmatprep.subr.mxu0 0.0
    %2518 = vmatpush1.msra.mxu0 0.0
    %2519 = vmatprep.subr.mxu0 0.0
    %2520 = vmatpush1.msra.mxu0 0.0
    %2521 = vmatprep.subr.mxu0 0.0
    %2522 = vmatpush1.msra.mxu0 0.0
    %2523 = vmatprep.subr.mxu0 0.0
    %2524 = vmatpush1.msra.mxu0 0.0
    %2525 = vmatprep.subr.mxu0 0.0
    %2526 = vmatpush1.msra.mxu0 0.0
    %2527 = vmatprep.subr.mxu0 0.0
    %2528 = vmatpush1.msra.mxu0 0.0
    %2529 = vmatprep.subr.mxu0 0.0
    %2530 = vmatpush1.msra.mxu0 0.0
    %2531 = vmatprep.subr.mxu0 0.0
    %2532 = vmatpush1.msra.mxu0 0.0
    %2533 = vmatprep.subr.mxu0 0.0
    %2534 = vmatpush1.msra.mxu0 0.0
    %2535 = vmatprep.subr.mxu0 0.0
    %2536 = vmatpush1.msra.mxu0 0.0
    %2537 = vmatprep.subr.mxu0 0.0
    %2538 = vmatpush1.msra.mxu0 0.0
    %2539 = vmatprep.subr.mxu0 0.0
    %2540 = vmatpush1.msra.mxu0 0.0
    %2541 = vmatprep.subr.mxu0 0.0
    %2542 = vmatpush1.msra.mxu0 0.0
    %2543 = vmatprep.subr.mxu0 0.0
    %2544 = vmatpush1.msra.mxu0 0.0
    %2545 = vmatprep.subr.mxu0 0.0
    %2546 = vmatpush1.msra.mxu0 0.0
    %2547 = vmatprep.subr.mxu0 0.0
    %2548 = vmatpush1.msra.mxu0 0.0
    %2549 = vmatprep.subr.mxu0 0.0
    %2550 = vmatpush1.msra.mxu0 0.0
    %2551 = vmatprep.subr.mxu0 0.0
    %2552 = vmatpush1.msra.mxu0 0.0
    %2553 = vmatprep.subr.mxu0 0.0
    %2554 = vmatpush1.msra.mxu0 0.0
    %2555 = vmatprep.subr.mxu0 0.0
    %2556 = vmatpush1.msra.mxu0 0.0
    %2557 = vmatprep.subr.mxu0 0.0
    %2558 = vmatpush1.msra.mxu0 0.0
    %2559 = vmatprep.mubr.f32.mxu0 0.0
    %2560 = vmatmul.mubr.f32.gmra.mrb[0].mxu0 %v2493
    %v2561 = vpop.f32.mrb[0].mxu0
    %v2562 = vadd.f32 %v2486, %v2561
    %v2563 = vpop.f32.mrb[0].mxu0
    %2564 = vdwg.mxu0
    %v2565 = vadd.f32 %v2562, %v384
    %v2566 = vxor.u32 %v2565, 2147483648
    %v2567 = vmul.f32 %v2566, 1.442695
    %v2568 = vpow.pop %v2567
    %v2569 = vadd.f32 %v2568, 1.0
    %v2570 = vrcp.pop %v2569
    %v2571 = vmul.f32 1.0, %v2570
    %v2572 = vtanh.pop %v2565
    %v2573 = vmul.f32 %v2571, %v2306
    %2575 = vrot.lane.b32.xlu0 %v2572, 64
    %v2576 = vpop.permute.xlu0 %2575
    %v2578 = vmul.f32 %v2571, %v2576
    %2580 = vrot.lane.b32.xlu0 %v2578, 32
    %v2581 = vpop.permute.xlu0 %2580
    %v2583 = vadd.f32 %v2573, %v2581
    %v2584 = vtanh.pop %v2583
    %2586 = vrot.lane.b32.xlu0 %v2584, 64
    %v2587 = vpop.permute.xlu0 %2586
    %v2589 = vmul.f32 %v2571, %v2587
    %v2590 = vld [vmem:[%s8] sm:$0xff]
    %v2591 = vld [vmem:[%s8 + $0x8] sm:$0xff]
    %v2592 = vld [vmem:[%s8 + $0x10] sm:$0xff]
    %v2593 = vld [vmem:[%s8 + $0x18] sm:$0xff]
    %v2594 = vld [vmem:[#allocation11] sm:$0xff]
    %v2595 = vld [vmem:[#allocation11 + $0x8] sm:$0xff]
    %v2596 = vld [vmem:[#allocation11 + $0x10] sm:$0xff]
    %v2597 = vld [vmem:[#allocation11 + $0x18] sm:$0xff]
    %v2598 = vld [vmem:[#allocation13] sm:$0xff]
    %v2599 = vld [vmem:[#allocation13 + $0x8] sm:$0xff]
    %v2600 = vld [vmem:[#allocation13 + $0x10] sm:$0xff]
    %v2601 = vld [vmem:[#allocation13 + $0x18] sm:$0xff]
    %v2602 = vld [vmem:[%s11] sm:$0x1]
    %v2604 = vlaneseq
    %v2605 = vshrl.u32 %v2604, 7
    %v2606 = vsub.s32 0, %v2605
    %v2607 = vrot.slane %v2602, %v2606
    %2609 = vmatprep.subr.mxu0 0.0
    %2610 = vmatpush1.msra.mxu0 %v2590
    %2611 = vmatprep.subr.mxu0 0.0
    %2612 = vmatpush1.msra.mxu0 %v2591
    %2613 = vmatprep.subr.mxu0 0.0
    %2614 = vmatpush1.msra.mxu0 %v2592
    %2615 = vmatprep.subr.mxu0 0.0
    %2616 = vmatpush1.msra.mxu0 %v2593
    %2617 = vmatprep.subr.mxu0 0.0
    %2618 = vmatpush1.msra.mxu0 0.0
    %2619 = vmatprep.subr.mxu0 0.0
    %2620 = vmatpush1.msra.mxu0 0.0
    %2621 = vmatprep.subr.mxu0 0.0
    %2622 = vmatpush1.msra.mxu0 0.0
    %2623 = vmatprep.subr.mxu0 0.0
    %2624 = vmatpush1.msra.mxu0 0.0
    %2625 = vmatprep.subr.mxu0 0.0
    %2626 = vmatpush1.msra.mxu0 0.0
    %2627 = vmatprep.subr.mxu0 0.0
    %2628 = vmatpush1.msra.mxu0 0.0
    %2629 = vmatprep.subr.mxu0 0.0
    %2630 = vmatpush1.msra.mxu0 0.0
    %2631 = vmatprep.subr.mxu0 0.0
    %2632 = vmatpush1.msra.mxu0 0.0
    %2633 = vmatprep.subr.mxu0 0.0
    %2634 = vmatpush1.msra.mxu0 0.0
    %2635 = vmatprep.subr.mxu0 0.0
    %2636 = vmatpush1.msra.mxu0 0.0
    %2637 = vmatprep.subr.mxu0 0.0
    %2638 = vmatpush1.msra.mxu0 0.0
    %2639 = vmatprep.subr.mxu0 0.0
    %2640 = vmatpush1.msra.mxu0 0.0
    %2641 = vmatprep.subr.mxu0 0.0
    %2642 = vmatpush1.msra.mxu0 0.0
    %2643 = vmatprep.subr.mxu0 0.0
    %2644 = vmatpush1.msra.mxu0 0.0
    %2645 = vmatprep.subr.mxu0 0.0
    %2646 = vmatpush1.msra.mxu0 0.0
    %2647 = vmatprep.subr.mxu0 0.0
    %2648 = vmatpush1.msra.mxu0 0.0
    %2649 = vmatprep.subr.mxu0 0.0
    %2650 = vmatpush1.msra.mxu0 0.0
    %2651 = vmatprep.subr.mxu0 0.0
    %2652 = vmatpush1.msra.mxu0 0.0
    %2653 = vmatprep.subr.mxu0 0.0
    %2654 = vmatpush1.msra.mxu0 0.0
    %2655 = vmatprep.subr.mxu0 0.0
    %2656 = vmatpush1.msra.mxu0 0.0
    %2657 = vmatprep.subr.mxu0 0.0
    %2658 = vmatpush1.msra.mxu0 0.0
    %2659 = vmatprep.subr.mxu0 0.0
    %2660 = vmatpush1.msra.mxu0 0.0
    %2661 = vmatprep.subr.mxu0 0.0
    %2662 = vmatpush1.msra.mxu0 0.0
    %2663 = vmatprep.subr.mxu0 0.0
    %2664 = vmatpush1.msra.mxu0 0.0
    %2665 = vmatprep.subr.mxu0 0.0
    %2666 = vmatpush1.msra.mxu0 0.0
    %2667 = vmatprep.subr.mxu0 0.0
    %2668 = vmatpush1.msra.mxu0 0.0
    %2669 = vmatprep.subr.mxu0 0.0
    %2670 = vmatpush1.msra.mxu0 0.0
    %2671 = vmatprep.subr.mxu0 0.0
    %2672 = vmatpush1.msra.mxu0 0.0
    %2673 = vmatprep.mubr.f32.mxu0 0.0
    %2674 = vmatmul.mubr.f32.gmra.mrb[0].mxu0 %v2493
    %v2675 = vpop.f32.mrb[0].mxu0
    %v2676 = vadd.f32 0.0, %v2675
    %v2677 = vpop.f32.mrb[0].mxu0
    %2678 = vdwg.mxu0
    %v2679 = vadd.f32 %v359, %v2676
    %v2680 = vxor.u32 %v2679, 2147483648
    %v2681 = vmul.f32 %v2680, 1.442695
    %v2682 = vpow.pop %v2681
    %v2683 = vadd.f32 %v2682, 1.0
    %v2684 = vrcp.pop %v2683
    %v2685 = vmul.f32 1.0, %v2684
    %v2686 = vtanh.pop %v2679
    %v2688 = vrot.slane %v2407, 6
    %v2690 = vmul.f32 %v2685, %v2688
    %2692 = vrot.lane.b32.xlu0 %v2686, 64
    %v2693 = vpop.permute.xlu0 %2692
    %v2695 = vmul.f32 %v2685, %v2693
    %2697 = vrot.lane.b32.xlu0 %v2695, 32
    %v2698 = vpop.permute.xlu0 %2697
    %v2700 = vadd.f32 %v2690, %v2698
    %v2701 = vtanh.pop %v2700
    %2703 = vrot.lane.b32.xlu0 %v2701, 64
    %v2704 = vpop.permute.xlu0 %2703
    %v2706 = vmul.f32 %v2685, %v2704
    %2708 = vrot.lane.b32.xlu0 %v2589, 32
    %v2709 = vpop.permute.xlu0 %2708
    %v2710 = vsel %vm386, %v2709, 0
    %2712 = vmatprep.subr.mxu0 0.0
    %2713 = vmatpush1.msra.mxu0 %v2598
    %2714 = vmatprep.subr.mxu0 0.0
    %2715 = vmatpush1.msra.mxu0 %v2599
    %2716 = vmatprep.subr.mxu0 0.0
    %2717 = vmatpush1.msra.mxu0 %v2600
    %2718 = vmatprep.subr.mxu0 0.0
    %2719 = vmatpush1.msra.mxu0 %v2601
    %2720 = vmatprep.subr.mxu0 0.0
    %2721 = vmatpush1.msra.mxu0 0.0
    %2722 = vmatprep.subr.mxu0 0.0
    %2723 = vmatpush1.msra.mxu0 0.0
    %2724 = vmatprep.subr.mxu0 0.0
    %2725 = vmatpush1.msra.mxu0 0.0
    %2726 = vmatprep.subr.mxu0 0.0
    %2727 = vmatpush1.msra.mxu0 0.0
    %2728 = vmatprep.subr.mxu0 0.0
    %2729 = vmatpush1.msra.mxu0 0.0
    %2730 = vmatprep.subr.mxu0 0.0
    %2731 = vmatpush1.msra.mxu0 0.0
    %2732 = vmatprep.subr.mxu0 0.0
    %2733 = vmatpush1.msra.mxu0 0.0
    %2734 = vmatprep.subr.mxu0 0.0
    %2735 = vmatpush1.msra.mxu0 0.0
    %2736 = vmatprep.subr.mxu0 0.0
    %2737 = vmatpush1.msra.mxu0 0.0
    %2738 = vmatprep.subr.mxu0 0.0
    %2739 = vmatpush1.msra.mxu0 0.0
    %2740 = vmatprep.subr.mxu0 0.0
    %2741 = vmatpush1.msra.mxu0 0.0
    %2742 = vmatprep.subr.mxu0 0.0
    %2743 = vmatpush1.msra.mxu0 0.0
    %2744 = vmatprep.subr.mxu0 0.0
    %2745 = vmatpush1.msra.mxu0 0.0
    %2746 = vmatprep.subr.mxu0 0.0
    %2747 = vmatpush1.msra.mxu0 0.0
    %2748 = vmatprep.subr.mxu0 0.0
    %2749 = vmatpush1.msra.mxu0 0.0
    %2750 = vmatprep.subr.mxu0 0.0
    %2751 = vmatpush1.msra.mxu0 0.0
    %2752 = vmatprep.subr.mxu0 0.0
    %2753 = vmatpush1.msra.mxu0 0.0
    %2754 = vmatprep.subr.mxu0 0.0
    %2755 = vmatpush1.msra.mxu0 0.0
    %2756 = vmatprep.subr.mxu0 0.0
    %2757 = vmatpush1.msra.mxu0 0.0
    %2758 = vmatprep.subr.mxu0 0.0
    %2759 = vmatpush1.msra.mxu0 0.0
    %2760 = vmatprep.subr.mxu0 0.0
    %2761 = vmatpush1.msra.mxu0 0.0
    %2762 = vmatprep.subr.mxu0 0.0
    %2763 = vmatpush1.msra.mxu0 0.0
    %2764 = vmatprep.subr.mxu0 0.0
    %2765 = vmatpush1.msra.mxu0 0.0
    %2766 = vmatprep.subr.mxu0 0.0
    %2767 = vmatpush1.msra.mxu0 0.0
    %2768 = vmatprep.subr.mxu0 0.0
    %2769 = vmatpush1.msra.mxu0 0.0
    %2770 = vmatprep.subr.mxu0 0.0
    %2771 = vmatpush1.msra.mxu0 0.0
    %2772 = vmatprep.subr.mxu0 0.0
    %2773 = vmatpush1.msra.mxu0 0.0
    %2774 = vmatprep.subr.mxu0 0.0
    %2775 = vmatpush1.msra.mxu0 0.0
    %2776 = vmatprep.mubr.f32.mxu0 0.0
    %2777 = vmatmul.mubr.f32.gmra.mrb[0].mxu0 %v2710
    %v2778 = vpop.f32.mrb[0].mxu0
    %v2779 = vadd.f32 0.0, %v2778
    %v2780 = vpop.f32.mrb[0].mxu0
    %2781 = vdwg.mxu0
    %2783 = vrot.lane.b32.xlu0 %v2706, 32
    %v2784 = vpop.permute.xlu0 %2783
    %v2785 = vsel %vm386, %v2784, 0
    %2787 = vmatprep.subr.mxu0 0.0
    %2788 = vmatpush1.msra.mxu0 %v2594
    %2789 = vmatprep.subr.mxu0 0.0
    %2790 = vmatpush1.msra.mxu0 %v2595
    %2791 = vmatprep.subr.mxu0 0.0
    %2792 = vmatpush1.msra.mxu0 %v2596
    %2793 = vmatprep.subr.mxu0 0.0
    %2794 = vmatpush1.msra.mxu0 %v2597
    %2795 = vmatprep.subr.mxu0 0.0
    %2796 = vmatpush1.msra.mxu0 0.0
    %2797 = vmatprep.subr.mxu0 0.0
    %2798 = vmatpush1.msra.mxu0 0.0
    %2799 = vmatprep.subr.mxu0 0.0
    %2800 = vmatpush1.msra.mxu0 0.0
    %2801 = vmatprep.subr.mxu0 0.0
    %2802 = vmatpush1.msra.mxu0 0.0
    %2803 = vmatprep.subr.mxu0 0.0
    %2804 = vmatpush1.msra.mxu0 0.0
    %2805 = vmatprep.subr.mxu0 0.0
    %2806 = vmatpush1.msra.mxu0 0.0
    %2807 = vmatprep.subr.mxu0 0.0
    %2808 = vmatpush1.msra.mxu0 0.0
    %2809 = vmatprep.subr.mxu0 0.0
    %2810 = vmatpush1.msra.mxu0 0.0
    %2811 = vmatprep.subr.mxu0 0.0
    %2812 = vmatpush1.msra.mxu0 0.0
    %2813 = vmatprep.subr.mxu0 0.0
    %2814 = vmatpush1.msra.mxu0 0.0
    %2815 = vmatprep.subr.mxu0 0.0
    %2816 = vmatpush1.msra.mxu0 0.0
    %2817 = vmatprep.subr.mxu0 0.0
    %2818 = vmatpush1.msra.mxu0 0.0
    %2819 = vmatprep.subr.mxu0 0.0
    %2820 = vmatpush1.msra.mxu0 0.0
    %2821 = vmatprep.subr.mxu0 0.0
    %2822 = vmatpush1.msra.mxu0 0.0
    %2823 = vmatprep.subr.mxu0 0.0
    %2824 = vmatpush1.msra.mxu0 0.0
    %2825 = vmatprep.subr.mxu0 0.0
    %2826 = vmatpush1.msra.mxu0 0.0
    %2827 = vmatprep.subr.mxu0 0.0
    %2828 = vmatpush1.msra.mxu0 0.0
    %2829 = vmatprep.subr.mxu0 0.0
    %2830 = vmatpush1.msra.mxu0 0.0
    %2831 = vmatprep.subr.mxu0 0.0
    %2832 = vmatpush1.msra.mxu0 0.0
    %2833 = vmatprep.subr.mxu0 0.0
    %2834 = vmatpush1.msra.mxu0 0.0
    %2835 = vmatprep.subr.mxu0 0.0
    %2836 = vmatpush1.msra.mxu0 0.0
    %2837 = vmatprep.subr.mxu0 0.0
    %2838 = vmatpush1.msra.mxu0 0.0
    %2839 = vmatprep.subr.mxu0 0.0
    %2840 = vmatpush1.msra.mxu0 0.0
    %2841 = vmatprep.subr.mxu0 0.0
    %2842 = vmatpush1.msra.mxu0 0.0
    %2843 = vmatprep.subr.mxu0 0.0
    %2844 = vmatpush1.msra.mxu0 0.0
    %2845 = vmatprep.subr.mxu0 0.0
    %2846 = vmatpush1.msra.mxu0 0.0
    %2847 = vmatprep.subr.mxu0 0.0
    %2848 = vmatpush1.msra.mxu0 0.0
    %2849 = vmatprep.subr.mxu0 0.0
    %2850 = vmatpush1.msra.mxu0 0.0
    %2851 = vmatprep.mubr.f32.mxu0 0.0
    %2852 = vmatmul.mubr.f32.gmra.mrb[0].mxu0 %v2785
    %v2853 = vpop.f32.mrb[0].mxu0
    %v2854 = vadd.f32 %v2779, %v2853
    %v2855 = vpop.f32.mrb[0].mxu0
    %2856 = vdwg.mxu0
    %v2857 = vadd.f32 %v2854, %v2607
    %v2858 = vxor.u32 %v2857, 2147483648
    %v2859 = vmul.f32 %v2858, 1.442695
    %v2860 = vpow.pop %v2859
    %v2861 = vadd.f32 %v2860, 1.0
    %v2862 = vrcp.pop %v2861
    %v2863 = vmul.f32 1.0, %v2862
    %v2864 = vtanh.pop %v2857
    %v2865 = vmul.f32 %v2863, %v2583
    %2867 = vrot.lane.b32.xlu0 %v2864, 64
    %v2868 = vpop.permute.xlu0 %2867
    %v2870 = vmul.f32 %v2863, %v2868
    %2872 = vrot.lane.b32.xlu0 %v2870, 32
    %v2873 = vpop.permute.xlu0 %2872
    %v2875 = vadd.f32 %v2865, %v2873
    %v2876 = vtanh.pop %v2875
    %2878 = vrot.lane.b32.xlu0 %v2876, 64
    %v2879 = vpop.permute.xlu0 %2878
    %v2881 = vmul.f32 %v2863, %v2879
    %2882 = vmatprep.subr.mxu0 0.0
    %2883 = vmatpush1.msra.mxu0 %v2590
    %2884 = vmatprep.subr.mxu0 0.0
    %2885 = vmatpush1.msra.mxu0 %v2591
    %2886 = vmatprep.subr.mxu0 0.0
    %2887 = vmatpush1.msra.mxu0 %v2592
    %2888 = vmatprep.subr.mxu0 0.0
    %2889 = vmatpush1.msra.mxu0 %v2593
    %2890 = vmatprep.subr.mxu0 0.0
    %2891 = vmatpush1.msra.mxu0 0.0
    %2892 = vmatprep.subr.mxu0 0.0
    %2893 = vmatpush1.msra.mxu0 0.0
    %2894 = vmatprep.subr.mxu0 0.0
    %2895 = vmatpush1.msra.mxu0 0.0
    %2896 = vmatprep.subr.mxu0 0.0
    %2897 = vmatpush1.msra.mxu0 0.0
    %2898 = vmatprep.subr.mxu0 0.0
    %2899 = vmatpush1.msra.mxu0 0.0
    %2900 = vmatprep.subr.mxu0 0.0
    %2901 = vmatpush1.msra.mxu0 0.0
    %2902 = vmatprep.subr.mxu0 0.0
    %2903 = vmatpush1.msra.mxu0 0.0
    %2904 = vmatprep.subr.mxu0 0.0
    %2905 = vmatpush1.msra.mxu0 0.0
    %2906 = vmatprep.subr.mxu0 0.0
    %2907 = vmatpush1.msra.mxu0 0.0
    %2908 = vmatprep.subr.mxu0 0.0
    %2909 = vmatpush1.msra.mxu0 0.0
    %2910 = vmatprep.subr.mxu0 0.0
    %2911 = vmatpush1.msra.mxu0 0.0
    %2912 = vmatprep.subr.mxu0 0.0
    %2913 = vmatpush1.msra.mxu0 0.0
    %2914 = vmatprep.subr.mxu0 0.0
    %2915 = vmatpush1.msra.mxu0 0.0
    %2916 = vmatprep.subr.mxu0 0.0
    %2917 = vmatpush1.msra.mxu0 0.0
    %2918 = vmatprep.subr.mxu0 0.0
    %2919 = vmatpush1.msra.mxu0 0.0
    %2920 = vmatprep.subr.mxu0 0.0
    %2921 = vmatpush1.msra.mxu0 0.0
    %2922 = vmatprep.subr.mxu0 0.0
    %2923 = vmatpush1.msra.mxu0 0.0
    %2924 = vmatprep.subr.mxu0 0.0
    %2925 = vmatpush1.msra.mxu0 0.0
    %2926 = vmatprep.subr.mxu0 0.0
    %2927 = vmatpush1.msra.mxu0 0.0
    %2928 = vmatprep.subr.mxu0 0.0
    %2929 = vmatpush1.msra.mxu0 0.0
    %2930 = vmatprep.subr.mxu0 0.0
    %2931 = vmatpush1.msra.mxu0 0.0
    %2932 = vmatprep.subr.mxu0 0.0
    %2933 = vmatpush1.msra.mxu0 0.0
    %2934 = vmatprep.subr.mxu0 0.0
    %2935 = vmatpush1.msra.mxu0 0.0
    %2936 = vmatprep.subr.mxu0 0.0
    %2937 = vmatpush1.msra.mxu0 0.0
    %2938 = vmatprep.subr.mxu0 0.0
    %2939 = vmatpush1.msra.mxu0 0.0
    %2940 = vmatprep.subr.mxu0 0.0
    %2941 = vmatpush1.msra.mxu0 0.0
    %2942 = vmatprep.subr.mxu0 0.0
    %2943 = vmatpush1.msra.mxu0 0.0
    %2944 = vmatprep.subr.mxu0 0.0
    %2945 = vmatpush1.msra.mxu0 0.0
    %2946 = vmatprep.mubr.f32.mxu0 0.0
    %2947 = vmatmul.mubr.f32.gmra.mrb[0].mxu0 %v2785
    %v2948 = vpop.f32.mrb[0].mxu0
    %v2949 = vadd.f32 0.0, %v2948
    %v2950 = vpop.f32.mrb[0].mxu0
    %2951 = vdwg.mxu0
    %v2953 = vrot.slane %v2949, 6
    %v2955 = vadd.f32 %v359, %v2953
    %v2956 = vxor.u32 %v2955, 2147483648
    %v2957 = vmul.f32 %v2956, 1.442695
    %v2958 = vpow.pop %v2957
    %v2959 = vadd.f32 %v2958, 1.0
    %v2960 = vrcp.pop %v2959
    %v2961 = vmul.f32 1.0, %v2960
    %v2962 = vtanh.pop %v2955
    %v2964 = vrot.slane %v2700, 6
    %v2966 = vmul.f32 %v2961, %v2964
    %2968 = vrot.lane.b32.xlu0 %v2962, 64
    %v2969 = vpop.permute.xlu0 %2968
    %v2971 = vmul.f32 %v2961, %v2969
    %2973 = vrot.lane.b32.xlu0 %v2971, 32
    %v2974 = vpop.permute.xlu0 %2973
    %v2976 = vadd.f32 %v2966, %v2974
    %v2977 = vtanh.pop %v2976
    %2979 = vrot.lane.b32.xlu0 %v2977, 64
    %v2980 = vpop.permute.xlu0 %2979
    %v2982 = vmul.f32 %v2961, %v2980
    %2984 = vrot.lane.b32.xlu0 %v2881, 32
    %v2985 = vpop.permute.xlu0 %2984
    %v2986 = vsel %vm386, %v2985, 0
    %2988 = vmatprep.subr.mxu0 0.0
    %2989 = vmatpush1.msra.mxu0 %v2598
    %2990 = vmatprep.subr.mxu0 0.0
    %2991 = vmatpush1.msra.mxu0 %v2599
    %2992 = vmatprep.subr.mxu0 0.0
    %2993 = vmatpush1.msra.mxu0 %v2600
    %2994 = vmatprep.subr.mxu0 0.0
    %2995 = vmatpush1.msra.mxu0 %v2601
    %2996 = vmatprep.subr.mxu0 0.0
    %2997 = vmatpush1.msra.mxu0 0.0
    %2998 = vmatprep.subr.mxu0 0.0
    %2999 = vmatpush1.msra.mxu0 0.0
    %3000 = vmatprep.subr.mxu0 0.0
    %3001 = vmatpush1.msra.mxu0 0.0
    %3002 = vmatprep.subr.mxu0 0.0
    %3003 = vmatpush1.msra.mxu0 0.0
    %3004 = vmatprep.subr.mxu0 0.0
    %3005 = vmatpush1.msra.mxu0 0.0
    %3006 = vmatprep.subr.mxu0 0.0
    %3007 = vmatpush1.msra.mxu0 0.0
    %3008 = vmatprep.subr.mxu0 0.0
    %3009 = vmatpush1.msra.mxu0 0.0
    %3010 = vmatprep.subr.mxu0 0.0
    %3011 = vmatpush1.msra.mxu0 0.0
    %3012 = vmatprep.subr.mxu0 0.0
    %3013 = vmatpush1.msra.mxu0 0.0
    %3014 = vmatprep.subr.mxu0 0.0
    %3015 = vmatpush1.msra.mxu0 0.0
    %3016 = vmatprep.subr.mxu0 0.0
    %3017 = vmatpush1.msra.mxu0 0.0
    %3018 = vmatprep.subr.mxu0 0.0
    %3019 = vmatpush1.msra.mxu0 0.0
    %3020 = vmatprep.subr.mxu0 0.0
    %3021 = vmatpush1.msra.mxu0 0.0
    %3022 = vmatprep.subr.mxu0 0.0
    %3023 = vmatpush1.msra.mxu0 0.0
    %3024 = vmatprep.subr.mxu0 0.0
    %3025 = vmatpush1.msra.mxu0 0.0
    %3026 = vmatprep.subr.mxu0 0.0
    %3027 = vmatpush1.msra.mxu0 0.0
    %3028 = vmatprep.subr.mxu0 0.0
    %3029 = vmatpush1.msra.mxu0 0.0
    %3030 = vmatprep.subr.mxu0 0.0
    %3031 = vmatpush1.msra.mxu0 0.0
    %3032 = vmatprep.subr.mxu0 0.0
    %3033 = vmatpush1.msra.mxu0 0.0
    %3034 = vmatprep.subr.mxu0 0.0
    %3035 = vmatpush1.msra.mxu0 0.0
    %3036 = vmatprep.subr.mxu0 0.0
    %3037 = vmatpush1.msra.mxu0 0.0
    %3038 = vmatprep.subr.mxu0 0.0
    %3039 = vmatpush1.msra.mxu0 0.0
    %3040 = vmatprep.subr.mxu0 0.0
    %3041 = vmatpush1.msra.mxu0 0.0
    %3042 = vmatprep.subr.mxu0 0.0
    %3043 = vmatpush1.msra.mxu0 0.0
    %3044 = vmatprep.subr.mxu0 0.0
    %3045 = vmatpush1.msra.mxu0 0.0
    %3046 = vmatprep.subr.mxu0 0.0
    %3047 = vmatpush1.msra.mxu0 0.0
    %3048 = vmatprep.subr.mxu0 0.0
    %3049 = vmatpush1.msra.mxu0 0.0
    %3050 = vmatprep.subr.mxu0 0.0
    %3051 = vmatpush1.msra.mxu0 0.0
    %3052 = vmatprep.mubr.f32.mxu0 0.0
    %3053 = vmatmul.mubr.f32.gmra.mrb[0].mxu0 %v2986
    %v3054 = vpop.f32.mrb[0].mxu0
    %v3055 = vadd.f32 0.0, %v3054
    %v3056 = vpop.f32.mrb[0].mxu0
    %3057 = vdwg.mxu0
    %v3059 = vrot.slane %v2982, 2
    %3060 = vrot.lane.b32.xlu0 %v3059, 32
    %v3061 = vpop.permute.xlu0 %3060
    %v3062 = vsel %vm386, %v3061, 0
    %3064 = vmatprep.subr.mxu0 0.0
    %3065 = vmatpush1.msra.mxu0 %v2594
    %3066 = vmatprep.subr.mxu0 0.0
    %3067 = vmatpush1.msra.mxu0 %v2595
    %3068 = vmatprep.subr.mxu0 0.0
    %3069 = vmatpush1.msra.mxu0 %v2596
    %3070 = vmatprep.subr.mxu0 0.0
    %3071 = vmatpush1.msra.mxu0 %v2597
    %3072 = vmatprep.subr.mxu0 0.0
    %3073 = vmatpush1.msra.mxu0 0.0
    %3074 = vmatprep.subr.mxu0 0.0
    %3075 = vmatpush1.msra.mxu0 0.0
    %3076 = vmatprep.subr.mxu0 0.0
    %3077 = vmatpush1.msra.mxu0 0.0
    %3078 = vmatprep.subr.mxu0 0.0
    %3079 = vmatpush1.msra.mxu0 0.0
    %3080 = vmatprep.subr.mxu0 0.0
    %3081 = vmatpush1.msra.mxu0 0.0
    %3082 = vmatprep.subr.mxu0 0.0
    %3083 = vmatpush1.msra.mxu0 0.0
    %3084 = vmatprep.subr.mxu0 0.0
    %3085 = vmatpush1.msra.mxu0 0.0
    %3086 = vmatprep.subr.mxu0 0.0
    %3087 = vmatpush1.msra.mxu0 0.0
    %3088 = vmatprep.subr.mxu0 0.0
    %3089 = vmatpush1.msra.mxu0 0.0
    %3090 = vmatprep.subr.mxu0 0.0
    %3091 = vmatpush1.msra.mxu0 0.0
    %3092 = vmatprep.subr.mxu0 0.0
    %3093 = vmatpush1.msra.mxu0 0.0
    %3094 = vmatprep.subr.mxu0 0.0
    %3095 = vmatpush1.msra.mxu0 0.0
    %3096 = vmatprep.subr.mxu0 0.0
    %3097 = vmatpush1.msra.mxu0 0.0
    %3098 = vmatprep.subr.mxu0 0.0
    %3099 = vmatpush1.msra.mxu0 0.0
    %3100 = vmatprep.subr.mxu0 0.0
    %3101 = vmatpush1.msra.mxu0 0.0
    %3102 = vmatprep.subr.mxu0 0.0
    %3103 = vmatpush1.msra.mxu0 0.0
    %3104 = vmatprep.subr.mxu0 0.0
    %3105 = vmatpush1.msra.mxu0 0.0
    %3106 = vmatprep.subr.mxu0 0.0
    %3107 = vmatpush1.msra.mxu0 0.0
    %3108 = vmatprep.subr.mxu0 0.0
    %3109 = vmatpush1.msra.mxu0 0.0
    %3110 = vmatprep.subr.mxu0 0.0
    %3111 = vmatpush1.msra.mxu0 0.0
    %3112 = vmatprep.subr.mxu0 0.0
    %3113 = vmatpush1.msra.mxu0 0.0
    %3114 = vmatprep.subr.mxu0 0.0
    %3115 = vmatpush1.msra.mxu0 0.0
    %3116 = vmatprep.subr.mxu0 0.0
    %3117 = vmatpush1.msra.mxu0 0.0
    %3118 = vmatprep.subr.mxu0 0.0
    %3119 = vmatpush1.msra.mxu0 0.0
    %3120 = vmatprep.subr.mxu0 0.0
    %3121 = vmatpush1.msra.mxu0 0.0
    %3122 = vmatprep.subr.mxu0 0.0
    %3123 = vmatpush1.msra.mxu0 0.0
    %3124 = vmatprep.subr.mxu0 0.0
    %3125 = vmatpush1.msra.mxu0 0.0
    %3126 = vmatprep.subr.mxu0 0.0
    %3127 = vmatpush1.msra.mxu0 0.0
    %3128 = vmatprep.mubr.f32.mxu0 0.0
    %3129 = vmatmul.mubr.f32.gmra.mrb[0].mxu0 %v3062
    %v3130 = vpop.f32.mrb[0].mxu0
    %v3131 = vadd.f32 %v3055, %v3130
    %v3132 = vpop.f32.mrb[0].mxu0
    %3133 = vdwg.mxu0
    %v3134 = vadd.f32 %v3131, %v2607
    %v3135 = vxor.u32 %v3134, 2147483648
    %v3136 = vmul.f32 %v3135, 1.442695
    %v3137 = vpow.pop %v3136
    %v3138 = vadd.f32 %v3137, 1.0
    %v3139 = vrcp.pop %v3138
    %v3140 = vmul.f32 1.0, %v3139
    %v3141 = vtanh.pop %v3134
    %v3142 = vmul.f32 %v3140, %v2875
    %3144 = vrot.lane.b32.xlu0 %v3141, 64
    %v3145 = vpop.permute.xlu0 %3144
    %v3147 = vmul.f32 %v3140, %v3145
    %3149 = vrot.lane.b32.xlu0 %v3147, 32
    %v3150 = vpop.permute.xlu0 %3149
    %v3152 = vadd.f32 %v3142, %v3150
    %v3153 = vtanh.pop %v3152
    %3155 = vrot.lane.b32.xlu0 %v3153, 64
    %v3156 = vpop.permute.xlu0 %3155
    %v3158 = vmul.f32 %v3140, %v3156
    %3159 = vmatprep.subr.mxu0 0.0
    %3160 = vmatpush1.msra.mxu0 %v2590
    %3161 = vmatprep.subr.mxu0 0.0
    %3162 = vmatpush1.msra.mxu0 %v2591
    %3163 = vmatprep.subr.mxu0 0.0
    %3164 = vmatpush1.msra.mxu0 %v2592
    %3165 = vmatprep.subr.mxu0 0.0
    %3166 = vmatpush1.msra.mxu0 %v2593
    %3167 = vmatprep.subr.mxu0 0.0
    %3168 = vmatpush1.msra.mxu0 0.0
    %3169 = vmatprep.subr.mxu0 0.0
    %3170 = vmatpush1.msra.mxu0 0.0
    %3171 = vmatprep.subr.mxu0 0.0
    %3172 = vmatpush1.msra.mxu0 0.0
    %3173 = vmatprep.subr.mxu0 0.0
    %3174 = vmatpush1.msra.mxu0 0.0
    %3175 = vmatprep.subr.mxu0 0.0
    %3176 = vmatpush1.msra.mxu0 0.0
    %3177 = vmatprep.subr.mxu0 0.0
    %3178 = vmatpush1.msra.mxu0 0.0
    %3179 = vmatprep.subr.mxu0 0.0
    %3180 = vmatpush1.msra.mxu0 0.0
    %3181 = vmatprep.subr.mxu0 0.0
    %3182 = vmatpush1.msra.mxu0 0.0
    %3183 = vmatprep.subr.mxu0 0.0
    %3184 = vmatpush1.msra.mxu0 0.0
    %3185 = vmatprep.subr.mxu0 0.0
    %3186 = vmatpush1.msra.mxu0 0.0
    %3187 = vmatprep.subr.mxu0 0.0
    %3188 = vmatpush1.msra.mxu0 0.0
    %3189 = vmatprep.subr.mxu0 0.0
    %3190 = vmatpush1.msra.mxu0 0.0
    %3191 = vmatprep.subr.mxu0 0.0
    %3192 = vmatpush1.msra.mxu0 0.0
    %3193 = vmatprep.subr.mxu0 0.0
    %3194 = vmatpush1.msra.mxu0 0.0
    %3195 = vmatprep.subr.mxu0 0.0
    %3196 = vmatpush1.msra.mxu0 0.0
    %3197 = vmatprep.subr.mxu0 0.0
    %3198 = vmatpush1.msra.mxu0 0.0
    %3199 = vmatprep.subr.mxu0 0.0
    %3200 = vmatpush1.msra.mxu0 0.0
    %3201 = vmatprep.subr.mxu0 0.0
    %3202 = vmatpush1.msra.mxu0 0.0
    %3203 = vmatprep.subr.mxu0 0.0
    %3204 = vmatpush1.msra.mxu0 0.0
    %3205 = vmatprep.subr.mxu0 0.0
    %3206 = vmatpush1.msra.mxu0 0.0
    %3207 = vmatprep.subr.mxu0 0.0
    %3208 = vmatpush1.msra.mxu0 0.0
    %3209 = vmatprep.subr.mxu0 0.0
    %3210 = vmatpush1.msra.mxu0 0.0
    %3211 = vmatprep.subr.mxu0 0.0
    %3212 = vmatpush1.msra.mxu0 0.0
    %3213 = vmatprep.subr.mxu0 0.0
    %3214 = vmatpush1.msra.mxu0 0.0
    %3215 = vmatprep.subr.mxu0 0.0
    %3216 = vmatpush1.msra.mxu0 0.0
    %3217 = vmatprep.subr.mxu0 0.0
    %3218 = vmatpush1.msra.mxu0 0.0
    %3219 = vmatprep.subr.mxu0 0.0
    %3220 = vmatpush1.msra.mxu0 0.0
    %3221 = vmatprep.subr.mxu0 0.0
    %3222 = vmatpush1.msra.mxu0 0.0
    %3223 = vmatprep.mubr.f32.mxu0 0.0
    %3224 = vmatmul.mubr.f32.gmra.mrb[0].mxu0 %v3062
    %v3225 = vpop.f32.mrb[0].mxu0
    %v3226 = vadd.f32 0.0, %v3225
    %v3227 = vpop.f32.mrb[0].mxu0
    %3228 = vdwg.mxu0
    %v3230 = vrot.slane %v3226, 4
    %v3232 = vadd.f32 %v359, %v3230
    %v3233 = vxor.u32 %v3232, 2147483648
    %v3234 = vmul.f32 %v3233, 1.442695
    %v3235 = vpow.pop %v3234
    %v3236 = vadd.f32 %v3235, 1.0
    %v3237 = vrcp.pop %v3236
    %v3238 = vmul.f32 1.0, %v3237
    %v3239 = vtanh.pop %v3232
    %v3241 = vrot.slane %v2976, 6
    %v3243 = vmul.f32 %v3238, %v3241
    %3245 = vrot.lane.b32.xlu0 %v3239, 64
    %v3246 = vpop.permute.xlu0 %3245
    %v3248 = vmul.f32 %v3238, %v3246
    %3250 = vrot.lane.b32.xlu0 %v3248, 32
    %v3251 = vpop.permute.xlu0 %3250
    %v3253 = vadd.f32 %v3243, %v3251
    %v3254 = vtanh.pop %v3253
    %3256 = vrot.lane.b32.xlu0 %v3254, 64
    %v3257 = vpop.permute.xlu0 %3256
    %v3259 = vmul.f32 %v3238, %v3257
    %3261 = vrot.lane.b32.xlu0 %v3158, 32
    %v3262 = vpop.permute.xlu0 %3261
    %v3263 = vsel %vm386, %v3262, 0
    %3265 = vmatprep.subr.mxu0 0.0
    %3266 = vmatpush1.msra.mxu0 %v2598
    %3267 = vmatprep.subr.mxu0 0.0
    %3268 = vmatpush1.msra.mxu0 %v2599
    %3269 = vmatprep.subr.mxu0 0.0
    %3270 = vmatpush1.msra.mxu0 %v2600
    %3271 = vmatprep.subr.mxu0 0.0
    %3272 = vmatpush1.msra.mxu0 %v2601
    %3273 = vmatprep.subr.mxu0 0.0
    %3274 = vmatpush1.msra.mxu0 0.0
    %3275 = vmatprep.subr.mxu0 0.0
    %3276 = vmatpush1.msra.mxu0 0.0
    %3277 = vmatprep.subr.mxu0 0.0
    %3278 = vmatpush1.msra.mxu0 0.0
    %3279 = vmatprep.subr.mxu0 0.0
    %3280 = vmatpush1.msra.mxu0 0.0
    %3281 = vmatprep.subr.mxu0 0.0
    %3282 = vmatpush1.msra.mxu0 0.0
    %3283 = vmatprep.subr.mxu0 0.0
    %3284 = vmatpush1.msra.mxu0 0.0
    %3285 = vmatprep.subr.mxu0 0.0
    %3286 = vmatpush1.msra.mxu0 0.0
    %3287 = vmatprep.subr.mxu0 0.0
    %3288 = vmatpush1.msra.mxu0 0.0
    %3289 = vmatprep.subr.mxu0 0.0
    %3290 = vmatpush1.msra.mxu0 0.0
    %3291 = vmatprep.subr.mxu0 0.0
    %3292 = vmatpush1.msra.mxu0 0.0
    %3293 = vmatprep.subr.mxu0 0.0
    %3294 = vmatpush1.msra.mxu0 0.0
    %3295 = vmatprep.subr.mxu0 0.0
    %3296 = vmatpush1.msra.mxu0 0.0
    %3297 = vmatprep.subr.mxu0 0.0
    %3298 = vmatpush1.msra.mxu0 0.0
    %3299 = vmatprep.subr.mxu0 0.0
    %3300 = vmatpush1.msra.mxu0 0.0
    %3301 = vmatprep.subr.mxu0 0.0
    %3302 = vmatpush1.msra.mxu0 0.0
    %3303 = vmatprep.subr.mxu0 0.0
    %3304 = vmatpush1.msra.mxu0 0.0
    %3305 = vmatprep.subr.mxu0 0.0
    %3306 = vmatpush1.msra.mxu0 0.0
    %3307 = vmatprep.subr.mxu0 0.0
    %3308 = vmatpush1.msra.mxu0 0.0
    %3309 = vmatprep.subr.mxu0 0.0
    %3310 = vmatpush1.msra.mxu0 0.0
    %3311 = vmatprep.subr.mxu0 0.0
    %3312 = vmatpush1.msra.mxu0 0.0
    %3313 = vmatprep.subr.mxu0 0.0
    %3314 = vmatpush1.msra.mxu0 0.0
    %3315 = vmatprep.subr.mxu0 0.0
    %3316 = vmatpush1.msra.mxu0 0.0
    %3317 = vmatprep.subr.mxu0 0.0
    %3318 = vmatpush1.msra.mxu0 0.0
    %3319 = vmatprep.subr.mxu0 0.0
    %3320 = vmatpush1.msra.mxu0 0.0
    %3321 = vmatprep.subr.mxu0 0.0
    %3322 = vmatpush1.msra.mxu0 0.0
    %3323 = vmatprep.subr.mxu0 0.0
    %3324 = vmatpush1.msra.mxu0 0.0
    %3325 = vmatprep.subr.mxu0 0.0
    %3326 = vmatpush1.msra.mxu0 0.0
    %3327 = vmatprep.subr.mxu0 0.0
    %3328 = vmatpush1.msra.mxu0 0.0
    %3329 = vmatprep.mubr.f32.mxu0 0.0
    %3330 = vmatmul.mubr.f32.gmra.mrb[0].mxu0 %v3263
    %v3331 = vpop.f32.mrb[0].mxu0
    %v3332 = vadd.f32 0.0, %v3331
    %v3333 = vpop.f32.mrb[0].mxu0
    %3334 = vdwg.mxu0
    %v3336 = vrot.slane %v3259, 4
    %3337 = vrot.lane.b32.xlu0 %v3336, 32
    %v3338 = vpop.permute.xlu0 %3337
    %v3339 = vsel %vm386, %v3338, 0
    %3341 = vmatprep.subr.mxu0 0.0
    %3342 = vmatpush1.msra.mxu0 %v2594
    %3343 = vmatprep.subr.mxu0 0.0
    %3344 = vmatpush1.msra.mxu0 %v2595
    %3345 = vmatprep.subr.mxu0 0.0
    %3346 = vmatpush1.msra.mxu0 %v2596
    %3347 = vmatprep.subr.mxu0 0.0
    %3348 = vmatpush1.msra.mxu0 %v2597
    %3349 = vmatprep.subr.mxu0 0.0
    %3350 = vmatpush1.msra.mxu0 0.0
    %3351 = vmatprep.subr.mxu0 0.0
    %3352 = vmatpush1.msra.mxu0 0.0
    %3353 = vmatprep.subr.mxu0 0.0
    %3354 = vmatpush1.msra.mxu0 0.0
    %3355 = vmatprep.subr.mxu0 0.0
    %3356 = vmatpush1.msra.mxu0 0.0
    %3357 = vmatprep.subr.mxu0 0.0
    %3358 = vmatpush1.msra.mxu0 0.0
    %3359 = vmatprep.subr.mxu0 0.0
    %3360 = vmatpush1.msra.mxu0 0.0
    %3361 = vmatprep.subr.mxu0 0.0
    %3362 = vmatpush1.msra.mxu0 0.0
    %3363 = vmatprep.subr.mxu0 0.0
    %3364 = vmatpush1.msra.mxu0 0.0
    %3365 = vmatprep.subr.mxu0 0.0
    %3366 = vmatpush1.msra.mxu0 0.0
    %3367 = vmatprep.subr.mxu0 0.0
    %3368 = vmatpush1.msra.mxu0 0.0
    %3369 = vmatprep.subr.mxu0 0.0
    %3370 = vmatpush1.msra.mxu0 0.0
    %3371 = vmatprep.subr.mxu0 0.0
    %3372 = vmatpush1.msra.mxu0 0.0
    %3373 = vmatprep.subr.mxu0 0.0
    %3374 = vmatpush1.msra.mxu0 0.0
    %3375 = vmatprep.subr.mxu0 0.0
    %3376 = vmatpush1.msra.mxu0 0.0
    %3377 = vmatprep.subr.mxu0 0.0
    %3378 = vmatpush1.msra.mxu0 0.0
    %3379 = vmatprep.subr.mxu0 0.0
    %3380 = vmatpush1.msra.mxu0 0.0
    %3381 = vmatprep.subr.mxu0 0.0
    %3382 = vmatpush1.msra.mxu0 0.0
    %3383 = vmatprep.subr.mxu0 0.0
    %3384 = vmatpush1.msra.mxu0 0.0
    %3385 = vmatprep.subr.mxu0 0.0
    %3386 = vmatpush1.msra.mxu0 0.0
    %3387 = vmatprep.subr.mxu0 0.0
    %3388 = vmatpush1.msra.mxu0 0.0
    %3389 = vmatprep.subr.mxu0 0.0
    %3390 = vmatpush1.msra.mxu0 0.0
    %3391 = vmatprep.subr.mxu0 0.0
    %3392 = vmatpush1.msra.mxu0 0.0
    %3393 = vmatprep.subr.mxu0 0.0
    %3394 = vmatpush1.msra.mxu0 0.0
    %3395 = vmatprep.subr.mxu0 0.0
    %3396 = vmatpush1.msra.mxu0 0.0
    %3397 = vmatprep.subr.mxu0 0.0
    %3398 = vmatpush1.msra.mxu0 0.0
    %3399 = vmatprep.subr.mxu0 0.0
    %3400 = vmatpush1.msra.mxu0 0.0
    %3401 = vmatprep.subr.mxu0 0.0
    %3402 = vmatpush1.msra.mxu0 0.0
    %3403 = vmatprep.subr.mxu0 0.0
    %3404 = vmatpush1.msra.mxu0 0.0
    %3405 = vmatprep.mubr.f32.mxu0 0.0
    %3406 = vmatmul.mubr.f32.gmra.mrb[0].mxu0 %v3339
    %v3407 = vpop.f32.mrb[0].mxu0
    %v3408 = vadd.f32 %v3332, %v3407
    %v3409 = vpop.f32.mrb[0].mxu0
    %3410 = vdwg.mxu0
    %v3411 = vadd.f32 %v3408, %v2607
    %v3412 = vxor.u32 %v3411, 2147483648
    %v3413 = vmul.f32 %v3412, 1.442695
    %v3414 = vpow.pop %v3413
    %v3415 = vadd.f32 %v3414, 1.0
    %v3416 = vrcp.pop %v3415
    %v3417 = vmul.f32 1.0, %v3416
    %v3418 = vtanh.pop %v3411
    %v3419 = vmul.f32 %v3417, %v3152
    %3421 = vrot.lane.b32.xlu0 %v3418, 64
    %v3422 = vpop.permute.xlu0 %3421
    %v3424 = vmul.f32 %v3417, %v3422
    %3426 = vrot.lane.b32.xlu0 %v3424, 32
    %v3427 = vpop.permute.xlu0 %3426
    %v3429 = vadd.f32 %v3419, %v3427
    %v3430 = vtanh.pop %v3429
    %3432 = vrot.lane.b32.xlu0 %v3430, 64
    %v3433 = vpop.permute.xlu0 %3432
    %v3435 = vmul.f32 %v3417, %v3433
    %3436 = vmatprep.subr.mxu0 0.0
    %3437 = vmatpush1.msra.mxu0 %v2590
    %3438 = vmatprep.subr.mxu0 0.0
    %3439 = vmatpush1.msra.mxu0 %v2591
    %3440 = vmatprep.subr.mxu0 0.0
    %3441 = vmatpush1.msra.mxu0 %v2592
    %3442 = vmatprep.subr.mxu0 0.0
    %3443 = vmatpush1.msra.mxu0 %v2593
    %3444 = vmatprep.subr.mxu0 0.0
    %3445 = vmatpush1.msra.mxu0 0.0
    %3446 = vmatprep.subr.mxu0 0.0
    %3447 = vmatpush1.msra.mxu0 0.0
    %3448 = vmatprep.subr.mxu0 0.0
    %3449 = vmatpush1.msra.mxu0 0.0
    %3450 = vmatprep.subr.mxu0 0.0
    %3451 = vmatpush1.msra.mxu0 0.0
    %3452 = vmatprep.subr.mxu0 0.0
    %3453 = vmatpush1.msra.mxu0 0.0
    %3454 = vmatprep.subr.mxu0 0.0
    %3455 = vmatpush1.msra.mxu0 0.0
    %3456 = vmatprep.subr.mxu0 0.0
    %3457 = vmatpush1.msra.mxu0 0.0
    %3458 = vmatprep.subr.mxu0 0.0
    %3459 = vmatpush1.msra.mxu0 0.0
    %3460 = vmatprep.subr.mxu0 0.0
    %3461 = vmatpush1.msra.mxu0 0.0
    %3462 = vmatprep.subr.mxu0 0.0
    %3463 = vmatpush1.msra.mxu0 0.0
    %3464 = vmatprep.subr.mxu0 0.0
    %3465 = vmatpush1.msra.mxu0 0.0
    %3466 = vmatprep.subr.mxu0 0.0
    %3467 = vmatpush1.msra.mxu0 0.0
    %3468 = vmatprep.subr.mxu0 0.0
    %3469 = vmatpush1.msra.mxu0 0.0
    %3470 = vmatprep.subr.mxu0 0.0
    %3471 = vmatpush1.msra.mxu0 0.0
    %3472 = vmatprep.subr.mxu0 0.0
    %3473 = vmatpush1.msra.mxu0 0.0
    %3474 = vmatprep.subr.mxu0 0.0
    %3475 = vmatpush1.msra.mxu0 0.0
    %3476 = vmatprep.subr.mxu0 0.0
    %3477 = vmatpush1.msra.mxu0 0.0
    %3478 = vmatprep.subr.mxu0 0.0
    %3479 = vmatpush1.msra.mxu0 0.0
    %3480 = vmatprep.subr.mxu0 0.0
    %3481 = vmatpush1.msra.mxu0 0.0
    %3482 = vmatprep.subr.mxu0 0.0
    %3483 = vmatpush1.msra.mxu0 0.0
    %3484 = vmatprep.subr.mxu0 0.0
    %3485 = vmatpush1.msra.mxu0 0.0
    %3486 = vmatprep.subr.mxu0 0.0
    %3487 = vmatpush1.msra.mxu0 0.0
    %3488 = vmatprep.subr.mxu0 0.0
    %3489 = vmatpush1.msra.mxu0 0.0
    %3490 = vmatprep.subr.mxu0 0.0
    %3491 = vmatpush1.msra.mxu0 0.0
    %3492 = vmatprep.subr.mxu0 0.0
    %3493 = vmatpush1.msra.mxu0 0.0
    %3494 = vmatprep.subr.mxu0 0.0
    %3495 = vmatpush1.msra.mxu0 0.0
    %3496 = vmatprep.subr.mxu0 0.0
    %3497 = vmatpush1.msra.mxu0 0.0
    %3498 = vmatprep.subr.mxu0 0.0
    %3499 = vmatpush1.msra.mxu0 0.0
    %3500 = vmatprep.mubr.f32.mxu0 0.0
    %3501 = vmatmul.mubr.f32.gmra.mrb[0].mxu0 %v3339
    %v3502 = vpop.f32.mrb[0].mxu0
    %v3503 = vadd.f32 0.0, %v3502
    %v3504 = vpop.f32.mrb[0].mxu0
    %3505 = vdwg.mxu0
    %v3507 = vrot.slane %v3503, 2
    %v3509 = vadd.f32 %v359, %v3507
    %v3510 = vxor.u32 %v3509, 2147483648
    %v3511 = vmul.f32 %v3510, 1.442695
    %v3512 = vpow.pop %v3511
    %v3513 = vadd.f32 %v3512, 1.0
    %v3514 = vrcp.pop %v3513
    %v3515 = vmul.f32 1.0, %v3514
    %v3516 = vtanh.pop %v3509
    %v3518 = vrot.slane %v3253, 6
    %v3520 = vmul.f32 %v3515, %v3518
    %3522 = vrot.lane.b32.xlu0 %v3516, 64
    %v3523 = vpop.permute.xlu0 %3522
    %v3525 = vmul.f32 %v3515, %v3523
    %3527 = vrot.lane.b32.xlu0 %v3525, 32
    %v3528 = vpop.permute.xlu0 %3527
    %v3530 = vadd.f32 %v3520, %v3528
    %v3531 = vtanh.pop %v3530
    %3533 = vrot.lane.b32.xlu0 %v3531, 64
    %v3534 = vpop.permute.xlu0 %3533
    %v3536 = vmul.f32 %v3515, %v3534
    %3538 = vrot.lane.b32.xlu0 %v3435, 32
    %v3539 = vpop.permute.xlu0 %3538
    %v3540 = vsel %vm386, %v3539, 0
    %3542 = vmatprep.subr.mxu0 0.0
    %3543 = vmatpush1.msra.mxu0 %v2598
    %3544 = vmatprep.subr.mxu0 0.0
    %3545 = vmatpush1.msra.mxu0 %v2599
    %3546 = vmatprep.subr.mxu0 0.0
    %3547 = vmatpush1.msra.mxu0 %v2600
    %3548 = vmatprep.subr.mxu0 0.0
    %3549 = vmatpush1.msra.mxu0 %v2601
    %3550 = vmatprep.subr.mxu0 0.0
    %3551 = vmatpush1.msra.mxu0 0.0
    %3552 = vmatprep.subr.mxu0 0.0
    %3553 = vmatpush1.msra.mxu0 0.0
    %3554 = vmatprep.subr.mxu0 0.0
    %3555 = vmatpush1.msra.mxu0 0.0
    %3556 = vmatprep.subr.mxu0 0.0
    %3557 = vmatpush1.msra.mxu0 0.0
    %3558 = vmatprep.subr.mxu0 0.0
    %3559 = vmatpush1.msra.mxu0 0.0
    %3560 = vmatprep.subr.mxu0 0.0
    %3561 = vmatpush1.msra.mxu0 0.0
    %3562 = vmatprep.subr.mxu0 0.0
    %3563 = vmatpush1.msra.mxu0 0.0
    %3564 = vmatprep.subr.mxu0 0.0
    %3565 = vmatpush1.msra.mxu0 0.0
    %3566 = vmatprep.subr.mxu0 0.0
    %3567 = vmatpush1.msra.mxu0 0.0
    %3568 = vmatprep.subr.mxu0 0.0
    %3569 = vmatpush1.msra.mxu0 0.0
    %3570 = vmatprep.subr.mxu0 0.0
    %3571 = vmatpush1.msra.mxu0 0.0
    %3572 = vmatprep.subr.mxu0 0.0
    %3573 = vmatpush1.msra.mxu0 0.0
    %3574 = vmatprep.subr.mxu0 0.0
    %3575 = vmatpush1.msra.mxu0 0.0
    %3576 = vmatprep.subr.mxu0 0.0
    %3577 = vmatpush1.msra.mxu0 0.0
    %3578 = vmatprep.subr.mxu0 0.0
    %3579 = vmatpush1.msra.mxu0 0.0
    %3580 = vmatprep.subr.mxu0 0.0
    %3581 = vmatpush1.msra.mxu0 0.0
    %3582 = vmatprep.subr.mxu0 0.0
    %3583 = vmatpush1.msra.mxu0 0.0
    %3584 = vmatprep.subr.mxu0 0.0
    %3585 = vmatpush1.msra.mxu0 0.0
    %3586 = vmatprep.subr.mxu0 0.0
    %3587 = vmatpush1.msra.mxu0 0.0
    %3588 = vmatprep.subr.mxu0 0.0
    %3589 = vmatpush1.msra.mxu0 0.0
    %3590 = vmatprep.subr.mxu0 0.0
    %3591 = vmatpush1.msra.mxu0 0.0
    %3592 = vmatprep.subr.mxu0 0.0
    %3593 = vmatpush1.msra.mxu0 0.0
    %3594 = vmatprep.subr.mxu0 0.0
    %3595 = vmatpush1.msra.mxu0 0.0
    %3596 = vmatprep.subr.mxu0 0.0
    %3597 = vmatpush1.msra.mxu0 0.0
    %3598 = vmatprep.subr.mxu0 0.0
    %3599 = vmatpush1.msra.mxu0 0.0
    %3600 = vmatprep.subr.mxu0 0.0
    %3601 = vmatpush1.msra.mxu0 0.0
    %3602 = vmatprep.subr.mxu0 0.0
    %3603 = vmatpush1.msra.mxu0 0.0
    %3604 = vmatprep.subr.mxu0 0.0
    %3605 = vmatpush1.msra.mxu0 0.0
    %3606 = vmatprep.mubr.f32.mxu0 0.0
    %3607 = vmatmul.mubr.f32.gmra.mrb[0].mxu0 %v3540
    %v3608 = vpop.f32.mrb[0].mxu0
    %v3609 = vadd.f32 0.0, %v3608
    %v3610 = vpop.f32.mrb[0].mxu0
    %3611 = vdwg.mxu0
    %v3613 = vrot.slane %v3536, 6
    %3614 = vrot.lane.b32.xlu0 %v3613, 32
    %v3615 = vpop.permute.xlu0 %3614
    %v3616 = vsel %vm386, %v3615, 0
    %3618 = vmatprep.subr.mxu0 0.0
    %3619 = vmatpush1.msra.mxu0 %v2594
    %3620 = vmatprep.subr.mxu0 0.0
    %3621 = vmatpush1.msra.mxu0 %v2595
    %3622 = vmatprep.subr.mxu0 0.0
    %3623 = vmatpush1.msra.mxu0 %v2596
    %3624 = vmatprep.subr.mxu0 0.0
    %3625 = vmatpush1.msra.mxu0 %v2597
    %3626 = vmatprep.subr.mxu0 0.0
    %3627 = vmatpush1.msra.mxu0 0.0
    %3628 = vmatprep.subr.mxu0 0.0
    %3629 = vmatpush1.msra.mxu0 0.0
    %3630 = vmatprep.subr.mxu0 0.0
    %3631 = vmatpush1.msra.mxu0 0.0
    %3632 = vmatprep.subr.mxu0 0.0
    %3633 = vmatpush1.msra.mxu0 0.0
    %3634 = vmatprep.subr.mxu0 0.0
    %3635 = vmatpush1.msra.mxu0 0.0
    %3636 = vmatprep.subr.mxu0 0.0
    %3637 = vmatpush1.msra.mxu0 0.0
    %3638 = vmatprep.subr.mxu0 0.0
    %3639 = vmatpush1.msra.mxu0 0.0
    %3640 = vmatprep.subr.mxu0 0.0
    %3641 = vmatpush1.msra.mxu0 0.0
    %3642 = vmatprep.subr.mxu0 0.0
    %3643 = vmatpush1.msra.mxu0 0.0
    %3644 = vmatprep.subr.mxu0 0.0
    %3645 = vmatpush1.msra.mxu0 0.0
    %3646 = vmatprep.subr.mxu0 0.0
    %3647 = vmatpush1.msra.mxu0 0.0
    %3648 = vmatprep.subr.mxu0 0.0
    %3649 = vmatpush1.msra.mxu0 0.0
    %3650 = vmatprep.subr.mxu0 0.0
    %3651 = vmatpush1.msra.mxu0 0.0
    %3652 = vmatprep.subr.mxu0 0.0
    %3653 = vmatpush1.msra.mxu0 0.0
    %3654 = vmatprep.subr.mxu0 0.0
    %3655 = vmatpush1.msra.mxu0 0.0
    %3656 = vmatprep.subr.mxu0 0.0
    %3657 = vmatpush1.msra.mxu0 0.0
    %3658 = vmatprep.subr.mxu0 0.0
    %3659 = vmatpush1.msra.mxu0 0.0
    %3660 = vmatprep.subr.mxu0 0.0
    %3661 = vmatpush1.msra.mxu0 0.0
    %3662 = vmatprep.subr.mxu0 0.0
    %3663 = vmatpush1.msra.mxu0 0.0
    %3664 = vmatprep.subr.mxu0 0.0
    %3665 = vmatpush1.msra.mxu0 0.0
    %3666 = vmatprep.subr.mxu0 0.0
    %3667 = vmatpush1.msra.mxu0 0.0
    %3668 = vmatprep.subr.mxu0 0.0
    %3669 = vmatpush1.msra.mxu0 0.0
    %3670 = vmatprep.subr.mxu0 0.0
    %3671 = vmatpush1.msra.mxu0 0.0
    %3672 = vmatprep.subr.mxu0 0.0
    %3673 = vmatpush1.msra.mxu0 0.0
    %3674 = vmatprep.subr.mxu0 0.0
    %3675 = vmatpush1.msra.mxu0 0.0
    %3676 = vmatprep.subr.mxu0 0.0
    %3677 = vmatpush1.msra.mxu0 0.0
    %3678 = vmatprep.subr.mxu0 0.0
    %3679 = vmatpush1.msra.mxu0 0.0
    %3680 = vmatprep.subr.mxu0 0.0
    %3681 = vmatpush1.msra.mxu0 0.0
    %3682 = vmatprep.mubr.f32.mxu0 0.0
    %3683 = vmatmul.mubr.f32.gmra.mrb[0].mxu0 %v3616
    %v3684 = vpop.f32.mrb[0].mxu0
    %v3685 = vadd.f32 %v3609, %v3684
    %v3686 = vpop.f32.mrb[0].mxu0
    %3687 = vdwg.mxu0
    %v3688 = vadd.f32 %v3685, %v2607
    %v3689 = vxor.u32 %v3688, 2147483648
    %v3690 = vmul.f32 %v3689, 1.442695
    %v3691 = vpow.pop %v3690
    %v3692 = vadd.f32 %v3691, 1.0
    %v3693 = vrcp.pop %v3692
    %v3694 = vmul.f32 1.0, %v3693
    %v3695 = vtanh.pop %v3688
    %v3696 = vmul.f32 %v3694, %v3429
    %3698 = vrot.lane.b32.xlu0 %v3695, 64
    %v3699 = vpop.permute.xlu0 %3698
    %v3701 = vmul.f32 %v3694, %v3699
    %3703 = vrot.lane.b32.xlu0 %v3701, 32
    %v3704 = vpop.permute.xlu0 %3703
    %v3706 = vadd.f32 %v3696, %v3704
    %v3707 = vtanh.pop %v3706
    %3709 = vrot.lane.b32.xlu0 %v3707, 64
    %v3710 = vpop.permute.xlu0 %3709
    %v3712 = vmul.f32 %v3694, %v3710
    %3713 = vmatprep.subr.mxu0 0.0
    %3714 = vmatpush1.msra.mxu0 %v2590
    %3715 = vmatprep.subr.mxu0 0.0
    %3716 = vmatpush1.msra.mxu0 %v2591
    %3717 = vmatprep.subr.mxu0 0.0
    %3718 = vmatpush1.msra.mxu0 %v2592
    %3719 = vmatprep.subr.mxu0 0.0
    %3720 = vmatpush1.msra.mxu0 %v2593
    %3721 = vmatprep.subr.mxu0 0.0
    %3722 = vmatpush1.msra.mxu0 0.0
    %3723 = vmatprep.subr.mxu0 0.0
    %3724 = vmatpush1.msra.mxu0 0.0
    %3725 = vmatprep.subr.mxu0 0.0
    %3726 = vmatpush1.msra.mxu0 0.0
    %3727 = vmatprep.subr.mxu0 0.0
    %3728 = vmatpush1.msra.mxu0 0.0
    %3729 = vmatprep.subr.mxu0 0.0
    %3730 = vmatpush1.msra.mxu0 0.0
    %3731 = vmatprep.subr.mxu0 0.0
    %3732 = vmatpush1.msra.mxu0 0.0
    %3733 = vmatprep.subr.mxu0 0.0
    %3734 = vmatpush1.msra.mxu0 0.0
    %3735 = vmatprep.subr.mxu0 0.0
    %3736 = vmatpush1.msra.mxu0 0.0
    %3737 = vmatprep.subr.mxu0 0.0
    %3738 = vmatpush1.msra.mxu0 0.0
    %3739 = vmatprep.subr.mxu0 0.0
    %3740 = vmatpush1.msra.mxu0 0.0
    %3741 = vmatprep.subr.mxu0 0.0
    %3742 = vmatpush1.msra.mxu0 0.0
    %3743 = vmatprep.subr.mxu0 0.0
    %3744 = vmatpush1.msra.mxu0 0.0
    %3745 = vmatprep.subr.mxu0 0.0
    %3746 = vmatpush1.msra.mxu0 0.0
    %3747 = vmatprep.subr.mxu0 0.0
    %3748 = vmatpush1.msra.mxu0 0.0
    %3749 = vmatprep.subr.mxu0 0.0
    %3750 = vmatpush1.msra.mxu0 0.0
    %3751 = vmatprep.subr.mxu0 0.0
    %3752 = vmatpush1.msra.mxu0 0.0
    %3753 = vmatprep.subr.mxu0 0.0
    %3754 = vmatpush1.msra.mxu0 0.0
    %3755 = vmatprep.subr.mxu0 0.0
    %3756 = vmatpush1.msra.mxu0 0.0
    %3757 = vmatprep.subr.mxu0 0.0
    %3758 = vmatpush1.msra.mxu0 0.0
    %3759 = vmatprep.subr.mxu0 0.0
    %3760 = vmatpush1.msra.mxu0 0.0
    %3761 = vmatprep.subr.mxu0 0.0
    %3762 = vmatpush1.msra.mxu0 0.0
    %3763 = vmatprep.subr.mxu0 0.0
    %3764 = vmatpush1.msra.mxu0 0.0
    %3765 = vmatprep.subr.mxu0 0.0
    %3766 = vmatpush1.msra.mxu0 0.0
    %3767 = vmatprep.subr.mxu0 0.0
    %3768 = vmatpush1.msra.mxu0 0.0
    %3769 = vmatprep.subr.mxu0 0.0
    %3770 = vmatpush1.msra.mxu0 0.0
    %3771 = vmatprep.subr.mxu0 0.0
    %3772 = vmatpush1.msra.mxu0 0.0
    %3773 = vmatprep.subr.mxu0 0.0
    %3774 = vmatpush1.msra.mxu0 0.0
    %3775 = vmatprep.subr.mxu0 0.0
    %3776 = vmatpush1.msra.mxu0 0.0
    %3777 = vmatprep.mubr.f32.mxu0 0.0
    %3778 = vmatmul.mubr.f32.gmra.mrb[0].mxu0 %v3616
    %v3779 = vpop.f32.mrb[0].mxu0
    %v3780 = vadd.f32 0.0, %v3779
    %v3781 = vpop.f32.mrb[0].mxu0
    %3782 = vdwg.mxu0
    %v3783 = vadd.f32 %v364, %v3780
    %v3784 = vxor.u32 %v3783, 2147483648
    %v3785 = vmul.f32 %v3784, 1.442695
    %v3786 = vpow.pop %v3785
    %v3787 = vadd.f32 %v3786, 1.0
    %v3788 = vrcp.pop %v3787
    %v3789 = vmul.f32 1.0, %v3788
    %v3790 = vtanh.pop %v3783
    %v3792 = vrot.slane %v3530, 6
    %v3794 = vmul.f32 %v3789, %v3792
    %3796 = vrot.lane.b32.xlu0 %v3790, 64
    %v3797 = vpop.permute.xlu0 %3796
    %v3799 = vmul.f32 %v3789, %v3797
    %3801 = vrot.lane.b32.xlu0 %v3799, 32
    %v3802 = vpop.permute.xlu0 %3801
    %v3804 = vadd.f32 %v3794, %v3802
    %v3805 = vtanh.pop %v3804
    %3807 = vrot.lane.b32.xlu0 %v3805, 64
    %v3808 = vpop.permute.xlu0 %3807
    %v3810 = vmul.f32 %v3789, %v3808
    %3812 = vrot.lane.b32.xlu0 %v3712, 32
    %v3813 = vpop.permute.xlu0 %3812
    %v3814 = vsel %vm386, %v3813, 0
    %3816 = vmatprep.subr.mxu0 0.0
    %3817 = vmatpush1.msra.mxu0 %v2598
    %3818 = vmatprep.subr.mxu0 0.0
    %3819 = vmatpush1.msra.mxu0 %v2599
    %3820 = vmatprep.subr.mxu0 0.0
    %3821 = vmatpush1.msra.mxu0 %v2600
    %3822 = vmatprep.subr.mxu0 0.0
    %3823 = vmatpush1.msra.mxu0 %v2601
    %3824 = vmatprep.subr.mxu0 0.0
    %3825 = vmatpush1.msra.mxu0 0.0
    %3826 = vmatprep.subr.mxu0 0.0
    %3827 = vmatpush1.msra.mxu0 0.0
    %3828 = vmatprep.subr.mxu0 0.0
    %3829 = vmatpush1.msra.mxu0 0.0
    %3830 = vmatprep.subr.mxu0 0.0
    %3831 = vmatpush1.msra.mxu0 0.0
    %3832 = vmatprep.subr.mxu0 0.0
    %3833 = vmatpush1.msra.mxu0 0.0
    %3834 = vmatprep.subr.mxu0 0.0
    %3835 = vmatpush1.msra.mxu0 0.0
    %3836 = vmatprep.subr.mxu0 0.0
    %3837 = vmatpush1.msra.mxu0 0.0
    %3838 = vmatprep.subr.mxu0 0.0
    %3839 = vmatpush1.msra.mxu0 0.0
    %3840 = vmatprep.subr.mxu0 0.0
    %3841 = vmatpush1.msra.mxu0 0.0
    %3842 = vmatprep.subr.mxu0 0.0
    %3843 = vmatpush1.msra.mxu0 0.0
    %3844 = vmatprep.subr.mxu0 0.0
    %3845 = vmatpush1.msra.mxu0 0.0
    %3846 = vmatprep.subr.mxu0 0.0
    %3847 = vmatpush1.msra.mxu0 0.0
    %3848 = vmatprep.subr.mxu0 0.0
    %3849 = vmatpush1.msra.mxu0 0.0
    %3850 = vmatprep.subr.mxu0 0.0
    %3851 = vmatpush1.msra.mxu0 0.0
    %3852 = vmatprep.subr.mxu0 0.0
    %3853 = vmatpush1.msra.mxu0 0.0
    %3854 = vmatprep.subr.mxu0 0.0
    %3855 = vmatpush1.msra.mxu0 0.0
    %3856 = vmatprep.subr.mxu0 0.0
    %3857 = vmatpush1.msra.mxu0 0.0
    %3858 = vmatprep.subr.mxu0 0.0
    %3859 = vmatpush1.msra.mxu0 0.0
    %3860 = vmatprep.subr.mxu0 0.0
    %3861 = vmatpush1.msra.mxu0 0.0
    %3862 = vmatprep.subr.mxu0 0.0
    %3863 = vmatpush1.msra.mxu0 0.0
    %3864 = vmatprep.subr.mxu0 0.0
    %3865 = vmatpush1.msra.mxu0 0.0
    %3866 = vmatprep.subr.mxu0 0.0
    %3867 = vmatpush1.msra.mxu0 0.0
    %3868 = vmatprep.subr.mxu0 0.0
    %3869 = vmatpush1.msra.mxu0 0.0
    %3870 = vmatprep.subr.mxu0 0.0
    %3871 = vmatpush1.msra.mxu0 0.0
    %3872 = vmatprep.subr.mxu0 0.0
    %3873 = vmatpush1.msra.mxu0 0.0
    %3874 = vmatprep.subr.mxu0 0.0
    %3875 = vmatpush1.msra.mxu0 0.0
    %3876 = vmatprep.subr.mxu0 0.0
    %3877 = vmatpush1.msra.mxu0 0.0
    %3878 = vmatprep.subr.mxu0 0.0
    %3879 = vmatpush1.msra.mxu0 0.0
    %3880 = vmatprep.mubr.f32.mxu0 0.0
    %3881 = vmatmul.mubr.f32.gmra.mrb[0].mxu0 %v3814
    %v3882 = vpop.f32.mrb[0].mxu0
    %v3883 = vadd.f32 0.0, %v3882
    %v3884 = vpop.f32.mrb[0].mxu0
    %3885 = vdwg.mxu0
    %3887 = vrot.lane.b32.xlu0 %v3810, 32
    %v3888 = vpop.permute.xlu0 %3887
    %v3889 = vsel %vm386, %v3888, 0
    %3891 = vmatprep.subr.mxu0 0.0
    %3892 = vmatpush1.msra.mxu0 %v2594
    %3893 = vmatprep.subr.mxu0 0.0
    %3894 = vmatpush1.msra.mxu0 %v2595
    %3895 = vmatprep.subr.mxu0 0.0
    %3896 = vmatpush1.msra.mxu0 %v2596
    %3897 = vmatprep.subr.mxu0 0.0
    %3898 = vmatpush1.msra.mxu0 %v2597
    %3899 = vmatprep.subr.mxu0 0.0
    %3900 = vmatpush1.msra.mxu0 0.0
    %3901 = vmatprep.subr.mxu0 0.0
    %3902 = vmatpush1.msra.mxu0 0.0
    %3903 = vmatprep.subr.mxu0 0.0
    %3904 = vmatpush1.msra.mxu0 0.0
    %3905 = vmatprep.subr.mxu0 0.0
    %3906 = vmatpush1.msra.mxu0 0.0
    %3907 = vmatprep.subr.mxu0 0.0
    %3908 = vmatpush1.msra.mxu0 0.0
    %3909 = vmatprep.subr.mxu0 0.0
    %3910 = vmatpush1.msra.mxu0 0.0
    %3911 = vmatprep.subr.mxu0 0.0
    %3912 = vmatpush1.msra.mxu0 0.0
    %3913 = vmatprep.subr.mxu0 0.0
    %3914 = vmatpush1.msra.mxu0 0.0
    %3915 = vmatprep.subr.mxu0 0.0
    %3916 = vmatpush1.msra.mxu0 0.0
    %3917 = vmatprep.subr.mxu0 0.0
    %3918 = vmatpush1.msra.mxu0 0.0
    %3919 = vmatprep.subr.mxu0 0.0
    %3920 = vmatpush1.msra.mxu0 0.0
    %3921 = vmatprep.subr.mxu0 0.0
    %3922 = vmatpush1.msra.mxu0 0.0
    %3923 = vmatprep.subr.mxu0 0.0
    %3924 = vmatpush1.msra.mxu0 0.0
    %3925 = vmatprep.subr.mxu0 0.0
    %3926 = vmatpush1.msra.mxu0 0.0
    %3927 = vmatprep.subr.mxu0 0.0
    %3928 = vmatpush1.msra.mxu0 0.0
    %3929 = vmatprep.subr.mxu0 0.0
    %3930 = vmatpush1.msra.mxu0 0.0
    %3931 = vmatprep.subr.mxu0 0.0
    %3932 = vmatpush1.msra.mxu0 0.0
    %3933 = vmatprep.subr.mxu0 0.0
    %3934 = vmatpush1.msra.mxu0 0.0
    %3935 = vmatprep.subr.mxu0 0.0
    %3936 = vmatpush1.msra.mxu0 0.0
    %3937 = vmatprep.subr.mxu0 0.0
    %3938 = vmatpush1.msra.mxu0 0.0
    %3939 = vmatprep.subr.mxu0 0.0
    %3940 = vmatpush1.msra.mxu0 0.0
    %3941 = vmatprep.subr.mxu0 0.0
    %3942 = vmatpush1.msra.mxu0 0.0
    %3943 = vmatprep.subr.mxu0 0.0
    %3944 = vmatpush1.msra.mxu0 0.0
    %3945 = vmatprep.subr.mxu0 0.0
    %3946 = vmatpush1.msra.mxu0 0.0
    %3947 = vmatprep.subr.mxu0 0.0
    %3948 = vmatpush1.msra.mxu0 0.0
    %3949 = vmatprep.subr.mxu0 0.0
    %3950 = vmatpush1.msra.mxu0 0.0
    %3951 = vmatprep.subr.mxu0 0.0
    %3952 = vmatpush1.msra.mxu0 0.0
    %3953 = vmatprep.subr.mxu0 0.0
    %3954 = vmatpush1.msra.mxu0 0.0
    %3955 = vmatprep.mubr.f32.mxu0 0.0
    %3956 = vmatmul.mubr.f32.gmra.mrb[0].mxu0 %v3889
    %v3957 = vpop.f32.mrb[0].mxu0
    %v3958 = vadd.f32 %v3883, %v3957
    %v3959 = vpop.f32.mrb[0].mxu0
    %3960 = vdwg.mxu0
    %v3961 = vadd.f32 %v3958, %v2607
    %v3962 = vxor.u32 %v3961, 2147483648
    %v3963 = vmul.f32 %v3962, 1.442695
    %v3964 = vpow.pop %v3963
    %v3965 = vadd.f32 %v3964, 1.0
    %v3966 = vrcp.pop %v3965
    %v3967 = vmul.f32 1.0, %v3966
    %v3968 = vtanh.pop %v3961
    %v3969 = vmul.f32 %v3967, %v3706
    %3971 = vrot.lane.b32.xlu0 %v3968, 64
    %v3972 = vpop.permute.xlu0 %3971
    %v3974 = vmul.f32 %v3967, %v3972
    %3976 = vrot.lane.b32.xlu0 %v3974, 32
    %v3977 = vpop.permute.xlu0 %3976
    %v3979 = vadd.f32 %v3969, %v3977
    %v3980 = vtanh.pop %v3979
    %3982 = vrot.lane.b32.xlu0 %v3980, 64
    %v3983 = vpop.permute.xlu0 %3982
    %v3985 = vmul.f32 %v3967, %v3983
    %3986 = vmatprep.subr.mxu0 0.0
    %3987 = vmatpush1.msra.mxu0 %v2590
    %3988 = vmatprep.subr.mxu0 0.0
    %3989 = vmatpush1.msra.mxu0 %v2591
    %3990 = vmatprep.subr.mxu0 0.0
    %3991 = vmatpush1.msra.mxu0 %v2592
    %3992 = vmatprep.subr.mxu0 0.0
    %3993 = vmatpush1.msra.mxu0 %v2593
    %3994 = vmatprep.subr.mxu0 0.0
    %3995 = vmatpush1.msra.mxu0 0.0
    %3996 = vmatprep.subr.mxu0 0.0
    %3997 = vmatpush1.msra.mxu0 0.0
    %3998 = vmatprep.subr.mxu0 0.0
    %3999 = vmatpush1.msra.mxu0 0.0
    %4000 = vmatprep.subr.mxu0 0.0
    %4001 = vmatpush1.msra.mxu0 0.0
    %4002 = vmatprep.subr.mxu0 0.0
    %4003 = vmatpush1.msra.mxu0 0.0
    %4004 = vmatprep.subr.mxu0 0.0
    %4005 = vmatpush1.msra.mxu0 0.0
    %4006 = vmatprep.subr.mxu0 0.0
    %4007 = vmatpush1.msra.mxu0 0.0
    %4008 = vmatprep.subr.mxu0 0.0
    %4009 = vmatpush1.msra.mxu0 0.0
    %4010 = vmatprep.subr.mxu0 0.0
    %4011 = vmatpush1.msra.mxu0 0.0
    %4012 = vmatprep.subr.mxu0 0.0
    %4013 = vmatpush1.msra.mxu0 0.0
    %4014 = vmatprep.subr.mxu0 0.0
    %4015 = vmatpush1.msra.mxu0 0.0
    %4016 = vmatprep.subr.mxu0 0.0
    %4017 = vmatpush1.msra.mxu0 0.0
    %4018 = vmatprep.subr.mxu0 0.0
    %4019 = vmatpush1.msra.mxu0 0.0
    %4020 = vmatprep.subr.mxu0 0.0
    %4021 = vmatpush1.msra.mxu0 0.0
    %4022 = vmatprep.subr.mxu0 0.0
    %4023 = vmatpush1.msra.mxu0 0.0
    %4024 = vmatprep.subr.mxu0 0.0
    %4025 = vmatpush1.msra.mxu0 0.0
    %4026 = vmatprep.subr.mxu0 0.0
    %4027 = vmatpush1.msra.mxu0 0.0
    %4028 = vmatprep.subr.mxu0 0.0
    %4029 = vmatpush1.msra.mxu0 0.0
    %4030 = vmatprep.subr.mxu0 0.0
    %4031 = vmatpush1.msra.mxu0 0.0
    %4032 = vmatprep.subr.mxu0 0.0
    %4033 = vmatpush1.msra.mxu0 0.0
    %4034 = vmatprep.subr.mxu0 0.0
    %4035 = vmatpush1.msra.mxu0 0.0
    %4036 = vmatprep.subr.mxu0 0.0
    %4037 = vmatpush1.msra.mxu0 0.0
    %4038 = vmatprep.subr.mxu0 0.0
    %4039 = vmatpush1.msra.mxu0 0.0
    %4040 = vmatprep.subr.mxu0 0.0
    %4041 = vmatpush1.msra.mxu0 0.0
    %4042 = vmatprep.subr.mxu0 0.0
    %4043 = vmatpush1.msra.mxu0 0.0
    %4044 = vmatprep.subr.mxu0 0.0
    %4045 = vmatpush1.msra.mxu0 0.0
    %4046 = vmatprep.subr.mxu0 0.0
    %4047 = vmatpush1.msra.mxu0 0.0
    %4048 = vmatprep.subr.mxu0 0.0
    %4049 = vmatpush1.msra.mxu0 0.0
    %4050 = vmatprep.mubr.f32.mxu0 0.0
    %4051 = vmatmul.mubr.f32.gmra.mrb[0].mxu0 %v3889
    %v4052 = vpop.f32.mrb[0].mxu0
    %v4053 = vadd.f32 0.0, %v4052
    %v4054 = vpop.f32.mrb[0].mxu0
    %4055 = vdwg.mxu0
    %v4057 = vrot.slane %v4053, 6
    %v4059 = vadd.f32 %v364, %v4057
    %v4060 = vxor.u32 %v4059, 2147483648
    %v4061 = vmul.f32 %v4060, 1.442695
    %v4062 = vpow.pop %v4061
    %v4063 = vadd.f32 %v4062, 1.0
    %v4064 = vrcp.pop %v4063
    %v4065 = vmul.f32 1.0, %v4064
    %v4066 = vtanh.pop %v4059
    %v4068 = vrot.slane %v3804, 6
    %v4070 = vmul.f32 %v4065, %v4068
    %4072 = vrot.lane.b32.xlu0 %v4066, 64
    %v4073 = vpop.permute.xlu0 %4072
    %v4075 = vmul.f32 %v4065, %v4073
    %4077 = vrot.lane.b32.xlu0 %v4075, 32
    %v4078 = vpop.permute.xlu0 %4077
    %v4080 = vadd.f32 %v4070, %v4078
    %v4081 = vtanh.pop %v4080
    %4083 = vrot.lane.b32.xlu0 %v4081, 64
    %v4084 = vpop.permute.xlu0 %4083
    %v4086 = vmul.f32 %v4065, %v4084
    %4088 = vrot.lane.b32.xlu0 %v3985, 32
    %v4089 = vpop.permute.xlu0 %4088
    %v4090 = vsel %vm386, %v4089, 0
    %4092 = vmatprep.subr.mxu0 0.0
    %4093 = vmatpush1.msra.mxu0 %v2598
    %4094 = vmatprep.subr.mxu0 0.0
    %4095 = vmatpush1.msra.mxu0 %v2599
    %4096 = vmatprep.subr.mxu0 0.0
    %4097 = vmatpush1.msra.mxu0 %v2600
    %4098 = vmatprep.subr.mxu0 0.0
    %4099 = vmatpush1.msra.mxu0 %v2601
    %4100 = vmatprep.subr.mxu0 0.0
    %4101 = vmatpush1.msra.mxu0 0.0
    %4102 = vmatprep.subr.mxu0 0.0
    %4103 = vmatpush1.msra.mxu0 0.0
    %4104 = vmatprep.subr.mxu0 0.0
    %4105 = vmatpush1.msra.mxu0 0.0
    %4106 = vmatprep.subr.mxu0 0.0
    %4107 = vmatpush1.msra.mxu0 0.0
    %4108 = vmatprep.subr.mxu0 0.0
    %4109 = vmatpush1.msra.mxu0 0.0
    %4110 = vmatprep.subr.mxu0 0.0
    %4111 = vmatpush1.msra.mxu0 0.0
    %4112 = vmatprep.subr.mxu0 0.0
    %4113 = vmatpush1.msra.mxu0 0.0
    %4114 = vmatprep.subr.mxu0 0.0
    %4115 = vmatpush1.msra.mxu0 0.0
    %4116 = vmatprep.subr.mxu0 0.0
    %4117 = vmatpush1.msra.mxu0 0.0
    %4118 = vmatprep.subr.mxu0 0.0
    %4119 = vmatpush1.msra.mxu0 0.0
    %4120 = vmatprep.subr.mxu0 0.0
    %4121 = vmatpush1.msra.mxu0 0.0
    %4122 = vmatprep.subr.mxu0 0.0
    %4123 = vmatpush1.msra.mxu0 0.0
    %4124 = vmatprep.subr.mxu0 0.0
    %4125 = vmatpush1.msra.mxu0 0.0
    %4126 = vmatprep.subr.mxu0 0.0
    %4127 = vmatpush1.msra.mxu0 0.0
    %4128 = vmatprep.subr.mxu0 0.0
    %4129 = vmatpush1.msra.mxu0 0.0
    %4130 = vmatprep.subr.mxu0 0.0
    %4131 = vmatpush1.msra.mxu0 0.0
    %4132 = vmatprep.subr.mxu0 0.0
    %4133 = vmatpush1.msra.mxu0 0.0
    %4134 = vmatprep.subr.mxu0 0.0
    %4135 = vmatpush1.msra.mxu0 0.0
    %4136 = vmatprep.subr.mxu0 0.0
    %4137 = vmatpush1.msra.mxu0 0.0
    %4138 = vmatprep.subr.mxu0 0.0
    %4139 = vmatpush1.msra.mxu0 0.0
    %4140 = vmatprep.subr.mxu0 0.0
    %4141 = vmatpush1.msra.mxu0 0.0
    %4142 = vmatprep.subr.mxu0 0.0
    %4143 = vmatpush1.msra.mxu0 0.0
    %4144 = vmatprep.subr.mxu0 0.0
    %4145 = vmatpush1.msra.mxu0 0.0
    %4146 = vmatprep.subr.mxu0 0.0
    %4147 = vmatpush1.msra.mxu0 0.0
    %4148 = vmatprep.subr.mxu0 0.0
    %4149 = vmatpush1.msra.mxu0 0.0
    %4150 = vmatprep.subr.mxu0 0.0
    %4151 = vmatpush1.msra.mxu0 0.0
    %4152 = vmatprep.subr.mxu0 0.0
    %4153 = vmatpush1.msra.mxu0 0.0
    %4154 = vmatprep.subr.mxu0 0.0
    %4155 = vmatpush1.msra.mxu0 0.0
    %4156 = vmatprep.mubr.f32.mxu0 0.0
    %4157 = vmatmul.mubr.f32.gmra.mrb[0].mxu0 %v4090
    %v4158 = vpop.f32.mrb[0].mxu0
    %v4159 = vadd.f32 0.0, %v4158
    %v4160 = vpop.f32.mrb[0].mxu0
    %4161 = vdwg.mxu0
    %v4163 = vrot.slane %v4086, 2
    %4164 = vrot.lane.b32.xlu0 %v4163, 32
    %v4165 = vpop.permute.xlu0 %4164
    %v4166 = vsel %vm386, %v4165, 0
    %4168 = vmatprep.subr.mxu0 0.0
    %4169 = vmatpush1.msra.mxu0 %v2594
    %4170 = vmatprep.subr.mxu0 0.0
    %4171 = vmatpush1.msra.mxu0 %v2595
    %4172 = vmatprep.subr.mxu0 0.0
    %4173 = vmatpush1.msra.mxu0 %v2596
    %4174 = vmatprep.subr.mxu0 0.0
    %4175 = vmatpush1.msra.mxu0 %v2597
    %4176 = vmatprep.subr.mxu0 0.0
    %4177 = vmatpush1.msra.mxu0 0.0
    %4178 = vmatprep.subr.mxu0 0.0
    %4179 = vmatpush1.msra.mxu0 0.0
    %4180 = vmatprep.subr.mxu0 0.0
    %4181 = vmatpush1.msra.mxu0 0.0
    %4182 = vmatprep.subr.mxu0 0.0
    %4183 = vmatpush1.msra.mxu0 0.0
    %4184 = vmatprep.subr.mxu0 0.0
    %4185 = vmatpush1.msra.mxu0 0.0
    %4186 = vmatprep.subr.mxu0 0.0
    %4187 = vmatpush1.msra.mxu0 0.0
    %4188 = vmatprep.subr.mxu0 0.0
    %4189 = vmatpush1.msra.mxu0 0.0
    %4190 = vmatprep.subr.mxu0 0.0
    %4191 = vmatpush1.msra.mxu0 0.0
    %4192 = vmatprep.subr.mxu0 0.0
    %4193 = vmatpush1.msra.mxu0 0.0
    %4194 = vmatprep.subr.mxu0 0.0
    %4195 = vmatpush1.msra.mxu0 0.0
    %4196 = vmatprep.subr.mxu0 0.0
    %4197 = vmatpush1.msra.mxu0 0.0
    %4198 = vmatprep.subr.mxu0 0.0
    %4199 = vmatpush1.msra.mxu0 0.0
    %4200 = vmatprep.subr.mxu0 0.0
    %4201 = vmatpush1.msra.mxu0 0.0
    %4202 = vmatprep.subr.mxu0 0.0
    %4203 = vmatpush1.msra.mxu0 0.0
    %4204 = vmatprep.subr.mxu0 0.0
    %4205 = vmatpush1.msra.mxu0 0.0
    %4206 = vmatprep.subr.mxu0 0.0
    %4207 = vmatpush1.msra.mxu0 0.0
    %4208 = vmatprep.subr.mxu0 0.0
    %4209 = vmatpush1.msra.mxu0 0.0
    %4210 = vmatprep.subr.mxu0 0.0
    %4211 = vmatpush1.msra.mxu0 0.0
    %4212 = vmatprep.subr.mxu0 0.0
    %4213 = vmatpush1.msra.mxu0 0.0
    %4214 = vmatprep.subr.mxu0 0.0
    %4215 = vmatpush1.msra.mxu0 0.0
    %4216 = vmatprep.subr.mxu0 0.0
    %4217 = vmatpush1.msra.mxu0 0.0
    %4218 = vmatprep.subr.mxu0 0.0
    %4219 = vmatpush1.msra.mxu0 0.0
    %4220 = vmatprep.subr.mxu0 0.0
    %4221 = vmatpush1.msra.mxu0 0.0
    %4222 = vmatprep.subr.mxu0 0.0
    %4223 = vmatpush1.msra.mxu0 0.0
    %4224 = vmatprep.subr.mxu0 0.0
    %4225 = vmatpush1.msra.mxu0 0.0
    %4226 = vmatprep.subr.mxu0 0.0
    %4227 = vmatpush1.msra.mxu0 0.0
    %4228 = vmatprep.subr.mxu0 0.0
    %4229 = vmatpush1.msra.mxu0 0.0
    %4230 = vmatprep.subr.mxu0 0.0
    %4231 = vmatpush1.msra.mxu0 0.0
    %4232 = vmatprep.mubr.f32.mxu0 0.0
    %4233 = vmatmul.mubr.f32.gmra.mrb[0].mxu0 %v4166
    %v4234 = vpop.f32.mrb[0].mxu0
    %v4235 = vadd.f32 %v4159, %v4234
    %v4236 = vpop.f32.mrb[0].mxu0
    %4237 = vdwg.mxu0
    %v4238 = vadd.f32 %v4235, %v2607
    %v4239 = vxor.u32 %v4238, 2147483648
    %v4240 = vmul.f32 %v4239, 1.442695
    %v4241 = vpow.pop %v4240
    %v4242 = vadd.f32 %v4241, 1.0
    %v4243 = vrcp.pop %v4242
    %v4244 = vmul.f32 1.0, %v4243
    %v4245 = vtanh.pop %v4238
    %v4246 = vmul.f32 %v4244, %v3979
    %4248 = vrot.lane.b32.xlu0 %v4245, 64
    %v4249 = vpop.permute.xlu0 %4248
    %v4251 = vmul.f32 %v4244, %v4249
    %4253 = vrot.lane.b32.xlu0 %v4251, 32
    %v4254 = vpop.permute.xlu0 %4253
    %v4256 = vadd.f32 %v4246, %v4254
    %v4257 = vtanh.pop %v4256
    %4259 = vrot.lane.b32.xlu0 %v4257, 64
    %v4260 = vpop.permute.xlu0 %4259
    %v4262 = vmul.f32 %v4244, %v4260
    %4263 = vmatprep.subr.mxu0 0.0
    %4264 = vmatpush1.msra.mxu0 %v2590
    %4265 = vmatprep.subr.mxu0 0.0
    %4266 = vmatpush1.msra.mxu0 %v2591
    %4267 = vmatprep.subr.mxu0 0.0
    %4268 = vmatpush1.msra.mxu0 %v2592
    %4269 = vmatprep.subr.mxu0 0.0
    %4270 = vmatpush1.msra.mxu0 %v2593
    %4271 = vmatprep.subr.mxu0 0.0
    %4272 = vmatpush1.msra.mxu0 0.0
    %4273 = vmatprep.subr.mxu0 0.0
    %4274 = vmatpush1.msra.mxu0 0.0
    %4275 = vmatprep.subr.mxu0 0.0
    %4276 = vmatpush1.msra.mxu0 0.0
    %4277 = vmatprep.subr.mxu0 0.0
    %4278 = vmatpush1.msra.mxu0 0.0
    %4279 = vmatprep.subr.mxu0 0.0
    %4280 = vmatpush1.msra.mxu0 0.0
    %4281 = vmatprep.subr.mxu0 0.0
    %4282 = vmatpush1.msra.mxu0 0.0
    %4283 = vmatprep.subr.mxu0 0.0
    %4284 = vmatpush1.msra.mxu0 0.0
    %4285 = vmatprep.subr.mxu0 0.0
    %4286 = vmatpush1.msra.mxu0 0.0
    %4287 = vmatprep.subr.mxu0 0.0
    %4288 = vmatpush1.msra.mxu0 0.0
    %4289 = vmatprep.subr.mxu0 0.0
    %4290 = vmatpush1.msra.mxu0 0.0
    %4291 = vmatprep.subr.mxu0 0.0
    %4292 = vmatpush1.msra.mxu0 0.0
    %4293 = vmatprep.subr.mxu0 0.0
    %4294 = vmatpush1.msra.mxu0 0.0
    %4295 = vmatprep.subr.mxu0 0.0
    %4296 = vmatpush1.msra.mxu0 0.0
    %4297 = vmatprep.subr.mxu0 0.0
    %4298 = vmatpush1.msra.mxu0 0.0
    %4299 = vmatprep.subr.mxu0 0.0
    %4300 = vmatpush1.msra.mxu0 0.0
    %4301 = vmatprep.subr.mxu0 0.0
    %4302 = vmatpush1.msra.mxu0 0.0
    %4303 = vmatprep.subr.mxu0 0.0
    %4304 = vmatpush1.msra.mxu0 0.0
    %4305 = vmatprep.subr.mxu0 0.0
    %4306 = vmatpush1.msra.mxu0 0.0
    %4307 = vmatprep.subr.mxu0 0.0
    %4308 = vmatpush1.msra.mxu0 0.0
    %4309 = vmatprep.subr.mxu0 0.0
    %4310 = vmatpush1.msra.mxu0 0.0
    %4311 = vmatprep.subr.mxu0 0.0
    %4312 = vmatpush1.msra.mxu0 0.0
    %4313 = vmatprep.subr.mxu0 0.0
    %4314 = vmatpush1.msra.mxu0 0.0
    %4315 = vmatprep.subr.mxu0 0.0
    %4316 = vmatpush1.msra.mxu0 0.0
    %4317 = vmatprep.subr.mxu0 0.0
    %4318 = vmatpush1.msra.mxu0 0.0
    %4319 = vmatprep.subr.mxu0 0.0
    %4320 = vmatpush1.msra.mxu0 0.0
    %4321 = vmatprep.subr.mxu0 0.0
    %4322 = vmatpush1.msra.mxu0 0.0
    %4323 = vmatprep.subr.mxu0 0.0
    %4324 = vmatpush1.msra.mxu0 0.0
    %4325 = vmatprep.subr.mxu0 0.0
    %4326 = vmatpush1.msra.mxu0 0.0
    %4327 = vmatprep.mubr.f32.mxu0 0.0
    %4328 = vmatmul.mubr.f32.gmra.mrb[0].mxu0 %v4166
    %v4329 = vpop.f32.mrb[0].mxu0
    %v4330 = vadd.f32 0.0, %v4329
    %v4331 = vpop.f32.mrb[0].mxu0
    %4332 = vdwg.mxu0
    %v4334 = vrot.slane %v4330, 4
    %v4336 = vadd.f32 %v364, %v4334
    %v4337 = vxor.u32 %v4336, 2147483648
    %v4338 = vmul.f32 %v4337, 1.442695
    %v4339 = vpow.pop %v4338
    %v4340 = vadd.f32 %v4339, 1.0
    %v4341 = vrcp.pop %v4340
    %v4342 = vmul.f32 1.0, %v4341
    %v4343 = vtanh.pop %v4336
    %v4345 = vrot.slane %v4080, 6
    %v4347 = vmul.f32 %v4342, %v4345
    %4349 = vrot.lane.b32.xlu0 %v4343, 64
    %v4350 = vpop.permute.xlu0 %4349
    %v4352 = vmul.f32 %v4342, %v4350
    %4354 = vrot.lane.b32.xlu0 %v4352, 32
    %v4355 = vpop.permute.xlu0 %4354
    %v4357 = vadd.f32 %v4347, %v4355
    %v4358 = vtanh.pop %v4357
    %4360 = vrot.lane.b32.xlu0 %v4358, 64
    %v4361 = vpop.permute.xlu0 %4360
    %v4363 = vmul.f32 %v4342, %v4361
    %4365 = vrot.lane.b32.xlu0 %v4262, 32
    %v4366 = vpop.permute.xlu0 %4365
    %v4367 = vsel %vm386, %v4366, 0
    %4369 = vmatprep.subr.mxu0 0.0
    %4370 = vmatpush1.msra.mxu0 %v2598
    %4371 = vmatprep.subr.mxu0 0.0
    %4372 = vmatpush1.msra.mxu0 %v2599
    %4373 = vmatprep.subr.mxu0 0.0
    %4374 = vmatpush1.msra.mxu0 %v2600
    %4375 = vmatprep.subr.mxu0 0.0
    %4376 = vmatpush1.msra.mxu0 %v2601
    %4377 = vmatprep.subr.mxu0 0.0
    %4378 = vmatpush1.msra.mxu0 0.0
    %4379 = vmatprep.subr.mxu0 0.0
    %4380 = vmatpush1.msra.mxu0 0.0
    %4381 = vmatprep.subr.mxu0 0.0
    %4382 = vmatpush1.msra.mxu0 0.0
    %4383 = vmatprep.subr.mxu0 0.0
    %4384 = vmatpush1.msra.mxu0 0.0
    %4385 = vmatprep.subr.mxu0 0.0
    %4386 = vmatpush1.msra.mxu0 0.0
    %4387 = vmatprep.subr.mxu0 0.0
    %4388 = vmatpush1.msra.mxu0 0.0
    %4389 = vmatprep.subr.mxu0 0.0
    %4390 = vmatpush1.msra.mxu0 0.0
    %4391 = vmatprep.subr.mxu0 0.0
    %4392 = vmatpush1.msra.mxu0 0.0
    %4393 = vmatprep.subr.mxu0 0.0
    %4394 = vmatpush1.msra.mxu0 0.0
    %4395 = vmatprep.subr.mxu0 0.0
    %4396 = vmatpush1.msra.mxu0 0.0
    %4397 = vmatprep.subr.mxu0 0.0
    %4398 = vmatpush1.msra.mxu0 0.0
    %4399 = vmatprep.subr.mxu0 0.0
    %4400 = vmatpush1.msra.mxu0 0.0
    %4401 = vmatprep.subr.mxu0 0.0
    %4402 = vmatpush1.msra.mxu0 0.0
    %4403 = vmatprep.subr.mxu0 0.0
    %4404 = vmatpush1.msra.mxu0 0.0
    %4405 = vmatprep.subr.mxu0 0.0
    %4406 = vmatpush1.msra.mxu0 0.0
    %4407 = vmatprep.subr.mxu0 0.0
    %4408 = vmatpush1.msra.mxu0 0.0
    %4409 = vmatprep.subr.mxu0 0.0
    %4410 = vmatpush1.msra.mxu0 0.0
    %4411 = vmatprep.subr.mxu0 0.0
    %4412 = vmatpush1.msra.mxu0 0.0
    %4413 = vmatprep.subr.mxu0 0.0
    %4414 = vmatpush1.msra.mxu0 0.0
    %4415 = vmatprep.subr.mxu0 0.0
    %4416 = vmatpush1.msra.mxu0 0.0
    %4417 = vmatprep.subr.mxu0 0.0
    %4418 = vmatpush1.msra.mxu0 0.0
    %4419 = vmatprep.subr.mxu0 0.0
    %4420 = vmatpush1.msra.mxu0 0.0
    %4421 = vmatprep.subr.mxu0 0.0
    %4422 = vmatpush1.msra.mxu0 0.0
    %4423 = vmatprep.subr.mxu0 0.0
    %4424 = vmatpush1.msra.mxu0 0.0
    %4425 = vmatprep.subr.mxu0 0.0
    %4426 = vmatpush1.msra.mxu0 0.0
    %4427 = vmatprep.subr.mxu0 0.0
    %4428 = vmatpush1.msra.mxu0 0.0
    %4429 = vmatprep.subr.mxu0 0.0
    %4430 = vmatpush1.msra.mxu0 0.0
    %4431 = vmatprep.subr.mxu0 0.0
    %4432 = vmatpush1.msra.mxu0 0.0
    %4433 = vmatprep.mubr.f32.mxu0 0.0
    %4434 = vmatmul.mubr.f32.gmra.mrb[0].mxu0 %v4367
    %v4435 = vpop.f32.mrb[0].mxu0
    %v4436 = vadd.f32 0.0, %v4435
    %v4437 = vpop.f32.mrb[0].mxu0
    %4438 = vdwg.mxu0
    %v4440 = vrot.slane %v4363, 4
    %4441 = vrot.lane.b32.xlu0 %v4440, 32
    %v4442 = vpop.permute.xlu0 %4441
    %v4443 = vsel %vm386, %v4442, 0
    %4445 = vmatprep.subr.mxu0 0.0
    %4446 = vmatpush1.msra.mxu0 %v2594
    %4447 = vmatprep.subr.mxu0 0.0
    %4448 = vmatpush1.msra.mxu0 %v2595
    %4449 = vmatprep.subr.mxu0 0.0
    %4450 = vmatpush1.msra.mxu0 %v2596
    %4451 = vmatprep.subr.mxu0 0.0
    %4452 = vmatpush1.msra.mxu0 %v2597
    %4453 = vmatprep.subr.mxu0 0.0
    %4454 = vmatpush1.msra.mxu0 0.0
    %4455 = vmatprep.subr.mxu0 0.0
    %4456 = vmatpush1.msra.mxu0 0.0
    %4457 = vmatprep.subr.mxu0 0.0
    %4458 = vmatpush1.msra.mxu0 0.0
    %4459 = vmatprep.subr.mxu0 0.0
    %4460 = vmatpush1.msra.mxu0 0.0
    %4461 = vmatprep.subr.mxu0 0.0
    %4462 = vmatpush1.msra.mxu0 0.0
    %4463 = vmatprep.subr.mxu0 0.0
    %4464 = vmatpush1.msra.mxu0 0.0
    %4465 = vmatprep.subr.mxu0 0.0
    %4466 = vmatpush1.msra.mxu0 0.0
    %4467 = vmatprep.subr.mxu0 0.0
    %4468 = vmatpush1.msra.mxu0 0.0
    %4469 = vmatprep.subr.mxu0 0.0
    %4470 = vmatpush1.msra.mxu0 0.0
    %4471 = vmatprep.subr.mxu0 0.0
    %4472 = vmatpush1.msra.mxu0 0.0
    %4473 = vmatprep.subr.mxu0 0.0
    %4474 = vmatpush1.msra.mxu0 0.0
    %4475 = vmatprep.subr.mxu0 0.0
    %4476 = vmatpush1.msra.mxu0 0.0
    %4477 = vmatprep.subr.mxu0 0.0
    %4478 = vmatpush1.msra.mxu0 0.0
    %4479 = vmatprep.subr.mxu0 0.0
    %4480 = vmatpush1.msra.mxu0 0.0
    %4481 = vmatprep.subr.mxu0 0.0
    %4482 = vmatpush1.msra.mxu0 0.0
    %4483 = vmatprep.subr.mxu0 0.0
    %4484 = vmatpush1.msra.mxu0 0.0
    %4485 = vmatprep.subr.mxu0 0.0
    %4486 = vmatpush1.msra.mxu0 0.0
    %4487 = vmatprep.subr.mxu0 0.0
    %4488 = vmatpush1.msra.mxu0 0.0
    %4489 = vmatprep.subr.mxu0 0.0
    %4490 = vmatpush1.msra.mxu0 0.0
    %4491 = vmatprep.subr.mxu0 0.0
    %4492 = vmatpush1.msra.mxu0 0.0
    %4493 = vmatprep.subr.mxu0 0.0
    %4494 = vmatpush1.msra.mxu0 0.0
    %4495 = vmatprep.subr.mxu0 0.0
    %4496 = vmatpush1.msra.mxu0 0.0
    %4497 = vmatprep.subr.mxu0 0.0
    %4498 = vmatpush1.msra.mxu0 0.0
    %4499 = vmatprep.subr.mxu0 0.0
    %4500 = vmatpush1.msra.mxu0 0.0
    %4501 = vmatprep.subr.mxu0 0.0
    %4502 = vmatpush1.msra.mxu0 0.0
    %4503 = vmatprep.subr.mxu0 0.0
    %4504 = vmatpush1.msra.mxu0 0.0
    %4505 = vmatprep.subr.mxu0 0.0
    %4506 = vmatpush1.msra.mxu0 0.0
    %4507 = vmatprep.subr.mxu0 0.0
    %4508 = vmatpush1.msra.mxu0 0.0
    %4509 = vmatprep.mubr.f32.mxu0 0.0
    %4510 = vmatmul.mubr.f32.gmra.mrb[0].mxu0 %v4443
    %v4511 = vpop.f32.mrb[0].mxu0
    %v4512 = vadd.f32 %v4436, %v4511
    %v4513 = vpop.f32.mrb[0].mxu0
    %4514 = vdwg.mxu0
    %v4515 = vadd.f32 %v4512, %v2607
    %v4516 = vxor.u32 %v4515, 2147483648
    %v4517 = vmul.f32 %v4516, 1.442695
    %v4518 = vpow.pop %v4517
    %v4519 = vadd.f32 %v4518, 1.0
    %v4520 = vrcp.pop %v4519
    %v4521 = vmul.f32 1.0, %v4520
    %v4522 = vtanh.pop %v4515
    %v4523 = vmul.f32 %v4521, %v4256
    %4525 = vrot.lane.b32.xlu0 %v4522, 64
    %v4526 = vpop.permute.xlu0 %4525
    %v4528 = vmul.f32 %v4521, %v4526
    %4530 = vrot.lane.b32.xlu0 %v4528, 32
    %v4531 = vpop.permute.xlu0 %4530
    %v4533 = vadd.f32 %v4523, %v4531
    %v4534 = vtanh.pop %v4533
    %4536 = vrot.lane.b32.xlu0 %v4534, 64
    %v4537 = vpop.permute.xlu0 %4536
    %v4539 = vmul.f32 %v4521, %v4537
    %v4540 = vrot.slane %v3158, 6
    %v4542 = vrot.slane %v3435, 4
    %v4544 = vrot.slane %v3712, 2
    %v4546 = vrot.slane %v4262, 6
    %v4549 = vrot.slane %v4539, 4
    %vm4551 = vcmask 1041408
    %v4552 = vsel %vm4551, %v2881, %v4540
    %vm4553 = vcmask 1043456
    %v4554 = vsel %vm4553, %v4552, %v4542
    %vm4555 = vcmask 1045504
    %v4556 = vsel %vm4555, %v4554, %v4544
    %v4557 = vsel %vm4551, %v3985, %v4546
    %v4558 = vsel %vm4553, %v4557, %v4549
    %v4559 = vld [vmem:[#allocation14] sm:$0xff]
    %v4560 = vld [vmem:[#allocation14 + $0x8] sm:$0xff]
    %v4561 = vld [vmem:[#allocation14 + $0x10] sm:$0xff]
    %v4562 = vld [vmem:[#allocation14 + $0x18] sm:$0xff]
    %v4563 = vld [vmem:[%s13] sm:$0x1]
    %v4565 = vlaneseq
    %v4566 = vshrl.u32 %v4565, 7
    %v4567 = vsub.s32 0, %v4566
    %v4568 = vrot.slane %v4563, %v4567
    %4572 = vrot.lane.b32.xlu0 %v4556, 32
    %v4573 = vpop.permute.xlu0 %4572
    %4574 = vrot.lane.b32.xlu0 %v4558, 32
    %v4575 = vpop.permute.xlu0 %4574
    %v4576 = vsel %vm386, %v4573, 0
    %v4578 = vsel %vm386, %v4575, 0
    %4580 = vmatprep.subr.mxu0 0.0
    %4581 = vmatpush1.msra.mxu0 %v4559
    %4582 = vmatprep.subr.mxu0 0.0
    %4583 = vmatpush1.msra.mxu0 %v4560
    %4584 = vmatprep.subr.mxu0 0.0
    %4585 = vmatpush1.msra.mxu0 %v4561
    %4586 = vmatprep.subr.mxu0 0.0
    %4587 = vmatpush1.msra.mxu0 %v4562
    %4588 = vmatprep.subr.mxu0 0.0
    %4589 = vmatpush1.msra.mxu0 0.0
    %4590 = vmatprep.subr.mxu0 0.0
    %4591 = vmatpush1.msra.mxu0 0.0
    %4592 = vmatprep.subr.mxu0 0.0
    %4593 = vmatpush1.msra.mxu0 0.0
    %4594 = vmatprep.subr.mxu0 0.0
    %4595 = vmatpush1.msra.mxu0 0.0
    %4596 = vmatprep.subr.mxu0 0.0
    %4597 = vmatpush1.msra.mxu0 0.0
    %4598 = vmatprep.subr.mxu0 0.0
    %4599 = vmatpush1.msra.mxu0 0.0
    %4600 = vmatprep.subr.mxu0 0.0
    %4601 = vmatpush1.msra.mxu0 0.0
    %4602 = vmatprep.subr.mxu0 0.0
    %4603 = vmatpush1.msra.mxu0 0.0
    %4604 = vmatprep.subr.mxu0 0.0
    %4605 = vmatpush1.msra.mxu0 0.0
    %4606 = vmatprep.subr.mxu0 0.0
    %4607 = vmatpush1.msra.mxu0 0.0
    %4608 = vmatprep.subr.mxu0 0.0
    %4609 = vmatpush1.msra.mxu0 0.0
    %4610 = vmatprep.subr.mxu0 0.0
    %4611 = vmatpush1.msra.mxu0 0.0
    %4612 = vmatprep.subr.mxu0 0.0
    %4613 = vmatpush1.msra.mxu0 0.0
    %4614 = vmatprep.subr.mxu0 0.0
    %4615 = vmatpush1.msra.mxu0 0.0
    %4616 = vmatprep.subr.mxu0 0.0
    %4617 = vmatpush1.msra.mxu0 0.0
    %4618 = vmatprep.subr.mxu0 0.0
    %4619 = vmatpush1.msra.mxu0 0.0
    %4620 = vmatprep.subr.mxu0 0.0
    %4621 = vmatpush1.msra.mxu0 0.0
    %4622 = vmatprep.subr.mxu0 0.0
    %4623 = vmatpush1.msra.mxu0 0.0
    %4624 = vmatprep.subr.mxu0 0.0
    %4625 = vmatpush1.msra.mxu0 0.0
    %4626 = vmatprep.subr.mxu0 0.0
    %4627 = vmatpush1.msra.mxu0 0.0
    %4628 = vmatprep.subr.mxu0 0.0
    %4629 = vmatpush1.msra.mxu0 0.0
    %4630 = vmatprep.subr.mxu0 0.0
    %4631 = vmatpush1.msra.mxu0 0.0
    %4632 = vmatprep.subr.mxu0 0.0
    %4633 = vmatpush1.msra.mxu0 0.0
    %4634 = vmatprep.subr.mxu0 0.0
    %4635 = vmatpush1.msra.mxu0 0.0
    %4636 = vmatprep.subr.mxu0 0.0
    %4637 = vmatpush1.msra.mxu0 0.0
    %4638 = vmatprep.subr.mxu0 0.0
    %4639 = vmatpush1.msra.mxu0 0.0
    %4640 = vmatprep.subr.mxu0 0.0
    %4641 = vmatpush1.msra.mxu0 0.0
    %4642 = vmatprep.subr.mxu0 0.0
    %4643 = vmatpush1.msra.mxu0 0.0
    %4644 = vmatprep.mubr.f32.mxu0 0.0
    %4645 = vmatmul.mubr.f32.gmra.mrb[0].mxu0 %v4576
    %v4646 = vpop.f32.mrb[0].mxu0
    %v4647 = vadd.f32 %v4568, %v4646
    %v4648 = vpop.f32.mrb[0].mxu0
    %4649 = vmatprep.mubr.f32.mxu0 0.0
    %4650 = vmatmul.mubr.f32.gmra.mrb[0].mxu0 %v4578
    %v4651 = vpop.f32.mrb[0].mxu0
    %v4652 = vadd.f32 %v4568, %v4651
    %v4653 = vpop.f32.mrb[0].mxu0
    %4654 = vdwg.mxu0
    %v4655 = vmax.f32 %v4647, 0.0
    %v4656 = vmax.f32 %v4652, 0.0
    %v4659 = vrot.slane %v4655, 6
    %v4660 = vrot.slane %v4656, 6
    %v4661 = vsel %vm4551, %v4659, %v4660
    %v4664 = vsel %vm4551, 0.0, %v4659
    %4665 = vst [vmem:[#allocation16] sm:$0xff] %v4664
    %4666 = vst [vmem:[#allocation16 + $0x8] sm:$0xff] %v4661
    // Predicated region
    $region90: #{tpu_custom_call.1} parent=1 // pred_check
      _
    $region91: #{tpu_custom_call.1} parent=1 // pred_check_branch
      %4668 = sbr.rel (0) target = $region93
    $region92: #{tpu_custom_call.1} parent=1 // pred_region
      %s4670 = ssub.s32 256, 256
      %4671 = vsyncadd [#allocation4], %s4670
      %s4672 = sshll.u32 [#allocation16], 4
      %s4673 = int_to_ptr.vmem [resolvable:$true] %s4672
      %4678 = dma.vmem_to_hbm [thread:$0]  %s4673, 256, %s14, [#allocation4], 128, 128, 8
    $region93: #{tpu_custom_call.1} parent=1 // pred_fallthru
      _
    // Predicated region
    $region94: #{tpu_custom_call.1} parent=1 // pred_check
      _
    $region95: #{tpu_custom_call.1} parent=1 // pred_check_branch
      %4680 = sbr.rel (0) target = $region97
    $region96: #{tpu_custom_call.1} parent=1 // pred_region
      %4681 = dma.done [#allocation4], 256
    $region97: #{tpu_custom_call.1} parent=1 // pred_fallthru
      _
    %4682 = vsyncpa [#allocation3], 1
    %4683 = vsyncpa [#allocation6], 1
    %4684 = vsyncpa [#allocation9], 1
    %4685 = vsyncpa [#allocation12], 1
    %4686 = vsyncpa [#allocation15], 1
    %4687 = vsyncpa [#allocation4], 1

</llo_original>
